<compile_context>
chip_gen: v5e
topology: v5e:2x2
jax: 0.10.0
libtpu: 0.0.40
codegen_flags: <defaults>
</compile_context>

<pallas_src>
import functools

import jax
import jax.numpy as jnp
from jax import lax
from jax.experimental import pallas as pl
from jax.experimental.pallas import tpu as pltpu


# ------------------------------ compiler parameters ------------------------------- #

@functools.lru_cache(maxsize=None)
def _vmem_limit_bytes():
    """~48 MiB on v7x (64 MiB physical VMEM), up to 96 MiB on v5e/v6e (128 MiB)."""
    try:
        cap = int(pltpu.get_tpu_info().vmem_capacity_bytes)
    except Exception:  # query unavailable -> conservative default
        cap = 64 * 1024 * 1024
    if cap <= 0:
        cap = 64 * 1024 * 1024
    return min(cap * 3 // 4, 96 * 1024 * 1024)


def _compiler_params():
    return pltpu.CompilerParams(
        # Batch grid axis is embarrassingly parallel -> megacore sharding on v7x,
        # harmless on single-TC v5e/v6e.
        dimension_semantics=("parallel",),
        vmem_limit_bytes=_vmem_limit_bytes(),
    )


# --------------------------- in-kernel building blocks --------------------------- #

def _bn_relu(x, scale, bias):
    """y = relu(x * scale + bias); scale/bias are (C,), broadcast over spatial dims."""
    return jnp.maximum(x * scale + bias, 0.0)


def _zero_halo(pad_ref, pad, h, w):
    """Zero only the halo border of the padded scratch.

    The interior is fully overwritten every grid step, so re-zeroing the whole scratch
    (as v2 did) wasted (H+2p)(W+2p)C stores per conv per step.  The halo is zeroed every
    step (not just program_id==0) so the kernel stays correct when the batch grid axis
    is sharded across TensorCores (megacore).
    """
    if pad == 0:
        return
    hp, wp, c = pad_ref.shape
    zrow = jnp.zeros((pad, wp, c), pad_ref.dtype)
    zcol = jnp.zeros((hp, pad, c), pad_ref.dtype)
    pad_ref[0:pad, :, :] = zrow
    pad_ref[pad + h:hp, :, :] = zrow
    pad_ref[:, 0:pad, :] = zcol
    pad_ref[:, pad + w:wp, :] = zcol


def _im2col(pad_ref, col_ref, oh, ow, k, c):
    """Scatter the k*k shifted (oh, ow, c) windows of the padded activation into a
    (oh*ow, k*k*c) VMEM column buffer, so the conv becomes ONE MXU matmul with K=k*k*c
    (instead of k*k tiny K=c matmuls + per-tap VPU adds)."""
    for kh in range(k):
        for kw in range(k):
            t = kh * k + kw
            col_ref[:, t * c:(t + 1) * c] = (
                pad_ref[kh:kh + oh, kw:kw + ow, :].reshape(oh * ow, c))


# ----------------------------------- kernel --------------------------------------- #

def fused_block_kernel(*refs, k, pad, stride, has_shortcut_conv):
    """One whole pre-activation BasicBlock per invocation (one batch element):

        BN1+ReLU -> zero-pad (VMEM) -> im2col -> conv1 (one MXU matmul)
        [stride>1: subsample conv1 output / shortcut input via a 0/1 selection matmul]
        BN2+ReLU -> zero-pad (VMEM) -> im2col -> conv2 (one MXU matmul) + residual

    x is read from HBM exactly once and the block output is written exactly once;
    all intermediates (including the downsampling path) live only in VMEM / vregs.
    Ref order: x, bn1_s, bn1_b, w1, [ws], [sub], bn2_s, bn2_b, w2, out,
               pad1, pad2, col1, col2 (scratch).
    """
    it = iter(refs)
    x_ref = next(it)
    s1_ref, b1_ref, w1_ref = next(it), next(it), next(it)
    ws_ref = next(it) if has_shortcut_conv else None
    sub_ref = next(it) if stride > 1 else None
    s2_ref, b2_ref, w2_ref = next(it), next(it), next(it)
    o_ref = next(it)
    pad1_ref, pad2_ref, col1_ref, col2_ref = next(it), next(it), next(it), next(it)

    x = x_ref[0].astype(jnp.float32)                       # (H, W, Cin)
    h, w, cin = x.shape
    cout = w2_ref.shape[-1]
    ho = (h + 2 * pad - k) // stride + 1                   # == h when stride == 1
    wo = (w + 2 * pad - k) // stride + 1

    # --- BN1 + ReLU, zero-padded into VMEM scratch (halo lives only in VMEM). ---
    act1 = _bn_relu(x, s1_ref[0], b1_ref[0])
    _zero_halo(pad1_ref, pad, h, w)
    pad1_ref[pad:pad + h, pad:pad + w, :] = act1

    # --- conv1: im2col + a single f32-accumulated MXU matmul (K = k*k*Cin). ---
    _im2col(pad1_ref, col1_ref, h, w, k, cin)
    out1 = jnp.dot(col1_ref[...], w1_ref[...].astype(jnp.float32),
                   preferred_element_type=jnp.float32)      # (H*W, Cout) f32

    # --- shortcut branch + stride handling (no HBM round trips). ---
    if stride == 1:
        if has_shortcut_conv:
            shortcut = jnp.dot(act1.reshape(h * w, cin),
                               ws_ref[...].astype(jnp.float32),
                               preferred_element_type=jnp.float32)
        else:
            shortcut = x.reshape(h * w, cin)                # Cin == Cout here
    else:
        # Strided conv == stride-1 conv sampled at (i*stride, j*stride): apply the
        # host-built 0/1 row-selection matrix (ho*wo, h*w) once.  Same for the 1x1
        # stride-s shortcut conv (sample the activated input, then 1x1 matmul).
        # TODO(synk): strided ref reads would also remove the stride**2 conv1 overcompute.
        sub = sub_ref[...]                                   # (ho*wo, H*W)
        out1 = jnp.dot(sub, out1, preferred_element_type=jnp.float32)          # (ho*wo, Cout)
        act1_sub = jnp.dot(sub, act1.reshape(h * w, cin),
                           preferred_element_type=jnp.float32)                 # (ho*wo, Cin)
        shortcut = jnp.dot(act1_sub, ws_ref[...].astype(jnp.float32),
                           preferred_element_type=jnp.float32)

    # --- BN2 + ReLU -> pad -> conv2 (im2col, one matmul) + residual add. ---
    # TODO(synk): dropout (drop_rate>0, training) and the SE layer are not implemented
    #             (module defaults drop_rate=0.0, se_layer=False make them no-ops).
    act2 = _bn_relu(out1.reshape(ho, wo, cout), s2_ref[0], b2_ref[0])
    _zero_halo(pad2_ref, pad, ho, wo)
    pad2_ref[pad:pad + ho, pad:pad + wo, :] = act2
    _im2col(pad2_ref, col2_ref, ho, wo, k, cout)
    out2 = shortcut + jnp.dot(col2_ref[...], w2_ref[...].astype(jnp.float32),
                              preferred_element_type=jnp.float32)

    o_ref[...] = out2.reshape(1, ho, wo, cout).astype(o_ref.dtype)


# ----------------------------------- wrappers ------------------------------------ #

def _bspec_batch(shape):
    """Block = one batch element, full spatial/channel extent; indexed by the batch grid."""
    nd = len(shape)
    return pl.BlockSpec((1,) + tuple(shape[1:]),
                        lambda b, _nd=nd: (b,) + (0,) * (_nd - 1))


def _bspec_bcast(shape):
    """Full-array block with a constant index_map -> fetched once, reused every grid step."""
    nd = len(shape)
    return pl.BlockSpec(tuple(shape), lambda b, _nd=nd: (0,) * _nd)


def _subsample_matrix(h, w, ho, wo, stride):
    """0/1 matrix S with S[io*wo+jo, (io*stride)*w + jo*stride] = 1 (flattened-row select)."""
    rows = jnp.arange(ho * wo, dtype=jnp.int32)
    src = (rows // wo) * (stride * w) + (rows % wo) * stride
    cols = jnp.arange(h * w, dtype=jnp.int32)
    return (src[:, None] == cols[None, :]).astype(jnp.float32)


def basic_block_forward(x, p, stride):
    """Pre-activation WRN BasicBlock (eval mode), one fused Pallas kernel.  x: NHWC."""
    n, h, w, cin = x.shape
    k = p["conv1_w"].shape[0]
    cout = p["conv1_w"].shape[-1]
    pad = k // 2
    equal_in_out = (cin == cout)
    if equal_in_out and stride != 1:
        # Same latent limitation as the reference WRN BasicBlock (identity shortcut
        # cannot change the spatial size); fail loudly instead of mis-adding.
        raise ValueError("identity shortcut with stride > 1 is not supported")

    ho = (h + 2 * pad - k) // stride + 1
    wo = (w + 2 * pad - k) // stride + 1

    # Pre-flatten conv weights on the host so each conv is one (M, k*k*C) @ (k*k*C, Cout).
    w1c = p["conv1_w"].reshape(k * k * cin, cout)
    w2c = p["conv2_w"].reshape(k * k * cout, cout)

    inputs = [x, p["bn1_scale"], p["bn1_bias"], w1c]
    in_specs = [_bspec_batch(x.shape), _bspec_bcast(p["bn1_scale"].shape),
                _bspec_bcast(p["bn1_bias"].shape), _bspec_bcast(w1c.shape)]
    if not equal_in_out:
        wsc = p["shortcut_w"].reshape(cin, cout)
        inputs.append(wsc)
        in_specs.append(_bspec_bcast(wsc.shape))
    if stride != 1:
        sub = _subsample_matrix(h, w, ho, wo, stride)
        inputs.append(sub)
        in_specs.append(_bspec_bcast(sub.shape))
    inputs += [p["bn2_scale"], p["bn2_bias"], w2c]
    in_specs += [_bspec_bcast(p["bn2_scale"].shape), _bspec_bcast(p["bn2_bias"].shape),
                 _bspec_bcast(w2c.shape)]

    kern = functools.partial(fused_block_kernel, k=k, pad=pad, stride=stride,
                             has_shortcut_conv=not equal_in_out)
    return pl.pallas_call(
        kern,
        grid=(n,),
        in_specs=in_specs,
        out_specs=_bspec_batch((n, ho, wo, cout)),
        out_shape=jax.ShapeDtypeStruct((n, ho, wo, cout), x.dtype),
        scratch_shapes=[
            pltpu.VMEM((h + 2 * pad, w + 2 * pad, cin), jnp.float32),     # pad1 (halo)
            pltpu.VMEM((ho + 2 * pad, wo + 2 * pad, cout), jnp.float32),  # pad2 (halo)
            pltpu.VMEM((h * w, k * k * cin), jnp.float32),                # im2col conv1
            pltpu.VMEM((ho * wo, k * k * cout), jnp.float32),             # im2col conv2
        ],
        compiler_params=_compiler_params(),
    )(*inputs)


def network_block_forward(x_nchw, params_list, stride, *, param_dtype=None,
                          drop_rate=0.0, se_layer=False, training=False):
    """NetworkBlock forward.  x_nchw is PyTorch-style NCHW.

    param_dtype: optionally ship the activations and conv weights in a narrower dtype
    (e.g. jnp.bfloat16 on v6e/v7x) to halve HBM traffic / VMEM footprint; all in-kernel
    math still happens in f32 with f32 accumulation.
    """
    if se_layer:
        raise NotImplementedError("se_layer=True is not implemented")  # TODO(synk)
    if training and drop_rate > 0.0:
        raise NotImplementedError("training-mode dropout is not implemented")  # TODO(synk)

    x = jnp.transpose(x_nchw, (0, 2, 3, 1))                  # NCHW -> NHWC
    if param_dtype is not None:
        x = x.astype(param_dtype)
        params_list = [{k: (v.astype(param_dtype) if k.endswith("_w") else v)
                        for k, v in p.items()} for p in params_list]
    for i, p in enumerate(params_list):
        x = basic_block_forward(x, p, stride if i == 0 else 1)
    y = jnp.transpose(x, (0, 3, 1, 2))                       # NHWC -> NCHW
    return y.astype(x_nchw.dtype)


# -------------------------------- parameter init --------------------------------- #

def _bn_affine(key, c, eps=1e-5):
    k0, k1, k2, k3 = jax.random.split(key, 4)
    gamma = jax.random.uniform(k0, (c,), minval=0.5, maxval=1.5, dtype=jnp.float32)
    beta = 0.1 * jax.random.normal(k1, (c,), dtype=jnp.float32)
    mean = 0.1 * jax.random.normal(k2, (c,), dtype=jnp.float32)
    var = jax.random.uniform(k3, (c,), minval=0.5, maxval=1.5, dtype=jnp.float32)
    scale = gamma / jnp.sqrt(var + eps)
    bias = beta - mean * scale
    return scale.reshape(1, c), bias.reshape(1, c)


def _conv_w(key, kh, kw, cin, cout):
    std = jnp.sqrt(2.0 / (kh * kw * cin))
    return std * jax.random.normal(key, (kh, kw, cin, cout), dtype=jnp.float32)  # HWIO


def init_basic_block_params(key, in_c, out_c, k):
    keys = jax.random.split(key, 5)
    p = {}
    p["bn1_scale"], p["bn1_bias"] = _bn_affine(keys[0], in_c)
    p["conv1_w"] = _conv_w(keys[1], k, k, in_c, out_c)
    p["bn2_scale"], p["bn2_bias"] = _bn_affine(keys[2], out_c)
    p["conv2_w"] = _conv_w(keys[3], k, k, out_c, out_c)
    if in_c != out_c:
        p["shortcut_w"] = _conv_w(keys[4], 1, 1, in_c, out_c)
    return p


def init_network_block_params(key, nb_layers, in_planes, out_planes, k):
    keys = jax.random.split(key, nb_layers)
    params = []
    for i in range(nb_layers):
        cin = in_planes if i == 0 else out_planes
        params.append(init_basic_block_params(keys[i], cin, out_planes, k))
    return params


# ------------------------------ pure-JAX reference ------------------------------- #

def _conv_ref(x, w, stride, padding):
    return lax.conv_general_dilated(
        x, w, window_strides=(stride, stride), padding=padding,
        dimension_numbers=("NHWC", "HWIO", "NHWC"),
        precision=lax.Precision.HIGHEST)


def basic_block_ref(x, p, stride):
    cin, cout = x.shape[-1], p["conv1_w"].shape[-1]
    k = p["conv1_w"].shape[0]
    pad = k // 2
    act = jnp.maximum(x * p["bn1_scale"][0] + p["bn1_bias"][0], 0.0)
    shortcut = x if cin == cout else _conv_ref(act, p["shortcut_w"], stride, "VALID")
    out = _conv_ref(act, p["conv1_w"], stride, [(pad, pad), (pad, pad)])
    out = jnp.maximum(out * p["bn2_scale"][0] + p["bn2_bias"][0], 0.0)
    out = _conv_ref(out, p["conv2_w"], 1, [(pad, pad), (pad, pad)])
    return shortcut + out


def network_block_ref(x_nchw, params_list, stride):
    x = jnp.transpose(x_nchw, (0, 2, 3, 1))
    for i, p in enumerate(params_list):
        x = basic_block_ref(x, p, stride if i == 0 else 1)
    return jnp.transpose(x, (0, 3, 1, 2))


# ------------------------------------- main --------------------------------------- #

if __name__ == "__main__":
    key = jax.random.PRNGKey(0)
    kx, kp = jax.random.split(key)

    N, IN_C, OUT_C, H, W = 2, 4, 8, 16, 16
    NB_LAYERS, STRIDE, KSIZE = 2, 2, 3

    x = jax.random.normal(kx, (N, IN_C, H, W), dtype=jnp.float32)   # PyTorch-style NCHW
    params = init_network_block_params(kp, NB_LAYERS, IN_C, OUT_C, KSIZE)

    # Pure-JAX (XLA conv) reference.
    y_ref = network_block_ref(x, params, STRIDE)

    # f32 run.  Tolerance is relative-Frobenius: the MXU may run f32 matmuls via bf16 passes.
    fwd = jax.jit(functools.partial(network_block_forward, stride=STRIDE))
    y = jax.block_until_ready(fwd(x, params))
    assert y.shape == (N, OUT_C, H // STRIDE, W // STRIDE), y.shape
    assert bool(jnp.all(jnp.isfinite(y)))
    rel_err = jnp.sqrt(jnp.sum((y - y_ref) ** 2)) / jnp.sqrt(jnp.sum(y_ref ** 2))
    assert float(rel_err) < 2e-2, f"relative error too large: {float(rel_err)}"

    # bf16-shipped run (halves HBM traffic / VMEM on v6e/v7x); in-kernel math stays f32,
    # so only input/weight rounding differs -> loose sanity bound vs the f32 reference.
    fwd_bf16 = jax.jit(functools.partial(network_block_forward, stride=STRIDE,
                                         param_dtype=jnp.bfloat16))
    y16 = jax.block_until_ready(fwd_bf16(x, params))
    assert y16.shape == (N, OUT_C, H // STRIDE, W // STRIDE), y16.shape
    assert bool(jnp.all(jnp.isfinite(y16)))
    rel_err16 = jnp.sqrt(jnp.sum((y16 - y_ref) ** 2)) / jnp.sqrt(jnp.sum(y_ref ** 2))
    assert float(rel_err16) < 1e-1, f"bf16 relative error too large: {float(rel_err16)}"

    print("KERNEL_OK")
</pallas_src>

<mosaic_0001>
module attributes {stable_mosaic.version = 11 : i64} {
  func.func @fused_block_kernel(%arg0: i32, %arg1: memref<1x16x16x4xf32, #tpu.memory_space<vmem>>, %arg2: memref<1x4xf32, #tpu.memory_space<vmem>>, %arg3: memref<1x4xf32, #tpu.memory_space<vmem>>, %arg4: memref<36x8xf32, #tpu.memory_space<vmem>>, %arg5: memref<4x8xf32, #tpu.memory_space<vmem>>, %arg6: memref<64x256xf32, #tpu.memory_space<vmem>>, %arg7: memref<1x8xf32, #tpu.memory_space<vmem>>, %arg8: memref<1x8xf32, #tpu.memory_space<vmem>>, %arg9: memref<72x8xf32, #tpu.memory_space<vmem>>, %arg10: memref<1x8x8x8xf32, #tpu.memory_space<vmem>>, %arg11: memref<18x18x4xf32, #tpu.memory_space<vmem>>, %arg12: memref<10x10x8xf32, #tpu.memory_space<vmem>>, %arg13: memref<256x36xf32, #tpu.memory_space<vmem>>, %arg14: memref<64x72xf32, #tpu.memory_space<vmem>>) attributes {dimension_semantics = [#tpu.dimension_semantics<parallel>], iteration_bounds = array<i64: 2>, scalar_prefetch = 0 : i64, scratch_operands = 4 : i64, tpu.core_type = #tpu.core_type<tc>, window_params = [{transform_indices = @transform_0, window_bounds = array<i64: 1, 16, 16, 4>}, {pipeline_mode = #tpu.pipeline_mode<synchronous>, transform_indices = @transform_1, window_bounds = array<i64: 1, 4>}, {pipeline_mode = #tpu.pipeline_mode<synchronous>, transform_indices = @transform_2, window_bounds = array<i64: 1, 4>}, {pipeline_mode = #tpu.pipeline_mode<synchronous>, transform_indices = @transform_3, window_bounds = array<i64: 36, 8>}, {pipeline_mode = #tpu.pipeline_mode<synchronous>, transform_indices = @transform_4, window_bounds = array<i64: 4, 8>}, {pipeline_mode = #tpu.pipeline_mode<synchronous>, transform_indices = @transform_5, window_bounds = array<i64: 64, 256>}, {pipeline_mode = #tpu.pipeline_mode<synchronous>, transform_indices = @transform_6, window_bounds = array<i64: 1, 8>}, {pipeline_mode = #tpu.pipeline_mode<synchronous>, transform_indices = @transform_7, window_bounds = array<i64: 1, 8>}, {pipeline_mode = #tpu.pipeline_mode<synchronous>, transform_indices = @transform_8, window_bounds = array<i64: 72, 8>}, {transform_indices = @transform_9, window_bounds = array<i64: 1, 8, 8, 8>}]} {
    %c0 = arith.constant 0 : index
    %c0_0 = arith.constant 0 : index
    %c0_1 = arith.constant 0 : index
    %c0_2 = arith.constant 0 : index
    %0 = vector.load %arg1[%c0, %c0_0, %c0_1, %c0_2] : memref<1x16x16x4xf32, #tpu.memory_space<vmem>>, vector<1x16x16x4xf32>
    %1 = vector.shape_cast %0 : vector<1x16x16x4xf32> to vector<16x16x4xf32>
    %c0_3 = arith.constant 0 : index
    %c0_4 = arith.constant 0 : index
    %2 = vector.load %arg2[%c0_3, %c0_4] : memref<1x4xf32, #tpu.memory_space<vmem>>, vector<1x4xf32>
    %3 = vector.shape_cast %2 : vector<1x4xf32> to vector<4xf32>
    %c0_5 = arith.constant 0 : index
    %c0_6 = arith.constant 0 : index
    %4 = vector.load %arg3[%c0_5, %c0_6] : memref<1x4xf32, #tpu.memory_space<vmem>>, vector<1x4xf32>
    %5 = vector.shape_cast %4 : vector<1x4xf32> to vector<4xf32>
    %6 = vector.shape_cast %3 : vector<4xf32> to vector<1x1x4xf32>
    %7 = vector.broadcast %6 : vector<1x1x4xf32> to vector<16x16x4xf32>
    %8 = arith.mulf %1, %7 : vector<16x16x4xf32>
    %9 = vector.shape_cast %5 : vector<4xf32> to vector<1x1x4xf32>
    %10 = vector.broadcast %9 : vector<1x1x4xf32> to vector<16x16x4xf32>
    %11 = arith.addf %8, %10 : vector<16x16x4xf32>
    %cst = arith.constant 0.000000e+00 : f32
    %12 = vector.broadcast %cst : f32 to vector<16x16x4xf32>
    %13 = arith.maximumf %11, %12 : vector<16x16x4xf32>
    %cst_7 = arith.constant 0.000000e+00 : f32
    %14 = vector.broadcast %cst_7 : f32 to vector<1x18x4xf32>
    %cst_8 = arith.constant 0.000000e+00 : f32
    %15 = vector.broadcast %cst_8 : f32 to vector<18x1x4xf32>
    %c0_9 = arith.constant 0 : index
    %c0_10 = arith.constant 0 : index
    %c0_11 = arith.constant 0 : index
    %16 = vector.load %arg11[%c0_9, %c0_10, %c0_11] : memref<18x18x4xf32, #tpu.memory_space<vmem>>, vector<1x18x4xf32>
    tpu.vector_store %arg11[%c0_9, %c0_10, %c0_11], %14 {strides = array<i32>} : memref<18x18x4xf32, #tpu.memory_space<vmem>>, vector<1x18x4xf32>,
    %c17 = arith.constant 17 : index
    %c0_12 = arith.constant 0 : index
    %c0_13 = arith.constant 0 : index
    %17 = vector.load %arg11[%c17, %c0_12, %c0_13] : memref<18x18x4xf32, #tpu.memory_space<vmem>>, vector<1x18x4xf32>
    tpu.vector_store %arg11[%c17, %c0_12, %c0_13], %14 {strides = array<i32>} : memref<18x18x4xf32, #tpu.memory_space<vmem>>, vector<1x18x4xf32>,
    %c0_14 = arith.constant 0 : index
    %c0_15 = arith.constant 0 : index
    %c0_16 = arith.constant 0 : index
    %18 = vector.load %arg11[%c0_14, %c0_15, %c0_16] : memref<18x18x4xf32, #tpu.memory_space<vmem>>, vector<18x1x4xf32>
    tpu.vector_store %arg11[%c0_14, %c0_15, %c0_16], %15 {strides = array<i32>} : memref<18x18x4xf32, #tpu.memory_space<vmem>>, vector<18x1x4xf32>,
    %c0_17 = arith.constant 0 : index
    %c17_18 = arith.constant 17 : index
    %c0_19 = arith.constant 0 : index
    %19 = vector.load %arg11[%c0_17, %c17_18, %c0_19] : memref<18x18x4xf32, #tpu.memory_space<vmem>>, vector<18x1x4xf32>
    tpu.vector_store %arg11[%c0_17, %c17_18, %c0_19], %15 {strides = array<i32>} : memref<18x18x4xf32, #tpu.memory_space<vmem>>, vector<18x1x4xf32>,
    %c1 = arith.constant 1 : index
    %c1_20 = arith.constant 1 : index
    %c0_21 = arith.constant 0 : index
    %20 = vector.load %arg11[%c1, %c1_20, %c0_21] : memref<18x18x4xf32, #tpu.memory_space<vmem>>, vector<16x16x4xf32>
    tpu.vector_store %arg11[%c1, %c1_20, %c0_21], %13 {strides = array<i32>} : memref<18x18x4xf32, #tpu.memory_space<vmem>>, vector<16x16x4xf32>,
    %c0_22 = arith.constant 0 : index
    %c0_23 = arith.constant 0 : index
    %c0_24 = arith.constant 0 : index
    %21 = vector.load %arg11[%c0_22, %c0_23, %c0_24] : memref<18x18x4xf32, #tpu.memory_space<vmem>>, vector<16x16x4xf32>
    %22 = vector.shape_cast %21 : vector<16x16x4xf32> to vector<256x4xf32>
    %c0_25 = arith.constant 0 : index
    %c0_26 = arith.constant 0 : index
    %23 = vector.load %arg13[%c0_25, %c0_26] : memref<256x36xf32, #tpu.memory_space<vmem>>, vector<256x4xf32>
    tpu.vector_store %arg13[%c0_25, %c0_26], %22 {strides = array<i32>} : memref<256x36xf32, #tpu.memory_space<vmem>>, vector<256x4xf32>,
    %c0_27 = arith.constant 0 : index
    %c1_28 = arith.constant 1 : index
    %c0_29 = arith.constant 0 : index
    %24 = vector.load %arg11[%c0_27, %c1_28, %c0_29] : memref<18x18x4xf32, #tpu.memory_space<vmem>>, vector<16x16x4xf32>
    %25 = vector.shape_cast %24 : vector<16x16x4xf32> to vector<256x4xf32>
    %c0_30 = arith.constant 0 : index
    %c4 = arith.constant 4 : index
    %26 = vector.load %arg13[%c0_30, %c4] : memref<256x36xf32, #tpu.memory_space<vmem>>, vector<256x4xf32>
    tpu.vector_store %arg13[%c0_30, %c4], %25 {strides = array<i32>} : memref<256x36xf32, #tpu.memory_space<vmem>>, vector<256x4xf32>,
    %c0_31 = arith.constant 0 : index
    %c2 = arith.constant 2 : index
    %c0_32 = arith.constant 0 : index
    %27 = vector.load %arg11[%c0_31, %c2, %c0_32] : memref<18x18x4xf32, #tpu.memory_space<vmem>>, vector<16x16x4xf32>
    %28 = vector.shape_cast %27 : vector<16x16x4xf32> to vector<256x4xf32>
    %c0_33 = arith.constant 0 : index
    %c8 = arith.constant 8 : index
    %29 = vector.load %arg13[%c0_33, %c8] : memref<256x36xf32, #tpu.memory_space<vmem>>, vector<256x4xf32>
    tpu.vector_store %arg13[%c0_33, %c8], %28 {strides = array<i32>} : memref<256x36xf32, #tpu.memory_space<vmem>>, vector<256x4xf32>,
    %c1_34 = arith.constant 1 : index
    %c0_35 = arith.constant 0 : index
    %c0_36 = arith.constant 0 : index
    %30 = vector.load %arg11[%c1_34, %c0_35, %c0_36] : memref<18x18x4xf32, #tpu.memory_space<vmem>>, vector<16x16x4xf32>
    %31 = vector.shape_cast %30 : vector<16x16x4xf32> to vector<256x4xf32>
    %c0_37 = arith.constant 0 : index
    %c12 = arith.constant 12 : index
    %32 = vector.load %arg13[%c0_37, %c12] : memref<256x36xf32, #tpu.memory_space<vmem>>, vector<256x4xf32>
    tpu.vector_store %arg13[%c0_37, %c12], %31 {strides = array<i32>} : memref<256x36xf32, #tpu.memory_space<vmem>>, vector<256x4xf32>,
    %c1_38 = arith.constant 1 : index
    %c1_39 = arith.constant 1 : index
    %c0_40 = arith.constant 0 : index
    %33 = vector.load %arg11[%c1_38, %c1_39, %c0_40] : memref<18x18x4xf32, #tpu.memory_space<vmem>>, vector<16x16x4xf32>
    %34 = vector.shape_cast %33 : vector<16x16x4xf32> to vector<256x4xf32>
    %c0_41 = arith.constant 0 : index
    %c16 = arith.constant 16 : index
    %35 = vector.load %arg13[%c0_41, %c16] : memref<256x36xf32, #tpu.memory_space<vmem>>, vector<256x4xf32>
    tpu.vector_store %arg13[%c0_41, %c16], %34 {strides = array<i32>} : memref<256x36xf32, #tpu.memory_space<vmem>>, vector<256x4xf32>,
    %c1_42 = arith.constant 1 : index
    %c2_43 = arith.constant 2 : index
    %c0_44 = arith.constant 0 : index
    %36 = vector.load %arg11[%c1_42, %c2_43, %c0_44] : memref<18x18x4xf32, #tpu.memory_space<vmem>>, vector<16x16x4xf32>
    %37 = vector.shape_cast %36 : vector<16x16x4xf32> to vector<256x4xf32>
    %c0_45 = arith.constant 0 : index
    %c20 = arith.constant 20 : index
    %38 = vector.load %arg13[%c0_45, %c20] : memref<256x36xf32, #tpu.memory_space<vmem>>, vector<256x4xf32>
    tpu.vector_store %arg13[%c0_45, %c20], %37 {strides = array<i32>} : memref<256x36xf32, #tpu.memory_space<vmem>>, vector<256x4xf32>,
    %c2_46 = arith.constant 2 : index
    %c0_47 = arith.constant 0 : index
    %c0_48 = arith.constant 0 : index
    %39 = vector.load %arg11[%c2_46, %c0_47, %c0_48] : memref<18x18x4xf32, #tpu.memory_space<vmem>>, vector<16x16x4xf32>
    %40 = vector.shape_cast %39 : vector<16x16x4xf32> to vector<256x4xf32>
    %c0_49 = arith.constant 0 : index
    %c24 = arith.constant 24 : index
    %41 = vector.load %arg13[%c0_49, %c24] : memref<256x36xf32, #tpu.memory_space<vmem>>, vector<256x4xf32>
    tpu.vector_store %arg13[%c0_49, %c24], %40 {strides = array<i32>} : memref<256x36xf32, #tpu.memory_space<vmem>>, vector<256x4xf32>,
    %c2_50 = arith.constant 2 : index
    %c1_51 = arith.constant 1 : index
    %c0_52 = arith.constant 0 : index
    %42 = vector.load %arg11[%c2_50, %c1_51, %c0_52] : memref<18x18x4xf32, #tpu.memory_space<vmem>>, vector<16x16x4xf32>
    %43 = vector.shape_cast %42 : vector<16x16x4xf32> to vector<256x4xf32>
    %c0_53 = arith.constant 0 : index
    %c28 = arith.constant 28 : index
    %44 = vector.load %arg13[%c0_53, %c28] : memref<256x36xf32, #tpu.memory_space<vmem>>, vector<256x4xf32>
    tpu.vector_store %arg13[%c0_53, %c28], %43 {strides = array<i32>} : memref<256x36xf32, #tpu.memory_space<vmem>>, vector<256x4xf32>,
    %c2_54 = arith.constant 2 : index
    %c2_55 = arith.constant 2 : index
    %c0_56 = arith.constant 0 : index
    %45 = vector.load %arg11[%c2_54, %c2_55, %c0_56] : memref<18x18x4xf32, #tpu.memory_space<vmem>>, vector<16x16x4xf32>
    %46 = vector.shape_cast %45 : vector<16x16x4xf32> to vector<256x4xf32>
    %c0_57 = arith.constant 0 : index
    %c32 = arith.constant 32 : index
    %47 = vector.load %arg13[%c0_57, %c32] : memref<256x36xf32, #tpu.memory_space<vmem>>, vector<256x4xf32>
    tpu.vector_store %arg13[%c0_57, %c32], %46 {strides = array<i32>} : memref<256x36xf32, #tpu.memory_space<vmem>>, vector<256x4xf32>,
    %c0_58 = arith.constant 0 : index
    %c0_59 = arith.constant 0 : index
    %48 = vector.load %arg13[%c0_58, %c0_59] : memref<256x36xf32, #tpu.memory_space<vmem>>, vector<256x36xf32>
    %c0_60 = arith.constant 0 : index
    %c0_61 = arith.constant 0 : index
    %49 = vector.load %arg4[%c0_60, %c0_61] : memref<36x8xf32, #tpu.memory_space<vmem>>, vector<36x8xf32>
    %cst_62 = arith.constant dense<0.000000e+00> : vector<256x8xf32>
    %50 = tpu.matmul %48, %49, %cst_62 {dimension_numbers = #tpu.dot_dimension_numbers<[1], [0], [0], [1], [0, 0, 1, 1], [], []>} : vector<256x36xf32>, vector<36x8xf32>, vector<256x8xf32> -> vector<256x8xf32>
    %c0_63 = arith.constant 0 : index
    %c0_64 = arith.constant 0 : index
    %51 = vector.load %arg6[%c0_63, %c0_64] : memref<64x256xf32, #tpu.memory_space<vmem>>, vector<64x256xf32>
    %cst_65 = arith.constant dense<0.000000e+00> : vector<64x8xf32>
    %52 = tpu.matmul %51, %50, %cst_65 {dimension_numbers = #tpu.dot_dimension_numbers<[1], [0], [0], [1], [0, 0, 1, 1], [], []>} : vector<64x256xf32>, vector<256x8xf32>, vector<64x8xf32> -> vector<64x8xf32>
    %53 = vector.shape_cast %13 : vector<16x16x4xf32> to vector<256x4xf32>
    %cst_66 = arith.constant dense<0.000000e+00> : vector<64x4xf32>
    %54 = tpu.matmul %51, %53, %cst_66 {dimension_numbers = #tpu.dot_dimension_numbers<[1], [0], [0], [1], [0, 0, 1, 1], [], []>} : vector<64x256xf32>, vector<256x4xf32>, vector<64x4xf32> -> vector<64x4xf32>
    %c0_67 = arith.constant 0 : index
    %c0_68 = arith.constant 0 : index
    %55 = vector.load %arg5[%c0_67, %c0_68] : memref<4x8xf32, #tpu.memory_space<vmem>>, vector<4x8xf32>
    %cst_69 = arith.constant dense<0.000000e+00> : vector<64x8xf32>
    %56 = tpu.matmul %54, %55, %cst_69 {dimension_numbers = #tpu.dot_dimension_numbers<[1], [0], [0], [1], [0, 0, 1, 1], [], []>} : vector<64x4xf32>, vector<4x8xf32>, vector<64x8xf32> -> vector<64x8xf32>
    %57 = vector.shape_cast %52 : vector<64x8xf32> to vector<8x8x8xf32>
    %c0_70 = arith.constant 0 : index
    %c0_71 = arith.constant 0 : index
    %58 = vector.load %arg7[%c0_70, %c0_71] : memref<1x8xf32, #tpu.memory_space<vmem>>, vector<1x8xf32>
    %59 = vector.shape_cast %58 : vector<1x8xf32> to vector<8xf32>
    %c0_72 = arith.constant 0 : index
    %c0_73 = arith.constant 0 : index
    %60 = vector.load %arg8[%c0_72, %c0_73] : memref<1x8xf32, #tpu.memory_space<vmem>>, vector<1x8xf32>
    %61 = vector.shape_cast %60 : vector<1x8xf32> to vector<8xf32>
    %62 = vector.shape_cast %59 : vector<8xf32> to vector<1x1x8xf32>
    %63 = vector.broadcast %62 : vector<1x1x8xf32> to vector<8x8x8xf32>
    %64 = arith.mulf %57, %63 : vector<8x8x8xf32>
    %65 = vector.shape_cast %61 : vector<8xf32> to vector<1x1x8xf32>
    %66 = vector.broadcast %65 : vector<1x1x8xf32> to vector<8x8x8xf32>
    %67 = arith.addf %64, %66 : vector<8x8x8xf32>
    %cst_74 = arith.constant 0.000000e+00 : f32
    %68 = vector.broadcast %cst_74 : f32 to vector<8x8x8xf32>
    %69 = arith.maximumf %67, %68 : vector<8x8x8xf32>
    %cst_75 = arith.constant 0.000000e+00 : f32
    %70 = vector.broadcast %cst_75 : f32 to vector<1x10x8xf32>
    %cst_76 = arith.constant 0.000000e+00 : f32
    %71 = vector.broadcast %cst_76 : f32 to vector<10x1x8xf32>
    %c0_77 = arith.constant 0 : index
    %c0_78 = arith.constant 0 : index
    %c0_79 = arith.constant 0 : index
    %72 = vector.load %arg12[%c0_77, %c0_78, %c0_79] : memref<10x10x8xf32, #tpu.memory_space<vmem>>, vector<1x10x8xf32>
    tpu.vector_store %arg12[%c0_77, %c0_78, %c0_79], %70 {strides = array<i32>} : memref<10x10x8xf32, #tpu.memory_space<vmem>>, vector<1x10x8xf32>,
    %c9 = arith.constant 9 : index
    %c0_80 = arith.constant 0 : index
    %c0_81 = arith.constant 0 : index
    %73 = vector.load %arg12[%c9, %c0_80, %c0_81] : memref<10x10x8xf32, #tpu.memory_space<vmem>>, vector<1x10x8xf32>
    tpu.vector_store %arg12[%c9, %c0_80, %c0_81], %70 {strides = array<i32>} : memref<10x10x8xf32, #tpu.memory_space<vmem>>, vector<1x10x8xf32>,
    %c0_82 = arith.constant 0 : index
    %c0_83 = arith.constant 0 : index
    %c0_84 = arith.constant 0 : index
    %74 = vector.load %arg12[%c0_82, %c0_83, %c0_84] : memref<10x10x8xf32, #tpu.memory_space<vmem>>, vector<10x1x8xf32>
    tpu.vector_store %arg12[%c0_82, %c0_83, %c0_84], %71 {strides = array<i32>} : memref<10x10x8xf32, #tpu.memory_space<vmem>>, vector<10x1x8xf32>,
    %c0_85 = arith.constant 0 : index
    %c9_86 = arith.constant 9 : index
    %c0_87 = arith.constant 0 : index
    %75 = vector.load %arg12[%c0_85, %c9_86, %c0_87] : memref<10x10x8xf32, #tpu.memory_space<vmem>>, vector<10x1x8xf32>
    tpu.vector_store %arg12[%c0_85, %c9_86, %c0_87], %71 {strides = array<i32>} : memref<10x10x8xf32, #tpu.memory_space<vmem>>, vector<10x1x8xf32>,
    %c1_88 = arith.constant 1 : index
    %c1_89 = arith.constant 1 : index
    %c0_90 = arith.constant 0 : index
    %76 = vector.load %arg12[%c1_88, %c1_89, %c0_90] : memref<10x10x8xf32, #tpu.memory_space<vmem>>, vector<8x8x8xf32>
    tpu.vector_store %arg12[%c1_88, %c1_89, %c0_90], %69 {strides = array<i32>} : memref<10x10x8xf32, #tpu.memory_space<vmem>>, vector<8x8x8xf32>,
    %c0_91 = arith.constant 0 : index
    %c0_92 = arith.constant 0 : index
    %c0_93 = arith.constant 0 : index
    %77 = vector.load %arg12[%c0_91, %c0_92, %c0_93] : memref<10x10x8xf32, #tpu.memory_space<vmem>>, vector<8x8x8xf32>
    %78 = vector.shape_cast %77 : vector<8x8x8xf32> to vector<64x8xf32>
    %c0_94 = arith.constant 0 : index
    %c0_95 = arith.constant 0 : index
    %79 = vector.load %arg14[%c0_94, %c0_95] : memref<64x72xf32, #tpu.memory_space<vmem>>, vector<64x8xf32>
    tpu.vector_store %arg14[%c0_94, %c0_95], %78 {strides = array<i32>} : memref<64x72xf32, #tpu.memory_space<vmem>>, vector<64x8xf32>,
    %c0_96 = arith.constant 0 : index
    %c1_97 = arith.constant 1 : index
    %c0_98 = arith.constant 0 : index
    %80 = vector.load %arg12[%c0_96, %c1_97, %c0_98] : memref<10x10x8xf32, #tpu.memory_space<vmem>>, vector<8x8x8xf32>
    %81 = vector.shape_cast %80 : vector<8x8x8xf32> to vector<64x8xf32>
    %c0_99 = arith.constant 0 : index
    %c8_100 = arith.constant 8 : index
    %82 = vector.load %arg14[%c0_99, %c8_100] : memref<64x72xf32, #tpu.memory_space<vmem>>, vector<64x8xf32>
    tpu.vector_store %arg14[%c0_99, %c8_100], %81 {strides = array<i32>} : memref<64x72xf32, #tpu.memory_space<vmem>>, vector<64x8xf32>,
    %c0_101 = arith.constant 0 : index
    %c2_102 = arith.constant 2 : index
    %c0_103 = arith.constant 0 : index
    %83 = vector.load %arg12[%c0_101, %c2_102, %c0_103] : memref<10x10x8xf32, #tpu.memory_space<vmem>>, vector<8x8x8xf32>
    %84 = vector.shape_cast %83 : vector<8x8x8xf32> to vector<64x8xf32>
    %c0_104 = arith.constant 0 : index
    %c16_105 = arith.constant 16 : index
    %85 = vector.load %arg14[%c0_104, %c16_105] : memref<64x72xf32, #tpu.memory_space<vmem>>, vector<64x8xf32>
    tpu.vector_store %arg14[%c0_104, %c16_105], %84 {strides = array<i32>} : memref<64x72xf32, #tpu.memory_space<vmem>>, vector<64x8xf32>,
    %c1_106 = arith.constant 1 : index
    %c0_107 = arith.constant 0 : index
    %c0_108 = arith.constant 0 : index
    %86 = vector.load %arg12[%c1_106, %c0_107, %c0_108] : memref<10x10x8xf32, #tpu.memory_space<vmem>>, vector<8x8x8xf32>
    %87 = vector.shape_cast %86 : vector<8x8x8xf32> to vector<64x8xf32>
    %c0_109 = arith.constant 0 : index
    %c24_110 = arith.constant 24 : index
    %88 = vector.load %arg14[%c0_109, %c24_110] : memref<64x72xf32, #tpu.memory_space<vmem>>, vector<64x8xf32>
    tpu.vector_store %arg14[%c0_109, %c24_110], %87 {strides = array<i32>} : memref<64x72xf32, #tpu.memory_space<vmem>>, vector<64x8xf32>,
    %c1_111 = arith.constant 1 : index
    %c1_112 = arith.constant 1 : index
    %c0_113 = arith.constant 0 : index
    %89 = vector.load %arg12[%c1_111, %c1_112, %c0_113] : memref<10x10x8xf32, #tpu.memory_space<vmem>>, vector<8x8x8xf32>
    %90 = vector.shape_cast %89 : vector<8x8x8xf32> to vector<64x8xf32>
    %c0_114 = arith.constant 0 : index
    %c32_115 = arith.constant 32 : index
    %91 = vector.load %arg14[%c0_114, %c32_115] : memref<64x72xf32, #tpu.memory_space<vmem>>, vector<64x8xf32>
    tpu.vector_store %arg14[%c0_114, %c32_115], %90 {strides = array<i32>} : memref<64x72xf32, #tpu.memory_space<vmem>>, vector<64x8xf32>,
    %c1_116 = arith.constant 1 : index
    %c2_117 = arith.constant 2 : index
    %c0_118 = arith.constant 0 : index
    %92 = vector.load %arg12[%c1_116, %c2_117, %c0_118] : memref<10x10x8xf32, #tpu.memory_space<vmem>>, vector<8x8x8xf32>
    %93 = vector.shape_cast %92 : vector<8x8x8xf32> to vector<64x8xf32>
    %c0_119 = arith.constant 0 : index
    %c40 = arith.constant 40 : index
    %94 = vector.load %arg14[%c0_119, %c40] : memref<64x72xf32, #tpu.memory_space<vmem>>, vector<64x8xf32>
    tpu.vector_store %arg14[%c0_119, %c40], %93 {strides = array<i32>} : memref<64x72xf32, #tpu.memory_space<vmem>>, vector<64x8xf32>,
    %c2_120 = arith.constant 2 : index
    %c0_121 = arith.constant 0 : index
    %c0_122 = arith.constant 0 : index
    %95 = vector.load %arg12[%c2_120, %c0_121, %c0_122] : memref<10x10x8xf32, #tpu.memory_space<vmem>>, vector<8x8x8xf32>
    %96 = vector.shape_cast %95 : vector<8x8x8xf32> to vector<64x8xf32>
    %c0_123 = arith.constant 0 : index
    %c48 = arith.constant 48 : index
    %97 = vector.load %arg14[%c0_123, %c48] : memref<64x72xf32, #tpu.memory_space<vmem>>, vector<64x8xf32>
    tpu.vector_store %arg14[%c0_123, %c48], %96 {strides = array<i32>} : memref<64x72xf32, #tpu.memory_space<vmem>>, vector<64x8xf32>,
    %c2_124 = arith.constant 2 : index
    %c1_125 = arith.constant 1 : index
    %c0_126 = arith.constant 0 : index
    %98 = vector.load %arg12[%c2_124, %c1_125, %c0_126] : memref<10x10x8xf32, #tpu.memory_space<vmem>>, vector<8x8x8xf32>
    %99 = vector.shape_cast %98 : vector<8x8x8xf32> to vector<64x8xf32>
    %c0_127 = arith.constant 0 : index
    %c56 = arith.constant 56 : index
    %100 = vector.load %arg14[%c0_127, %c56] : memref<64x72xf32, #tpu.memory_space<vmem>>, vector<64x8xf32>
    tpu.vector_store %arg14[%c0_127, %c56], %99 {strides = array<i32>} : memref<64x72xf32, #tpu.memory_space<vmem>>, vector<64x8xf32>,
    %c2_128 = arith.constant 2 : index
    %c2_129 = arith.constant 2 : index
    %c0_130 = arith.constant 0 : index
    %101 = vector.load %arg12[%c2_128, %c2_129, %c0_130] : memref<10x10x8xf32, #tpu.memory_space<vmem>>, vector<8x8x8xf32>
    %102 = vector.shape_cast %101 : vector<8x8x8xf32> to vector<64x8xf32>
    %c0_131 = arith.constant 0 : index
    %c64 = arith.constant 64 : index
    %103 = vector.load %arg14[%c0_131, %c64] : memref<64x72xf32, #tpu.memory_space<vmem>>, vector<64x8xf32>
    tpu.vector_store %arg14[%c0_131, %c64], %102 {strides = array<i32>} : memref<64x72xf32, #tpu.memory_space<vmem>>, vector<64x8xf32>,
    %c0_132 = arith.constant 0 : index
    %c0_133 = arith.constant 0 : index
    %104 = vector.load %arg14[%c0_132, %c0_133] : memref<64x72xf32, #tpu.memory_space<vmem>>, vector<64x72xf32>
    %c0_134 = arith.constant 0 : index
    %c0_135 = arith.constant 0 : index
    %105 = vector.load %arg9[%c0_134, %c0_135] : memref<72x8xf32, #tpu.memory_space<vmem>>, vector<72x8xf32>
    %cst_136 = arith.constant dense<0.000000e+00> : vector<64x8xf32>
    %106 = tpu.matmul %104, %105, %cst_136 {dimension_numbers = #tpu.dot_dimension_numbers<[1], [0], [0], [1], [0, 0, 1, 1], [], []>} : vector<64x72xf32>, vector<72x8xf32>, vector<64x8xf32> -> vector<64x8xf32>
    %107 = arith.addf %56, %106 : vector<64x8xf32>
    %108 = vector.shape_cast %107 : vector<64x8xf32> to vector<1x8x8x8xf32>
    %c0_137 = arith.constant 0 : index
    %c0_138 = arith.constant 0 : index
    %c0_139 = arith.constant 0 : index
    %c0_140 = arith.constant 0 : index
    %109 = vector.load %arg10[%c0_137, %c0_138, %c0_139, %c0_140] : memref<1x8x8x8xf32, #tpu.memory_space<vmem>>, vector<1x8x8x8xf32>
    tpu.vector_store %arg10[%c0_137, %c0_138, %c0_139, %c0_140], %108 {strides = array<i32>} : memref<1x8x8x8xf32, #tpu.memory_space<vmem>>, vector<1x8x8x8xf32>,
    return
  }
  func.func @transform_0(%arg0: i32) -> (i32, i32, i32, i32) {
    %c0_i32 = arith.constant 0 : i32
    %c0_i32_0 = arith.constant 0 : i32
    %c0_i32_1 = arith.constant 0 : i32
    %c0_i32_2 = arith.constant 0 : i32
    return %arg0, %c0_i32, %c0_i32_0, %c0_i32_1 : i32, i32, i32, i32
  }
  func.func @transform_1(%arg0: i32) -> (i32, i32) {
    %c0_i32 = arith.constant 0 : i32
    %c0_i32_0 = arith.constant 0 : i32
    %c0_i32_1 = arith.constant 0 : i32
    return %c0_i32, %c0_i32_0 : i32, i32
  }
  func.func @transform_2(%arg0: i32) -> (i32, i32) {
    %c0_i32 = arith.constant 0 : i32
    %c0_i32_0 = arith.constant 0 : i32
    %c0_i32_1 = arith.constant 0 : i32
    return %c0_i32, %c0_i32_0 : i32, i32
  }
  func.func @transform_3(%arg0: i32) -> (i32, i32) {
    %c0_i32 = arith.constant 0 : i32
    %c0_i32_0 = arith.constant 0 : i32
    %c0_i32_1 = arith.constant 0 : i32
    return %c0_i32, %c0_i32_0 : i32, i32
  }
  func.func @transform_4(%arg0: i32) -> (i32, i32) {
    %c0_i32 = arith.constant 0 : i32
    %c0_i32_0 = arith.constant 0 : i32
    %c0_i32_1 = arith.constant 0 : i32
    return %c0_i32, %c0_i32_0 : i32, i32
  }
  func.func @transform_5(%arg0: i32) -> (i32, i32) {
    %c0_i32 = arith.constant 0 : i32
    %c0_i32_0 = arith.constant 0 : i32
    %c0_i32_1 = arith.constant 0 : i32
    return %c0_i32, %c0_i32_0 : i32, i32
  }
  func.func @transform_6(%arg0: i32) -> (i32, i32) {
    %c0_i32 = arith.constant 0 : i32
    %c0_i32_0 = arith.constant 0 : i32
    %c0_i32_1 = arith.constant 0 : i32
    return %c0_i32, %c0_i32_0 : i32, i32
  }
  func.func @transform_7(%arg0: i32) -> (i32, i32) {
    %c0_i32 = arith.constant 0 : i32
    %c0_i32_0 = arith.constant 0 : i32
    %c0_i32_1 = arith.constant 0 : i32
    return %c0_i32, %c0_i32_0 : i32, i32
  }
  func.func @transform_8(%arg0: i32) -> (i32, i32) {
    %c0_i32 = arith.constant 0 : i32
    %c0_i32_0 = arith.constant 0 : i32
    %c0_i32_1 = arith.constant 0 : i32
    return %c0_i32, %c0_i32_0 : i32, i32
  }
  func.func @transform_9(%arg0: i32) -> (i32, i32, i32, i32) {
    %c0_i32 = arith.constant 0 : i32
    %c0_i32_0 = arith.constant 0 : i32
    %c0_i32_1 = arith.constant 0 : i32
    %c0_i32_2 = arith.constant 0 : i32
    return %arg0, %c0_i32, %c0_i32_0, %c0_i32_1 : i32, i32, i32, i32
  }
}

module attributes {stable_mosaic.version = 11 : i64} {
  func.func @fused_block_kernel(%arg0: i32, %arg1: memref<1x8x8x8xf32, #tpu.memory_space<vmem>>, %arg2: memref<1x8xf32, #tpu.memory_space<vmem>>, %arg3: memref<1x8xf32, #tpu.memory_space<vmem>>, %arg4: memref<72x8xf32, #tpu.memory_space<vmem>>, %arg5: memref<1x8xf32, #tpu.memory_space<vmem>>, %arg6: memref<1x8xf32, #tpu.memory_space<vmem>>, %arg7: memref<72x8xf32, #tpu.memory_space<vmem>>, %arg8: memref<1x8x8x8xf32, #tpu.memory_space<vmem>>, %arg9: memref<10x10x8xf32, #tpu.memory_space<vmem>>, %arg10: memref<10x10x8xf32, #tpu.memory_space<vmem>>, %arg11: memref<64x72xf32, #tpu.memory_space<vmem>>, %arg12: memref<64x72xf32, #tpu.memory_space<vmem>>) attributes {dimension_semantics = [#tpu.dimension_semantics<parallel>], iteration_bounds = array<i64: 2>, scalar_prefetch = 0 : i64, scratch_operands = 4 : i64, tpu.core_type = #tpu.core_type<tc>, window_params = [{transform_indices = @transform_0, window_bounds = array<i64: 1, 8, 8, 8>}, {pipeline_mode = #tpu.pipeline_mode<synchronous>, transform_indices = @transform_1, window_bounds = array<i64: 1, 8>}, {pipeline_mode = #tpu.pipeline_mode<synchronous>, transform_indices = @transform_2, window_bounds = array<i64: 1, 8>}, {pipeline_mode = #tpu.pipeline_mode<synchronous>, transform_indices = @transform_3, window_bounds = array<i64: 72, 8>}, {pipeline_mode = #tpu.pipeline_mode<synchronous>, transform_indices = @transform_4, window_bounds = array<i64: 1, 8>}, {pipeline_mode = #tpu.pipeline_mode<synchronous>, transform_indices = @transform_5, window_bounds = array<i64: 1, 8>}, {pipeline_mode = #tpu.pipeline_mode<synchronous>, transform_indices = @transform_6, window_bounds = array<i64: 72, 8>}, {transform_indices = @transform_7, window_bounds = array<i64: 1, 8, 8, 8>}]} {
    %c0 = arith.constant 0 : index
    %c0_0 = arith.constant 0 : index
    %c0_1 = arith.constant 0 : index
    %c0_2 = arith.constant 0 : index
    %0 = vector.load %arg1[%c0, %c0_0, %c0_1, %c0_2] : memref<1x8x8x8xf32, #tpu.memory_space<vmem>>, vector<1x8x8x8xf32>
    %1 = vector.shape_cast %0 : vector<1x8x8x8xf32> to vector<8x8x8xf32>
    %c0_3 = arith.constant 0 : index
    %c0_4 = arith.constant 0 : index
    %2 = vector.load %arg2[%c0_3, %c0_4] : memref<1x8xf32, #tpu.memory_space<vmem>>, vector<1x8xf32>
    %3 = vector.shape_cast %2 : vector<1x8xf32> to vector<8xf32>
    %c0_5 = arith.constant 0 : index
    %c0_6 = arith.constant 0 : index
    %4 = vector.load %arg3[%c0_5, %c0_6] : memref<1x8xf32, #tpu.memory_space<vmem>>, vector<1x8xf32>
    %5 = vector.shape_cast %4 : vector<1x8xf32> to vector<8xf32>
    %6 = vector.shape_cast %3 : vector<8xf32> to vector<1x1x8xf32>
    %7 = vector.broadcast %6 : vector<1x1x8xf32> to vector<8x8x8xf32>
    %8 = arith.mulf %1, %7 : vector<8x8x8xf32>
    %9 = vector.shape_cast %5 : vector<8xf32> to vector<1x1x8xf32>
    %10 = vector.broadcast %9 : vector<1x1x8xf32> to vector<8x8x8xf32>
    %11 = arith.addf %8, %10 : vector<8x8x8xf32>
    %cst = arith.constant 0.000000e+00 : f32
    %12 = vector.broadcast %cst : f32 to vector<8x8x8xf32>
    %13 = arith.maximumf %11, %12 : vector<8x8x8xf32>
    %cst_7 = arith.constant 0.000000e+00 : f32
    %14 = vector.broadcast %cst_7 : f32 to vector<1x10x8xf32>
    %cst_8 = arith.constant 0.000000e+00 : f32
    %15 = vector.broadcast %cst_8 : f32 to vector<10x1x8xf32>
    %c0_9 = arith.constant 0 : index
    %c0_10 = arith.constant 0 : index
    %c0_11 = arith.constant 0 : index
    %16 = vector.load %arg9[%c0_9, %c0_10, %c0_11] : memref<10x10x8xf32, #tpu.memory_space<vmem>>, vector<1x10x8xf32>
    tpu.vector_store %arg9[%c0_9, %c0_10, %c0_11], %14 {strides = array<i32>} : memref<10x10x8xf32, #tpu.memory_space<vmem>>, vector<1x10x8xf32>,
    %c9 = arith.constant 9 : index
    %c0_12 = arith.constant 0 : index
    %c0_13 = arith.constant 0 : index
    %17 = vector.load %arg9[%c9, %c0_12, %c0_13] : memref<10x10x8xf32, #tpu.memory_space<vmem>>, vector<1x10x8xf32>
    tpu.vector_store %arg9[%c9, %c0_12, %c0_13], %14 {strides = array<i32>} : memref<10x10x8xf32, #tpu.memory_space<vmem>>, vector<1x10x8xf32>,
    %c0_14 = arith.constant 0 : index
    %c0_15 = arith.constant 0 : index
    %c0_16 = arith.constant 0 : index
    %18 = vector.load %arg9[%c0_14, %c0_15, %c0_16] : memref<10x10x8xf32, #tpu.memory_space<vmem>>, vector<10x1x8xf32>
    tpu.vector_store %arg9[%c0_14, %c0_15, %c0_16], %15 {strides = array<i32>} : memref<10x10x8xf32, #tpu.memory_space<vmem>>, vector<10x1x8xf32>,
    %c0_17 = arith.constant 0 : index
    %c9_18 = arith.constant 9 : index
    %c0_19 = arith.constant 0 : index
    %19 = vector.load %arg9[%c0_17, %c9_18, %c0_19] : memref<10x10x8xf32, #tpu.memory_space<vmem>>, vector<10x1x8xf32>
    tpu.vector_store %arg9[%c0_17, %c9_18, %c0_19], %15 {strides = array<i32>} : memref<10x10x8xf32, #tpu.memory_space<vmem>>, vector<10x1x8xf32>,
    %c1 = arith.constant 1 : index
    %c1_20 = arith.constant 1 : index
    %c0_21 = arith.constant 0 : index
    %20 = vector.load %arg9[%c1, %c1_20, %c0_21] : memref<10x10x8xf32, #tpu.memory_space<vmem>>, vector<8x8x8xf32>
    tpu.vector_store %arg9[%c1, %c1_20, %c0_21], %13 {strides = array<i32>} : memref<10x10x8xf32, #tpu.memory_space<vmem>>, vector<8x8x8xf32>,
    %c0_22 = arith.constant 0 : index
    %c0_23 = arith.constant 0 : index
    %c0_24 = arith.constant 0 : index
    %21 = vector.load %arg9[%c0_22, %c0_23, %c0_24] : memref<10x10x8xf32, #tpu.memory_space<vmem>>, vector<8x8x8xf32>
    %22 = vector.shape_cast %21 : vector<8x8x8xf32> to vector<64x8xf32>
    %c0_25 = arith.constant 0 : index
    %c0_26 = arith.constant 0 : index
    %23 = vector.load %arg11[%c0_25, %c0_26] : memref<64x72xf32, #tpu.memory_space<vmem>>, vector<64x8xf32>
    tpu.vector_store %arg11[%c0_25, %c0_26], %22 {strides = array<i32>} : memref<64x72xf32, #tpu.memory_space<vmem>>, vector<64x8xf32>,
    %c0_27 = arith.constant 0 : index
    %c1_28 = arith.constant 1 : index
    %c0_29 = arith.constant 0 : index
    %24 = vector.load %arg9[%c0_27, %c1_28, %c0_29] : memref<10x10x8xf32, #tpu.memory_space<vmem>>, vector<8x8x8xf32>
    %25 = vector.shape_cast %24 : vector<8x8x8xf32> to vector<64x8xf32>
    %c0_30 = arith.constant 0 : index
    %c8 = arith.constant 8 : index
    %26 = vector.load %arg11[%c0_30, %c8] : memref<64x72xf32, #tpu.memory_space<vmem>>, vector<64x8xf32>
    tpu.vector_store %arg11[%c0_30, %c8], %25 {strides = array<i32>} : memref<64x72xf32, #tpu.memory_space<vmem>>, vector<64x8xf32>,
    %c0_31 = arith.constant 0 : index
    %c2 = arith.constant 2 : index
    %c0_32 = arith.constant 0 : index
    %27 = vector.load %arg9[%c0_31, %c2, %c0_32] : memref<10x10x8xf32, #tpu.memory_space<vmem>>, vector<8x8x8xf32>
    %28 = vector.shape_cast %27 : vector<8x8x8xf32> to vector<64x8xf32>
    %c0_33 = arith.constant 0 : index
    %c16 = arith.constant 16 : index
    %29 = vector.load %arg11[%c0_33, %c16] : memref<64x72xf32, #tpu.memory_space<vmem>>, vector<64x8xf32>
    tpu.vector_store %arg11[%c0_33, %c16], %28 {strides = array<i32>} : memref<64x72xf32, #tpu.memory_space<vmem>>, vector<64x8xf32>,
    %c1_34 = arith.constant 1 : index
    %c0_35 = arith.constant 0 : index
    %c0_36 = arith.constant 0 : index
    %30 = vector.load %arg9[%c1_34, %c0_35, %c0_36] : memref<10x10x8xf32, #tpu.memory_space<vmem>>, vector<8x8x8xf32>
    %31 = vector.shape_cast %30 : vector<8x8x8xf32> to vector<64x8xf32>
    %c0_37 = arith.constant 0 : index
    %c24 = arith.constant 24 : index
    %32 = vector.load %arg11[%c0_37, %c24] : memref<64x72xf32, #tpu.memory_space<vmem>>, vector<64x8xf32>
    tpu.vector_store %arg11[%c0_37, %c24], %31 {strides = array<i32>} : memref<64x72xf32, #tpu.memory_space<vmem>>, vector<64x8xf32>,
    %c1_38 = arith.constant 1 : index
    %c1_39 = arith.constant 1 : index
    %c0_40 = arith.constant 0 : index
    %33 = vector.load %arg9[%c1_38, %c1_39, %c0_40] : memref<10x10x8xf32, #tpu.memory_space<vmem>>, vector<8x8x8xf32>
    %34 = vector.shape_cast %33 : vector<8x8x8xf32> to vector<64x8xf32>
    %c0_41 = arith.constant 0 : index
    %c32 = arith.constant 32 : index
    %35 = vector.load %arg11[%c0_41, %c32] : memref<64x72xf32, #tpu.memory_space<vmem>>, vector<64x8xf32>
    tpu.vector_store %arg11[%c0_41, %c32], %34 {strides = array<i32>} : memref<64x72xf32, #tpu.memory_space<vmem>>, vector<64x8xf32>,
    %c1_42 = arith.constant 1 : index
    %c2_43 = arith.constant 2 : index
    %c0_44 = arith.constant 0 : index
    %36 = vector.load %arg9[%c1_42, %c2_43, %c0_44] : memref<10x10x8xf32, #tpu.memory_space<vmem>>, vector<8x8x8xf32>
    %37 = vector.shape_cast %36 : vector<8x8x8xf32> to vector<64x8xf32>
    %c0_45 = arith.constant 0 : index
    %c40 = arith.constant 40 : index
    %38 = vector.load %arg11[%c0_45, %c40] : memref<64x72xf32, #tpu.memory_space<vmem>>, vector<64x8xf32>
    tpu.vector_store %arg11[%c0_45, %c40], %37 {strides = array<i32>} : memref<64x72xf32, #tpu.memory_space<vmem>>, vector<64x8xf32>,
    %c2_46 = arith.constant 2 : index
    %c0_47 = arith.constant 0 : index
    %c0_48 = arith.constant 0 : index
    %39 = vector.load %arg9[%c2_46, %c0_47, %c0_48] : memref<10x10x8xf32, #tpu.memory_space<vmem>>, vector<8x8x8xf32>
    %40 = vector.shape_cast %39 : vector<8x8x8xf32> to vector<64x8xf32>
    %c0_49 = arith.constant 0 : index
    %c48 = arith.constant 48 : index
    %41 = vector.load %arg11[%c0_49, %c48] : memref<64x72xf32, #tpu.memory_space<vmem>>, vector<64x8xf32>
    tpu.vector_store %arg11[%c0_49, %c48], %40 {strides = array<i32>} : memref<64x72xf32, #tpu.memory_space<vmem>>, vector<64x8xf32>,
    %c2_50 = arith.constant 2 : index
    %c1_51 = arith.constant 1 : index
    %c0_52 = arith.constant 0 : index
    %42 = vector.load %arg9[%c2_50, %c1_51, %c0_52] : memref<10x10x8xf32, #tpu.memory_space<vmem>>, vector<8x8x8xf32>
    %43 = vector.shape_cast %42 : vector<8x8x8xf32> to vector<64x8xf32>
    %c0_53 = arith.constant 0 : index
    %c56 = arith.constant 56 : index
    %44 = vector.load %arg11[%c0_53, %c56] : memref<64x72xf32, #tpu.memory_space<vmem>>, vector<64x8xf32>
    tpu.vector_store %arg11[%c0_53, %c56], %43 {strides = array<i32>} : memref<64x72xf32, #tpu.memory_space<vmem>>, vector<64x8xf32>,
    %c2_54 = arith.constant 2 : index
    %c2_55 = arith.constant 2 : index
    %c0_56 = arith.constant 0 : index
    %45 = vector.load %arg9[%c2_54, %c2_55, %c0_56] : memref<10x10x8xf32, #tpu.memory_space<vmem>>, vector<8x8x8xf32>
    %46 = vector.shape_cast %45 : vector<8x8x8xf32> to vector<64x8xf32>
    %c0_57 = arith.constant 0 : index
    %c64 = arith.constant 64 : index
    %47 = vector.load %arg11[%c0_57, %c64] : memref<64x72xf32, #tpu.memory_space<vmem>>, vector<64x8xf32>
    tpu.vector_store %arg11[%c0_57, %c64], %46 {strides = array<i32>} : memref<64x72xf32, #tpu.memory_space<vmem>>, vector<64x8xf32>,
    %c0_58 = arith.constant 0 : index
    %c0_59 = arith.constant 0 : index
    %48 = vector.load %arg11[%c0_58, %c0_59] : memref<64x72xf32, #tpu.memory_space<vmem>>, vector<64x72xf32>
    %c0_60 = arith.constant 0 : index
    %c0_61 = arith.constant 0 : index
    %49 = vector.load %arg4[%c0_60, %c0_61] : memref<72x8xf32, #tpu.memory_space<vmem>>, vector<72x8xf32>
    %cst_62 = arith.constant dense<0.000000e+00> : vector<64x8xf32>
    %50 = tpu.matmul %48, %49, %cst_62 {dimension_numbers = #tpu.dot_dimension_numbers<[1], [0], [0], [1], [0, 0, 1, 1], [], []>} : vector<64x72xf32>, vector<72x8xf32>, vector<64x8xf32> -> vector<64x8xf32>
    %51 = vector.shape_cast %1 : vector<8x8x8xf32> to vector<64x8xf32>
    %52 = vector.shape_cast %50 : vector<64x8xf32> to vector<8x8x8xf32>
    %c0_63 = arith.constant 0 : index
    %c0_64 = arith.constant 0 : index
    %53 = vector.load %arg5[%c0_63, %c0_64] : memref<1x8xf32, #tpu.memory_space<vmem>>, vector<1x8xf32>
    %54 = vector.shape_cast %53 : vector<1x8xf32> to vector<8xf32>
    %c0_65 = arith.constant 0 : index
    %c0_66 = arith.constant 0 : index
    %55 = vector.load %arg6[%c0_65, %c0_66] : memref<1x8xf32, #tpu.memory_space<vmem>>, vector<1x8xf32>
    %56 = vector.shape_cast %55 : vector<1x8xf32> to vector<8xf32>
    %57 = vector.shape_cast %54 : vector<8xf32> to vector<1x1x8xf32>
    %58 = vector.broadcast %57 : vector<1x1x8xf32> to vector<8x8x8xf32>
    %59 = arith.mulf %52, %58 : vector<8x8x8xf32>
    %60 = vector.shape_cast %56 : vector<8xf32> to vector<1x1x8xf32>
    %61 = vector.broadcast %60 : vector<1x1x8xf32> to vector<8x8x8xf32>
    %62 = arith.addf %59, %61 : vector<8x8x8xf32>
    %cst_67 = arith.constant 0.000000e+00 : f32
    %63 = vector.broadcast %cst_67 : f32 to vector<8x8x8xf32>
    %64 = arith.maximumf %62, %63 : vector<8x8x8xf32>
    %cst_68 = arith.constant 0.000000e+00 : f32
    %65 = vector.broadcast %cst_68 : f32 to vector<1x10x8xf32>
    %cst_69 = arith.constant 0.000000e+00 : f32
    %66 = vector.broadcast %cst_69 : f32 to vector<10x1x8xf32>
    %c0_70 = arith.constant 0 : index
    %c0_71 = arith.constant 0 : index
    %c0_72 = arith.constant 0 : index
    %67 = vector.load %arg10[%c0_70, %c0_71, %c0_72] : memref<10x10x8xf32, #tpu.memory_space<vmem>>, vector<1x10x8xf32>
    tpu.vector_store %arg10[%c0_70, %c0_71, %c0_72], %65 {strides = array<i32>} : memref<10x10x8xf32, #tpu.memory_space<vmem>>, vector<1x10x8xf32>,
    %c9_73 = arith.constant 9 : index
    %c0_74 = arith.constant 0 : index
    %c0_75 = arith.constant 0 : index
    %68 = vector.load %arg10[%c9_73, %c0_74, %c0_75] : memref<10x10x8xf32, #tpu.memory_space<vmem>>, vector<1x10x8xf32>
    tpu.vector_store %arg10[%c9_73, %c0_74, %c0_75], %65 {strides = array<i32>} : memref<10x10x8xf32, #tpu.memory_space<vmem>>, vector<1x10x8xf32>,
    %c0_76 = arith.constant 0 : index
    %c0_77 = arith.constant 0 : index
    %c0_78 = arith.constant 0 : index
    %69 = vector.load %arg10[%c0_76, %c0_77, %c0_78] : memref<10x10x8xf32, #tpu.memory_space<vmem>>, vector<10x1x8xf32>
    tpu.vector_store %arg10[%c0_76, %c0_77, %c0_78], %66 {strides = array<i32>} : memref<10x10x8xf32, #tpu.memory_space<vmem>>, vector<10x1x8xf32>,
    %c0_79 = arith.constant 0 : index
    %c9_80 = arith.constant 9 : index
    %c0_81 = arith.constant 0 : index
    %70 = vector.load %arg10[%c0_79, %c9_80, %c0_81] : memref<10x10x8xf32, #tpu.memory_space<vmem>>, vector<10x1x8xf32>
    tpu.vector_store %arg10[%c0_79, %c9_80, %c0_81], %66 {strides = array<i32>} : memref<10x10x8xf32, #tpu.memory_space<vmem>>, vector<10x1x8xf32>,
    %c1_82 = arith.constant 1 : index
    %c1_83 = arith.constant 1 : index
    %c0_84 = arith.constant 0 : index
    %71 = vector.load %arg10[%c1_82, %c1_83, %c0_84] : memref<10x10x8xf32, #tpu.memory_space<vmem>>, vector<8x8x8xf32>
    tpu.vector_store %arg10[%c1_82, %c1_83, %c0_84], %64 {strides = array<i32>} : memref<10x10x8xf32, #tpu.memory_space<vmem>>, vector<8x8x8xf32>,
    %c0_85 = arith.constant 0 : index
    %c0_86 = arith.constant 0 : index
    %c0_87 = arith.constant 0 : index
    %72 = vector.load %arg10[%c0_85, %c0_86, %c0_87] : memref<10x10x8xf32, #tpu.memory_space<vmem>>, vector<8x8x8xf32>
    %73 = vector.shape_cast %72 : vector<8x8x8xf32> to vector<64x8xf32>
    %c0_88 = arith.constant 0 : index
    %c0_89 = arith.constant 0 : index
    %74 = vector.load %arg12[%c0_88, %c0_89] : memref<64x72xf32, #tpu.memory_space<vmem>>, vector<64x8xf32>
    tpu.vector_store %arg12[%c0_88, %c0_89], %73 {strides = array<i32>} : memref<64x72xf32, #tpu.memory_space<vmem>>, vector<64x8xf32>,
    %c0_90 = arith.constant 0 : index
    %c1_91 = arith.constant 1 : index
    %c0_92 = arith.constant 0 : index
    %75 = vector.load %arg10[%c0_90, %c1_91, %c0_92] : memref<10x10x8xf32, #tpu.memory_space<vmem>>, vector<8x8x8xf32>
    %76 = vector.shape_cast %75 : vector<8x8x8xf32> to vector<64x8xf32>
    %c0_93 = arith.constant 0 : index
    %c8_94 = arith.constant 8 : index
    %77 = vector.load %arg12[%c0_93, %c8_94] : memref<64x72xf32, #tpu.memory_space<vmem>>, vector<64x8xf32>
    tpu.vector_store %arg12[%c0_93, %c8_94], %76 {strides = array<i32>} : memref<64x72xf32, #tpu.memory_space<vmem>>, vector<64x8xf32>,
    %c0_95 = arith.constant 0 : index
    %c2_96 = arith.constant 2 : index
    %c0_97 = arith.constant 0 : index
    %78 = vector.load %arg10[%c0_95, %c2_96, %c0_97] : memref<10x10x8xf32, #tpu.memory_space<vmem>>, vector<8x8x8xf32>
    %79 = vector.shape_cast %78 : vector<8x8x8xf32> to vector<64x8xf32>
    %c0_98 = arith.constant 0 : index
    %c16_99 = arith.constant 16 : index
    %80 = vector.load %arg12[%c0_98, %c16_99] : memref<64x72xf32, #tpu.memory_space<vmem>>, vector<64x8xf32>
    tpu.vector_store %arg12[%c0_98, %c16_99], %79 {strides = array<i32>} : memref<64x72xf32, #tpu.memory_space<vmem>>, vector<64x8xf32>,
    %c1_100 = arith.constant 1 : index
    %c0_101 = arith.constant 0 : index
    %c0_102 = arith.constant 0 : index
    %81 = vector.load %arg10[%c1_100, %c0_101, %c0_102] : memref<10x10x8xf32, #tpu.memory_space<vmem>>, vector<8x8x8xf32>
    %82 = vector.shape_cast %81 : vector<8x8x8xf32> to vector<64x8xf32>
    %c0_103 = arith.constant 0 : index
    %c24_104 = arith.constant 24 : index
    %83 = vector.load %arg12[%c0_103, %c24_104] : memref<64x72xf32, #tpu.memory_space<vmem>>, vector<64x8xf32>
    tpu.vector_store %arg12[%c0_103, %c24_104], %82 {strides = array<i32>} : memref<64x72xf32, #tpu.memory_space<vmem>>, vector<64x8xf32>,
    %c1_105 = arith.constant 1 : index
    %c1_106 = arith.constant 1 : index
    %c0_107 = arith.constant 0 : index
    %84 = vector.load %arg10[%c1_105, %c1_106, %c0_107] : memref<10x10x8xf32, #tpu.memory_space<vmem>>, vector<8x8x8xf32>
    %85 = vector.shape_cast %84 : vector<8x8x8xf32> to vector<64x8xf32>
    %c0_108 = arith.constant 0 : index
    %c32_109 = arith.constant 32 : index
    %86 = vector.load %arg12[%c0_108, %c32_109] : memref<64x72xf32, #tpu.memory_space<vmem>>, vector<64x8xf32>
    tpu.vector_store %arg12[%c0_108, %c32_109], %85 {strides = array<i32>} : memref<64x72xf32, #tpu.memory_space<vmem>>, vector<64x8xf32>,
    %c1_110 = arith.constant 1 : index
    %c2_111 = arith.constant 2 : index
    %c0_112 = arith.constant 0 : index
    %87 = vector.load %arg10[%c1_110, %c2_111, %c0_112] : memref<10x10x8xf32, #tpu.memory_space<vmem>>, vector<8x8x8xf32>
    %88 = vector.shape_cast %87 : vector<8x8x8xf32> to vector<64x8xf32>
    %c0_113 = arith.constant 0 : index
    %c40_114 = arith.constant 40 : index
    %89 = vector.load %arg12[%c0_113, %c40_114] : memref<64x72xf32, #tpu.memory_space<vmem>>, vector<64x8xf32>
    tpu.vector_store %arg12[%c0_113, %c40_114], %88 {strides = array<i32>} : memref<64x72xf32, #tpu.memory_space<vmem>>, vector<64x8xf32>,
    %c2_115 = arith.constant 2 : index
    %c0_116 = arith.constant 0 : index
    %c0_117 = arith.constant 0 : index
    %90 = vector.load %arg10[%c2_115, %c0_116, %c0_117] : memref<10x10x8xf32, #tpu.memory_space<vmem>>, vector<8x8x8xf32>
    %91 = vector.shape_cast %90 : vector<8x8x8xf32> to vector<64x8xf32>
    %c0_118 = arith.constant 0 : index
    %c48_119 = arith.constant 48 : index
    %92 = vector.load %arg12[%c0_118, %c48_119] : memref<64x72xf32, #tpu.memory_space<vmem>>, vector<64x8xf32>
    tpu.vector_store %arg12[%c0_118, %c48_119], %91 {strides = array<i32>} : memref<64x72xf32, #tpu.memory_space<vmem>>, vector<64x8xf32>,
    %c2_120 = arith.constant 2 : index
    %c1_121 = arith.constant 1 : index
    %c0_122 = arith.constant 0 : index
    %93 = vector.load %arg10[%c2_120, %c1_121, %c0_122] : memref<10x10x8xf32, #tpu.memory_space<vmem>>, vector<8x8x8xf32>
    %94 = vector.shape_cast %93 : vector<8x8x8xf32> to vector<64x8xf32>
    %c0_123 = arith.constant 0 : index
    %c56_124 = arith.constant 56 : index
    %95 = vector.load %arg12[%c0_123, %c56_124] : memref<64x72xf32, #tpu.memory_space<vmem>>, vector<64x8xf32>
    tpu.vector_store %arg12[%c0_123, %c56_124], %94 {strides = array<i32>} : memref<64x72xf32, #tpu.memory_space<vmem>>, vector<64x8xf32>,
    %c2_125 = arith.constant 2 : index
    %c2_126 = arith.constant 2 : index
    %c0_127 = arith.constant 0 : index
    %96 = vector.load %arg10[%c2_125, %c2_126, %c0_127] : memref<10x10x8xf32, #tpu.memory_space<vmem>>, vector<8x8x8xf32>
    %97 = vector.shape_cast %96 : vector<8x8x8xf32> to vector<64x8xf32>
    %c0_128 = arith.constant 0 : index
    %c64_129 = arith.constant 64 : index
    %98 = vector.load %arg12[%c0_128, %c64_129] : memref<64x72xf32, #tpu.memory_space<vmem>>, vector<64x8xf32>
    tpu.vector_store %arg12[%c0_128, %c64_129], %97 {strides = array<i32>} : memref<64x72xf32, #tpu.memory_space<vmem>>, vector<64x8xf32>,
    %c0_130 = arith.constant 0 : index
    %c0_131 = arith.constant 0 : index
    %99 = vector.load %arg12[%c0_130, %c0_131] : memref<64x72xf32, #tpu.memory_space<vmem>>, vector<64x72xf32>
    %c0_132 = arith.constant 0 : index
    %c0_133 = arith.constant 0 : index
    %100 = vector.load %arg7[%c0_132, %c0_133] : memref<72x8xf32, #tpu.memory_space<vmem>>, vector<72x8xf32>
    %cst_134 = arith.constant dense<0.000000e+00> : vector<64x8xf32>
    %101 = tpu.matmul %99, %100, %cst_134 {dimension_numbers = #tpu.dot_dimension_numbers<[1], [0], [0], [1], [0, 0, 1, 1], [], []>} : vector<64x72xf32>, vector<72x8xf32>, vector<64x8xf32> -> vector<64x8xf32>
    %102 = arith.addf %51, %101 : vector<64x8xf32>
    %103 = vector.shape_cast %102 : vector<64x8xf32> to vector<1x8x8x8xf32>
    %c0_135 = arith.constant 0 : index
    %c0_136 = arith.constant 0 : index
    %c0_137 = arith.constant 0 : index
    %c0_138 = arith.constant 0 : index
    %104 = vector.load %arg8[%c0_135, %c0_136, %c0_137, %c0_138] : memref<1x8x8x8xf32, #tpu.memory_space<vmem>>, vector<1x8x8x8xf32>
    tpu.vector_store %arg8[%c0_135, %c0_136, %c0_137, %c0_138], %103 {strides = array<i32>} : memref<1x8x8x8xf32, #tpu.memory_space<vmem>>, vector<1x8x8x8xf32>,
    return
  }
  func.func @transform_0(%arg0: i32) -> (i32, i32, i32, i32) {
    %c0_i32 = arith.constant 0 : i32
    %c0_i32_0 = arith.constant 0 : i32
    %c0_i32_1 = arith.constant 0 : i32
    %c0_i32_2 = arith.constant 0 : i32
    return %arg0, %c0_i32, %c0_i32_0, %c0_i32_1 : i32, i32, i32, i32
  }
  func.func @transform_1(%arg0: i32) -> (i32, i32) {
    %c0_i32 = arith.constant 0 : i32
    %c0_i32_0 = arith.constant 0 : i32
    %c0_i32_1 = arith.constant 0 : i32
    return %c0_i32, %c0_i32_0 : i32, i32
  }
  func.func @transform_2(%arg0: i32) -> (i32, i32) {
    %c0_i32 = arith.constant 0 : i32
    %c0_i32_0 = arith.constant 0 : i32
    %c0_i32_1 = arith.constant 0 : i32
    return %c0_i32, %c0_i32_0 : i32, i32
  }
  func.func @transform_3(%arg0: i32) -> (i32, i32) {
    %c0_i32 = arith.constant 0 : i32
    %c0_i32_0 = arith.constant 0 : i32
    %c0_i32_1 = arith.constant 0 : i32
    return %c0_i32, %c0_i32_0 : i32, i32
  }
  func.func @transform_4(%arg0: i32) -> (i32, i32) {
    %c0_i32 = arith.constant 0 : i32
    %c0_i32_0 = arith.constant 0 : i32
    %c0_i32_1 = arith.constant 0 : i32
    return %c0_i32, %c0_i32_0 : i32, i32
  }
  func.func @transform_5(%arg0: i32) -> (i32, i32) {
    %c0_i32 = arith.constant 0 : i32
    %c0_i32_0 = arith.constant 0 : i32
    %c0_i32_1 = arith.constant 0 : i32
    return %c0_i32, %c0_i32_0 : i32, i32
  }
  func.func @transform_6(%arg0: i32) -> (i32, i32) {
    %c0_i32 = arith.constant 0 : i32
    %c0_i32_0 = arith.constant 0 : i32
    %c0_i32_1 = arith.constant 0 : i32
    return %c0_i32, %c0_i32_0 : i32, i32
  }
  func.func @transform_7(%arg0: i32) -> (i32, i32, i32, i32) {
    %c0_i32 = arith.constant 0 : i32
    %c0_i32_0 = arith.constant 0 : i32
    %c0_i32_1 = arith.constant 0 : i32
    %c0_i32_2 = arith.constant 0 : i32
    return %arg0, %c0_i32, %c0_i32_0, %c0_i32_1 : i32, i32, i32, i32
  }
}

</mosaic_0001>

<llo_original>
// kernel: network_block_forward.3
$region0: #{network_block_forward.3}
  #allocation0 [shape = 'u32[]', space=smem, size = 0x4, offset = 0x4, fixed_abs, tag = 'smem constant byte address 0x4 - core index']
  #allocation1 [shape = 'u32[72,128]{1,0:T(1,128)}', space=vmem, size = 0x9000, scoped, tag = 'internal scratch']
  #allocation2 [shape = 'f32[10,10,8]{2,1,0:T(8,128)}', space=vmem, size = 0x14000, scoped, tag = 'scratch operand']
  #allocation3 [shape = 'f32[10,10,8]{2,1,0:T(8,128)}', space=vmem, size = 0x14000, scoped, tag = 'scratch operand']
  #allocation4 [shape = 'f32[64,72]{1,0:T(8,128)}', space=vmem, size = 0x8000, scoped, tag = 'scratch operand']
  #allocation5 [shape = 'f32[64,72]{1,0:T(8,128)}', space=vmem, size = 0x8000, scoped, tag = 'scratch operand']
  %s0 = inlined_call_operand.vmem [shape: f32[2,8,8,8], index: 0, kind: input, shape index: {}]
  %s1 = inlined_call_operand.vmem [shape: f32[1,8], index: 1, kind: input, shape index: {}]
  %s2 = inlined_call_operand.vmem [shape: f32[1,8], index: 2, kind: input, shape index: {}]
  %s3 = inlined_call_operand.vmem [shape: f32[72,8], index: 3, kind: input, shape index: {}]
  %s4 = inlined_call_operand.vmem [shape: f32[1,8], index: 4, kind: input, shape index: {}]
  %s5 = inlined_call_operand.vmem [shape: f32[1,8], index: 5, kind: input, shape index: {}]
  %s6 = inlined_call_operand.vmem [shape: f32[72,8], index: 6, kind: input, shape index: {}]
  %s7 = inlined_call_operand.vmem [shape: f32[2,8,8,8], index: 7, kind: output, shape index: {}]
  %s8 = sld [smem:[#allocation0]]
  $region61: #{network_block_forward.3} parent=0
    _
  %s10 = ssub.s32 1, %s8
  %s11 = scalar_select 0, %s10, %s8
  loop: start=0, step=1, limit=4
  $region2: #{network_block_forward.3} parent=0 // loop_pre_header
    _
  $region3: #{network_block_forward.3} parent=0 // loop_header
    %s13 = sphi 0, %s17
    %p14 = scmp.ge.s32.totalorder %s13, 4
    %s23 = sphi 0, %s25
    %s26 = sphi 0, %s23
    %s27 = sphi 0, %s26
    %s43 = sphi 0, %s27
    %s47 = sphi 0, %s47
    %s49 = sphi 0, %s47
    %s50 = sphi 0, %s49
    %s64 = sphi 0, %s50
    %s68 = sphi 0, %s68
    %s70 = sphi 0, %s68
    %s71 = sphi 0, %s70
    %s85 = sphi 0, %s71
    %s89 = sphi 0, %s89
    %s91 = sphi 0, %s89
    %s92 = sphi 0, %s91
    %s106 = sphi 0, %s92
    %s110 = sphi 0, %s110
    %s112 = sphi 0, %s110
    %s113 = sphi 0, %s112
    %s127 = sphi 0, %s113
    %s131 = sphi 0, %s131
    %s133 = sphi 0, %s131
    %s134 = sphi 0, %s133
    %s148 = sphi 0, %s134
    %s152 = sphi 0, %s152
    %s154 = sphi 0, %s152
    %s155 = sphi 0, %s154
    %s169 = sphi 0, %s155
    %s175 = sphi 0, %s177
    %s178 = sphi 0, %s175
    %s179 = sphi 0, %s178
    %s195 = sphi 0, %s179
  $region4: #{network_block_forward.3} parent=0 // loop_header_branch
    %16 = sbr.rel (%p14) target = $region8
  $region5: #{network_block_forward.3} parent=0 // loop_body
    %s18 = ssub.s32 %s13, 1
    %s19 = ssub.s32 %s13, 2
    %s20 = sadd.s32 %s13, 1
    %s21 = ssub.s32 %s13, %s20
    %p22 = scmp.eq.s32.totalorder %s21, 0
    %s24 = sadd.s32 %s23, 1
    %s25 = scalar_select %p22, %s23, %s24
    %p28 = pneg %p22
    %p29 = scmp.eq.s32.totalorder %s13, 1
    %p30 = por %p28, %p29
    %p31 = scmp.ne.s32.totalorder %s23, %s26
    %p32 = scmp.eq.s32.totalorder %s13, 0
    %p33 = por %p31, %p32
    %p34 = scmp.ne.s32.totalorder %s23, %s26
    %p35 = scmp.eq.s32.totalorder %s18, 1
    %p36 = por %p34, %p35
    %p37 = scmp.ne.s32.totalorder %s26, %s27
    %p38 = scmp.eq.s32.totalorder %s18, 0
    %p39 = por %p37, %p38
    %p40 = scmp.ne.s32.totalorder %s26, %s27
    %p41 = scmp.eq.s32.totalorder %s19, 1
    %p42 = por %p40, %p41
    %p44 = scmp.ne.s32.totalorder %s27, %s43
    %p45 = scmp.eq.s32.totalorder %s19, 0
    %p46 = por %p44, %p45
    %s48 = sadd.s32 %s47, 1
    %p51 = scmp.eq.s32.totalorder %s13, 1
    %p52 = scmp.ne.s32.totalorder %s47, %s49
    %p53 = scmp.eq.s32.totalorder %s13, 0
    %p54 = por %p52, %p53
    %p55 = scmp.ne.s32.totalorder %s47, %s49
    %p56 = scmp.eq.s32.totalorder %s18, 1
    %p57 = por %p55, %p56
    %p58 = scmp.ne.s32.totalorder %s49, %s50
    %p59 = scmp.eq.s32.totalorder %s18, 0
    %p60 = por %p58, %p59
    %p61 = scmp.ne.s32.totalorder %s49, %s50
    %p62 = scmp.eq.s32.totalorder %s19, 1
    %p63 = por %p61, %p62
    %p65 = scmp.ne.s32.totalorder %s50, %s64
    %p66 = scmp.eq.s32.totalorder %s19, 0
    %p67 = por %p65, %p66
    %s69 = sadd.s32 %s68, 1
    %p72 = scmp.eq.s32.totalorder %s13, 1
    %p73 = scmp.ne.s32.totalorder %s68, %s70
    %p74 = scmp.eq.s32.totalorder %s13, 0
    %p75 = por %p73, %p74
    %p76 = scmp.ne.s32.totalorder %s68, %s70
    %p77 = scmp.eq.s32.totalorder %s18, 1
    %p78 = por %p76, %p77
    %p79 = scmp.ne.s32.totalorder %s70, %s71
    %p80 = scmp.eq.s32.totalorder %s18, 0
    %p81 = por %p79, %p80
    %p82 = scmp.ne.s32.totalorder %s70, %s71
    %p83 = scmp.eq.s32.totalorder %s19, 1
    %p84 = por %p82, %p83
    %p86 = scmp.ne.s32.totalorder %s71, %s85
    %p87 = scmp.eq.s32.totalorder %s19, 0
    %p88 = por %p86, %p87
    %s90 = sadd.s32 %s89, 1
    %p93 = scmp.eq.s32.totalorder %s13, 1
    %p94 = scmp.ne.s32.totalorder %s89, %s91
    %p95 = scmp.eq.s32.totalorder %s13, 0
    %p96 = por %p94, %p95
    %p97 = scmp.ne.s32.totalorder %s89, %s91
    %p98 = scmp.eq.s32.totalorder %s18, 1
    %p99 = por %p97, %p98
    %p100 = scmp.ne.s32.totalorder %s91, %s92
    %p101 = scmp.eq.s32.totalorder %s18, 0
    %p102 = por %p100, %p101
    %p103 = scmp.ne.s32.totalorder %s91, %s92
    %p104 = scmp.eq.s32.totalorder %s19, 1
    %p105 = por %p103, %p104
    %p107 = scmp.ne.s32.totalorder %s92, %s106
    %p108 = scmp.eq.s32.totalorder %s19, 0
    %p109 = por %p107, %p108
    %s111 = sadd.s32 %s110, 1
    %p114 = scmp.eq.s32.totalorder %s13, 1
    %p115 = scmp.ne.s32.totalorder %s110, %s112
    %p116 = scmp.eq.s32.totalorder %s13, 0
    %p117 = por %p115, %p116
    %p118 = scmp.ne.s32.totalorder %s110, %s112
    %p119 = scmp.eq.s32.totalorder %s18, 1
    %p120 = por %p118, %p119
    %p121 = scmp.ne.s32.totalorder %s112, %s113
    %p122 = scmp.eq.s32.totalorder %s18, 0
    %p123 = por %p121, %p122
    %p124 = scmp.ne.s32.totalorder %s112, %s113
    %p125 = scmp.eq.s32.totalorder %s19, 1
    %p126 = por %p124, %p125
    %p128 = scmp.ne.s32.totalorder %s113, %s127
    %p129 = scmp.eq.s32.totalorder %s19, 0
    %p130 = por %p128, %p129
    %s132 = sadd.s32 %s131, 1
    %p135 = scmp.eq.s32.totalorder %s13, 1
    %p136 = scmp.ne.s32.totalorder %s131, %s133
    %p137 = scmp.eq.s32.totalorder %s13, 0
    %p138 = por %p136, %p137
    %p139 = scmp.ne.s32.totalorder %s131, %s133
    %p140 = scmp.eq.s32.totalorder %s18, 1
    %p141 = por %p139, %p140
    %p142 = scmp.ne.s32.totalorder %s133, %s134
    %p143 = scmp.eq.s32.totalorder %s18, 0
    %p144 = por %p142, %p143
    %p145 = scmp.ne.s32.totalorder %s133, %s134
    %p146 = scmp.eq.s32.totalorder %s19, 1
    %p147 = por %p145, %p146
    %p149 = scmp.ne.s32.totalorder %s134, %s148
    %p150 = scmp.eq.s32.totalorder %s19, 0
    %p151 = por %p149, %p150
    %s153 = sadd.s32 %s152, 1
    %p156 = scmp.eq.s32.totalorder %s13, 1
    %p157 = scmp.ne.s32.totalorder %s152, %s154
    %p158 = scmp.eq.s32.totalorder %s13, 0
    %p159 = por %p157, %p158
    %p160 = scmp.ne.s32.totalorder %s152, %s154
    %p161 = scmp.eq.s32.totalorder %s18, 1
    %p162 = por %p160, %p161
    %p163 = scmp.ne.s32.totalorder %s154, %s155
    %p164 = scmp.eq.s32.totalorder %s18, 0
    %p165 = por %p163, %p164
    %p166 = scmp.ne.s32.totalorder %s154, %s155
    %p167 = scmp.eq.s32.totalorder %s19, 1
    %p168 = por %p166, %p167
    %p170 = scmp.ne.s32.totalorder %s155, %s169
    %p171 = scmp.eq.s32.totalorder %s19, 0
    %p172 = por %p170, %p171
    %s173 = ssub.s32 %s13, %s20
    %p174 = scmp.eq.s32.totalorder %s173, 0
    %s176 = sadd.s32 %s175, 1
    %s177 = scalar_select %p174, %s175, %s176
    %p180 = pneg %p174
    %p181 = scmp.eq.s32.totalorder %s13, 1
    %p182 = por %p180, %p181
    %p183 = scmp.ne.s32.totalorder %s175, %s178
    %p184 = scmp.eq.s32.totalorder %s13, 0
    %p185 = por %p183, %p184
    %p186 = scmp.ne.s32.totalorder %s175, %s178
    %p187 = scmp.eq.s32.totalorder %s18, 1
    %p188 = por %p186, %p187
    %p189 = scmp.ne.s32.totalorder %s178, %s179
    %p190 = scmp.eq.s32.totalorder %s18, 0
    %p191 = por %p189, %p190
    %p192 = scmp.ne.s32.totalorder %s178, %s179
    %p193 = scmp.eq.s32.totalorder %s19, 1
    %p194 = por %p192, %p193
    %p196 = scmp.ne.s32.totalorder %s179, %s195
    %p197 = scmp.eq.s32.totalorder %s19, 0
    %p198 = por %p196, %p197
    %p199 = scmp.le.s32.totalorder 1, %s13
    %p200 = scmp.lt.s32.totalorder %s13, 3
    %p201 = pnand %p199, %p200
    %p202 = pneg %p201
    // Predicated region
    $region9: #{network_block_forward.3} parent=5 // pred_check
      _
    $region10: #{network_block_forward.3} parent=5 // pred_check_branch
      %204 = sbr.rel (%p201) target = $region12
    $region11: #{network_block_forward.3} parent=5 // pred_region
      %s205 = ssub.s32 %s13, 1
      // Predicated region
      $region13: #{network_block_forward.3} parent=11 // pred_check
        %p206 = pneg %p60
      $region14: #{network_block_forward.3} parent=11 // pred_check_branch
        %208 = sbr.rel (%p206) target = $region16
      $region15: #{network_block_forward.3} parent=11 // pred_region
        _
      $region16: #{network_block_forward.3} parent=11 // pred_fallthru
        _
      // Predicated region
      $region17: #{network_block_forward.3} parent=11 // pred_check
        %p209 = pneg %p81
      $region18: #{network_block_forward.3} parent=11 // pred_check_branch
        %211 = sbr.rel (%p209) target = $region20
      $region19: #{network_block_forward.3} parent=11 // pred_region
        _
      $region20: #{network_block_forward.3} parent=11 // pred_fallthru
        _
      // Predicated region
      $region21: #{network_block_forward.3} parent=11 // pred_check
        %p212 = pneg %p102
      $region22: #{network_block_forward.3} parent=11 // pred_check_branch
        %214 = sbr.rel (%p212) target = $region24
      $region23: #{network_block_forward.3} parent=11 // pred_region
        _
      $region24: #{network_block_forward.3} parent=11 // pred_fallthru
        _
      // Predicated region
      $region25: #{network_block_forward.3} parent=11 // pred_check
        %p215 = pneg %p123
      $region26: #{network_block_forward.3} parent=11 // pred_check_branch
        %217 = sbr.rel (%p215) target = $region28
      $region27: #{network_block_forward.3} parent=11 // pred_region
        _
      $region28: #{network_block_forward.3} parent=11 // pred_fallthru
        _
      // Predicated region
      $region29: #{network_block_forward.3} parent=11 // pred_check
        %p218 = pneg %p144
      $region30: #{network_block_forward.3} parent=11 // pred_check_branch
        %220 = sbr.rel (%p218) target = $region32
      $region31: #{network_block_forward.3} parent=11 // pred_region
        _
      $region32: #{network_block_forward.3} parent=11 // pred_fallthru
        _
      // Predicated region
      $region33: #{network_block_forward.3} parent=11 // pred_check
        %p221 = pneg %p165
      $region34: #{network_block_forward.3} parent=11 // pred_check_branch
        %223 = sbr.rel (%p221) target = $region36
      $region35: #{network_block_forward.3} parent=11 // pred_region
        _
      $region36: #{network_block_forward.3} parent=11 // pred_fallthru
        _
    $region12: #{network_block_forward.3} parent=5 // pred_fallthru
      _
    %p224 = scmp.lt.s32.totalorder %s13, 2
    // Predicated region
    $region37: #{network_block_forward.3} parent=5 // pred_check
      %p225 = pneg %p224
    $region38: #{network_block_forward.3} parent=5 // pred_check_branch
      %227 = sbr.rel (%p225) target = $region40
    $region39: #{network_block_forward.3} parent=5 // pred_region
      // Predicated region
      $region41: #{network_block_forward.3} parent=39 // pred_check
        %p228 = pneg %p33
      $region42: #{network_block_forward.3} parent=39 // pred_check_branch
        %230 = sbr.rel (%p228) target = $region44
      $region43: #{network_block_forward.3} parent=39 // pred_region
        %p231 = scmp.lt.s32.totalorder %s13, 1
        %s232 = scalar_select %p231, %s13, 1
        %s233 = smul.addr %s232, 8
        %s234 = smul.addr %s233, 8
        %s235 = scalar_lea.vmem %s0, %s234
      $region44: #{network_block_forward.3} parent=39 // pred_fallthru
        _
    $region40: #{network_block_forward.3} parent=5 // pred_fallthru
      _
    %p236 = scmp.le.s32.totalorder 1, %s13
    %p237 = scmp.lt.s32.totalorder %s13, 3
    %p238 = pnand %p236, %p237
    %p239 = pneg %p238
    // Predicated region
    $region45: #{network_block_forward.3} parent=5 // pred_check
      _
    $region46: #{network_block_forward.3} parent=5 // pred_check_branch
      %241 = sbr.rel (%p238) target = $region48
    $region47: #{network_block_forward.3} parent=5 // pred_region
      %s242 = ssub.s32 %s13, 1
      %p243 = scmp.lt.s32.totalorder %s18, 1
      %s244 = scalar_select %p243, %s18, 1
      %s245 = smul.addr %s244, 8
      %s246 = smul.addr %s245, 8
      %s247 = scalar_lea.vmem %s0, %s246
      %p248 = pneg %p39
      %p249 = pneg %p36
      %p250 = pneg %p60
      %p251 = pneg %p57
      %p252 = pneg %p81
      %p253 = pneg %p78
      %p254 = pneg %p102
      %p255 = pneg %p99
      %p256 = pneg %p123
      %p257 = pneg %p120
      %p258 = pneg %p144
      %p259 = pneg %p141
      %p260 = pneg %p165
      %p261 = pneg %p162
      %p262 = pneg %p191
      %p263 = pneg %p188
      %p264 = scmp.lt.s32.totalorder %s18, 1
      %s265 = scalar_select %p264, %s18, 1
      %s266 = smul.addr %s265, 8
      %s267 = smul.addr %s266, 8
      %s268 = scalar_lea.vmem %s7, %s267
      %p269 = scmp.lt.s32.totalorder %s18, 1
      %s270 = scalar_select %p269, %s18, 1
      %s271 = smul.addr %s270, 8
      %s272 = smul.addr %s271, 8
      %s273 = scalar_lea.vmem %s0, %s272
      %p274 = scmp.lt.s32.totalorder %s18, 1
      %s275 = scalar_select %p274, %s18, 1
      %s276 = smul.addr %s275, 8
      %s277 = smul.addr %s276, 8
      %s278 = scalar_lea.vmem %s7, %s277
      %v279 = vld [vmem:[%s273] sm:$0xff]
      %v280 = vld [vmem:[%s273 + $0x8] sm:$0xff]
      %v281 = vld [vmem:[%s273 + $0x10] sm:$0xff]
      %v282 = vld [vmem:[%s273 + $0x18] sm:$0xff]
      %v283 = vld [vmem:[%s273 + $0x20] sm:$0xff]
      %v284 = vld [vmem:[%s273 + $0x28] sm:$0xff]
      %v285 = vld [vmem:[%s273 + $0x30] sm:$0xff]
      %v286 = vld [vmem:[%s273 + $0x38] sm:$0xff]
      %v287 = vld [vmem:[%s1] sm:$0x1]
      %v288 = vld [vmem:[%s2] sm:$0x1]
      %v290 = vperm.slane %v287, 0
      %v292 = vmul.f32 %v279, %v290
      %v293 = vmul.f32 %v280, %v290
      %v294 = vmul.f32 %v281, %v290
      %v295 = vmul.f32 %v282, %v290
      %v296 = vmul.f32 %v283, %v290
      %v297 = vmul.f32 %v284, %v290
      %v298 = vmul.f32 %v285, %v290
      %v299 = vmul.f32 %v286, %v290
      %v301 = vperm.slane %v288, 0
      %v303 = vadd.f32 %v292, %v301
      %v304 = vadd.f32 %v293, %v301
      %v305 = vadd.f32 %v294, %v301
      %v306 = vadd.f32 %v295, %v301
      %v307 = vadd.f32 %v296, %v301
      %v308 = vadd.f32 %v297, %v301
      %v309 = vadd.f32 %v298, %v301
      %v310 = vadd.f32 %v299, %v301
      %v311 = vmax.f32 %v303, 0.0
      %v312 = vmax.f32 %v304, 0.0
      %v313 = vmax.f32 %v305, 0.0
      %v314 = vmax.f32 %v306, 0.0
      %v315 = vmax.f32 %v307, 0.0
      %v316 = vmax.f32 %v308, 0.0
      %v317 = vmax.f32 %v309, 0.0
      %v318 = vmax.f32 %v310, 0.0
      %vm319 = vcmask 64512
      %320 = vst.msk [vmem:[#allocation2] sm:$0xff] %vm319, 0.0
      %vm321 = vcmask 58368
      %322 = vst.msk [vmem:[#allocation2 + $0x8] sm:$0x3] %vm321, 0.0
      %s323 = scalar_lea.vmem [#allocation2], 144
      %324 = vst.msk [vmem:[%s323] sm:$0xff] %vm319, 0.0
      %325 = vst.msk [vmem:[%s323 + $0x8] sm:$0x3] %vm321, 0.0
      %vm326 = vcmask 57344
      %327 = vst.msk [vmem:[#allocation2] sm:$0x1] %vm326, 0.0
      %328 = vst.msk [vmem:[#allocation2 + $0x10] sm:$0x1] %vm326, 0.0
      %329 = vst.msk [vmem:[#allocation2 + $0x20] sm:$0x1] %vm326, 0.0
      %330 = vst.msk [vmem:[#allocation2 + $0x30] sm:$0x1] %vm326, 0.0
      %331 = vst.msk [vmem:[#allocation2 + $0x40] sm:$0x1] %vm326, 0.0
      %332 = vst.msk [vmem:[#allocation2 + $0x50] sm:$0x1] %vm326, 0.0
      %333 = vst.msk [vmem:[#allocation2 + $0x60] sm:$0x1] %vm326, 0.0
      %334 = vst.msk [vmem:[#allocation2 + $0x70] sm:$0x1] %vm326, 0.0
      %335 = vst.msk [vmem:[#allocation2 + $0x80] sm:$0x1] %vm326, 0.0
      %336 = vst.msk [vmem:[#allocation2 + $0x90] sm:$0x1] %vm326, 0.0
      %337 = vst.msk [vmem:[#allocation2 + $0x9] sm:$0x1] %vm326, 0.0
      %338 = vst.msk [vmem:[#allocation2 + $0x19] sm:$0x1] %vm326, 0.0
      %339 = vst.msk [vmem:[#allocation2 + $0x29] sm:$0x1] %vm326, 0.0
      %340 = vst.msk [vmem:[#allocation2 + $0x39] sm:$0x1] %vm326, 0.0
      %341 = vst.msk [vmem:[#allocation2 + $0x49] sm:$0x1] %vm326, 0.0
      %342 = vst.msk [vmem:[#allocation2 + $0x59] sm:$0x1] %vm326, 0.0
      %343 = vst.msk [vmem:[#allocation2 + $0x69] sm:$0x1] %vm326, 0.0
      %344 = vst.msk [vmem:[#allocation2 + $0x79] sm:$0x1] %vm326, 0.0
      %345 = vst.msk [vmem:[#allocation2 + $0x89] sm:$0x1] %vm326, 0.0
      %346 = vst.msk [vmem:[#allocation2 + $0x99] sm:$0x1] %vm326, 0.0
      %s347 = scalar_lea.vmem [#allocation2], 16
      %348 = vst.msk [vmem:[%s347 + $0x1] sm:$0xff] %vm319, %v311
      %349 = vst.msk [vmem:[%s347 + $0x11] sm:$0xff] %vm319, %v312
      %350 = vst.msk [vmem:[%s347 + $0x21] sm:$0xff] %vm319, %v313
      %351 = vst.msk [vmem:[%s347 + $0x31] sm:$0xff] %vm319, %v314
      %352 = vst.msk [vmem:[%s347 + $0x41] sm:$0xff] %vm319, %v315
      %353 = vst.msk [vmem:[%s347 + $0x51] sm:$0xff] %vm319, %v316
      %354 = vst.msk [vmem:[%s347 + $0x61] sm:$0xff] %vm319, %v317
      %355 = vst.msk [vmem:[%s347 + $0x71] sm:$0xff] %vm319, %v318
      %v356 = vld [vmem:[#allocation2] sm:$0xff]
      %v357 = vld [vmem:[#allocation2 + $0x10] sm:$0xff]
      %v358 = vld [vmem:[#allocation2 + $0x20] sm:$0xff]
      %v359 = vld [vmem:[#allocation2 + $0x30] sm:$0xff]
      %v360 = vld [vmem:[#allocation2 + $0x40] sm:$0xff]
      %v361 = vld [vmem:[#allocation2 + $0x50] sm:$0xff]
      %v362 = vld [vmem:[#allocation2 + $0x60] sm:$0xff]
      %v363 = vld [vmem:[#allocation2 + $0x70] sm:$0xff]
      %364 = vst.msk [vmem:[#allocation4] sm:$0xff] %vm319, %v356
      %365 = vst.msk [vmem:[#allocation4 + $0x8] sm:$0xff] %vm319, %v357
      %366 = vst.msk [vmem:[#allocation4 + $0x10] sm:$0xff] %vm319, %v358
      %367 = vst.msk [vmem:[#allocation4 + $0x18] sm:$0xff] %vm319, %v359
      %368 = vst.msk [vmem:[#allocation4 + $0x20] sm:$0xff] %vm319, %v360
      %369 = vst.msk [vmem:[#allocation4 + $0x28] sm:$0xff] %vm319, %v361
      %370 = vst.msk [vmem:[#allocation4 + $0x30] sm:$0xff] %vm319, %v362
      %371 = vst.msk [vmem:[#allocation4 + $0x38] sm:$0xff] %vm319, %v363
      %v372 = vld [vmem:[#allocation2 + $0x1] sm:$0xff]
      %v373 = vld [vmem:[#allocation2 + $0x11] sm:$0xff]
      %v374 = vld [vmem:[#allocation2 + $0x21] sm:$0xff]
      %v375 = vld [vmem:[#allocation2 + $0x31] sm:$0xff]
      %v376 = vld [vmem:[#allocation2 + $0x41] sm:$0xff]
      %v377 = vld [vmem:[#allocation2 + $0x51] sm:$0xff]
      %v378 = vld [vmem:[#allocation2 + $0x61] sm:$0xff]
      %v379 = vld [vmem:[#allocation2 + $0x71] sm:$0xff]
      %388 = vrot.lane.b32.xlu0 %v372, 8
      %v389 = vpop.permute.xlu0 %388
      %390 = vrot.lane.b32.xlu0 %v373, 8
      %v391 = vpop.permute.xlu0 %390
      %392 = vrot.lane.b32.xlu0 %v374, 8
      %v393 = vpop.permute.xlu0 %392
      %394 = vrot.lane.b32.xlu0 %v375, 8
      %v395 = vpop.permute.xlu0 %394
      %396 = vrot.lane.b32.xlu0 %v376, 8
      %v397 = vpop.permute.xlu0 %396
      %398 = vrot.lane.b32.xlu0 %v377, 8
      %v399 = vpop.permute.xlu0 %398
      %400 = vrot.lane.b32.xlu0 %v378, 8
      %v401 = vpop.permute.xlu0 %400
      %402 = vrot.lane.b32.xlu0 %v379, 8
      %v403 = vpop.permute.xlu0 %402
      %vm412 = vcmask 130112
      %413 = vst.msk [vmem:[#allocation4] sm:$0xff] %vm412, %v389
      %414 = vst.msk [vmem:[#allocation4 + $0x8] sm:$0xff] %vm412, %v391
      %415 = vst.msk [vmem:[#allocation4 + $0x10] sm:$0xff] %vm412, %v393
      %416 = vst.msk [vmem:[#allocation4 + $0x18] sm:$0xff] %vm412, %v395
      %417 = vst.msk [vmem:[#allocation4 + $0x20] sm:$0xff] %vm412, %v397
      %418 = vst.msk [vmem:[#allocation4 + $0x28] sm:$0xff] %vm412, %v399
      %419 = vst.msk [vmem:[#allocation4 + $0x30] sm:$0xff] %vm412, %v401
      %420 = vst.msk [vmem:[#allocation4 + $0x38] sm:$0xff] %vm412, %v403
      %v421 = vld [vmem:[#allocation2 + $0x2] sm:$0xff]
      %v422 = vld [vmem:[#allocation2 + $0x12] sm:$0xff]
      %v423 = vld [vmem:[#allocation2 + $0x22] sm:$0xff]
      %v424 = vld [vmem:[#allocation2 + $0x32] sm:$0xff]
      %v425 = vld [vmem:[#allocation2 + $0x42] sm:$0xff]
      %v426 = vld [vmem:[#allocation2 + $0x52] sm:$0xff]
      %v427 = vld [vmem:[#allocation2 + $0x62] sm:$0xff]
      %v428 = vld [vmem:[#allocation2 + $0x72] sm:$0xff]
      %437 = vrot.lane.b32.xlu0 %v421, 16
      %v438 = vpop.permute.xlu0 %437
      %439 = vrot.lane.b32.xlu0 %v422, 16
      %v440 = vpop.permute.xlu0 %439
      %441 = vrot.lane.b32.xlu0 %v423, 16
      %v442 = vpop.permute.xlu0 %441
      %443 = vrot.lane.b32.xlu0 %v424, 16
      %v444 = vpop.permute.xlu0 %443
      %445 = vrot.lane.b32.xlu0 %v425, 16
      %v446 = vpop.permute.xlu0 %445
      %447 = vrot.lane.b32.xlu0 %v426, 16
      %v448 = vpop.permute.xlu0 %447
      %449 = vrot.lane.b32.xlu0 %v427, 16
      %v450 = vpop.permute.xlu0 %449
      %451 = vrot.lane.b32.xlu0 %v428, 16
      %v452 = vpop.permute.xlu0 %451
      %vm461 = vcmask 195712
      %462 = vst.msk [vmem:[#allocation4] sm:$0xff] %vm461, %v438
      %463 = vst.msk [vmem:[#allocation4 + $0x8] sm:$0xff] %vm461, %v440
      %464 = vst.msk [vmem:[#allocation4 + $0x10] sm:$0xff] %vm461, %v442
      %465 = vst.msk [vmem:[#allocation4 + $0x18] sm:$0xff] %vm461, %v444
      %466 = vst.msk [vmem:[#allocation4 + $0x20] sm:$0xff] %vm461, %v446
      %467 = vst.msk [vmem:[#allocation4 + $0x28] sm:$0xff] %vm461, %v448
      %468 = vst.msk [vmem:[#allocation4 + $0x30] sm:$0xff] %vm461, %v450
      %469 = vst.msk [vmem:[#allocation4 + $0x38] sm:$0xff] %vm461, %v452
      %v470 = vld [vmem:[%s347] sm:$0xff]
      %v471 = vld [vmem:[%s347 + $0x10] sm:$0xff]
      %v472 = vld [vmem:[%s347 + $0x20] sm:$0xff]
      %v473 = vld [vmem:[%s347 + $0x30] sm:$0xff]
      %v474 = vld [vmem:[%s347 + $0x40] sm:$0xff]
      %v475 = vld [vmem:[%s347 + $0x50] sm:$0xff]
      %v476 = vld [vmem:[%s347 + $0x60] sm:$0xff]
      %v477 = vld [vmem:[%s347 + $0x70] sm:$0xff]
      %486 = vrot.lane.b32.xlu0 %v470, 24
      %v487 = vpop.permute.xlu0 %486
      %488 = vrot.lane.b32.xlu0 %v471, 24
      %v489 = vpop.permute.xlu0 %488
      %490 = vrot.lane.b32.xlu0 %v472, 24
      %v491 = vpop.permute.xlu0 %490
      %492 = vrot.lane.b32.xlu0 %v473, 24
      %v493 = vpop.permute.xlu0 %492
      %494 = vrot.lane.b32.xlu0 %v474, 24
      %v495 = vpop.permute.xlu0 %494
      %496 = vrot.lane.b32.xlu0 %v475, 24
      %v497 = vpop.permute.xlu0 %496
      %498 = vrot.lane.b32.xlu0 %v476, 24
      %v499 = vpop.permute.xlu0 %498
      %500 = vrot.lane.b32.xlu0 %v477, 24
      %v501 = vpop.permute.xlu0 %500
      %vm510 = vcmask 261312
      %511 = vst.msk [vmem:[#allocation4] sm:$0xff] %vm510, %v487
      %512 = vst.msk [vmem:[#allocation4 + $0x8] sm:$0xff] %vm510, %v489
      %513 = vst.msk [vmem:[#allocation4 + $0x10] sm:$0xff] %vm510, %v491
      %514 = vst.msk [vmem:[#allocation4 + $0x18] sm:$0xff] %vm510, %v493
      %515 = vst.msk [vmem:[#allocation4 + $0x20] sm:$0xff] %vm510, %v495
      %516 = vst.msk [vmem:[#allocation4 + $0x28] sm:$0xff] %vm510, %v497
      %517 = vst.msk [vmem:[#allocation4 + $0x30] sm:$0xff] %vm510, %v499
      %518 = vst.msk [vmem:[#allocation4 + $0x38] sm:$0xff] %vm510, %v501
      %v519 = vld [vmem:[%s347 + $0x1] sm:$0xff]
      %v520 = vld [vmem:[%s347 + $0x11] sm:$0xff]
      %v521 = vld [vmem:[%s347 + $0x21] sm:$0xff]
      %v522 = vld [vmem:[%s347 + $0x31] sm:$0xff]
      %v523 = vld [vmem:[%s347 + $0x41] sm:$0xff]
      %v524 = vld [vmem:[%s347 + $0x51] sm:$0xff]
      %v525 = vld [vmem:[%s347 + $0x61] sm:$0xff]
      %v526 = vld [vmem:[%s347 + $0x71] sm:$0xff]
      %535 = vrot.lane.b32.xlu0 %v519, 32
      %v536 = vpop.permute.xlu0 %535
      %537 = vrot.lane.b32.xlu0 %v520, 32
      %v538 = vpop.permute.xlu0 %537
      %539 = vrot.lane.b32.xlu0 %v521, 32
      %v540 = vpop.permute.xlu0 %539
      %541 = vrot.lane.b32.xlu0 %v522, 32
      %v542 = vpop.permute.xlu0 %541
      %543 = vrot.lane.b32.xlu0 %v523, 32
      %v544 = vpop.permute.xlu0 %543
      %545 = vrot.lane.b32.xlu0 %v524, 32
      %v546 = vpop.permute.xlu0 %545
      %547 = vrot.lane.b32.xlu0 %v525, 32
      %v548 = vpop.permute.xlu0 %547
      %549 = vrot.lane.b32.xlu0 %v526, 32
      %v550 = vpop.permute.xlu0 %549
      %vm559 = vcmask 326912
      %560 = vst.msk [vmem:[#allocation4] sm:$0xff] %vm559, %v536
      %561 = vst.msk [vmem:[#allocation4 + $0x8] sm:$0xff] %vm559, %v538
      %562 = vst.msk [vmem:[#allocation4 + $0x10] sm:$0xff] %vm559, %v540
      %563 = vst.msk [vmem:[#allocation4 + $0x18] sm:$0xff] %vm559, %v542
      %564 = vst.msk [vmem:[#allocation4 + $0x20] sm:$0xff] %vm559, %v544
      %565 = vst.msk [vmem:[#allocation4 + $0x28] sm:$0xff] %vm559, %v546
      %566 = vst.msk [vmem:[#allocation4 + $0x30] sm:$0xff] %vm559, %v548
      %567 = vst.msk [vmem:[#allocation4 + $0x38] sm:$0xff] %vm559, %v550
      %v568 = vld [vmem:[%s347 + $0x2] sm:$0xff]
      %v569 = vld [vmem:[%s347 + $0x12] sm:$0xff]
      %v570 = vld [vmem:[%s347 + $0x22] sm:$0xff]
      %v571 = vld [vmem:[%s347 + $0x32] sm:$0xff]
      %v572 = vld [vmem:[%s347 + $0x42] sm:$0xff]
      %v573 = vld [vmem:[%s347 + $0x52] sm:$0xff]
      %v574 = vld [vmem:[%s347 + $0x62] sm:$0xff]
      %v575 = vld [vmem:[%s347 + $0x72] sm:$0xff]
      %584 = vrot.lane.b32.xlu0 %v568, 40
      %v585 = vpop.permute.xlu0 %584
      %586 = vrot.lane.b32.xlu0 %v569, 40
      %v587 = vpop.permute.xlu0 %586
      %588 = vrot.lane.b32.xlu0 %v570, 40
      %v589 = vpop.permute.xlu0 %588
      %590 = vrot.lane.b32.xlu0 %v571, 40
      %v591 = vpop.permute.xlu0 %590
      %592 = vrot.lane.b32.xlu0 %v572, 40
      %v593 = vpop.permute.xlu0 %592
      %594 = vrot.lane.b32.xlu0 %v573, 40
      %v595 = vpop.permute.xlu0 %594
      %596 = vrot.lane.b32.xlu0 %v574, 40
      %v597 = vpop.permute.xlu0 %596
      %598 = vrot.lane.b32.xlu0 %v575, 40
      %v599 = vpop.permute.xlu0 %598
      %vm608 = vcmask 392512
      %609 = vst.msk [vmem:[#allocation4] sm:$0xff] %vm608, %v585
      %610 = vst.msk [vmem:[#allocation4 + $0x8] sm:$0xff] %vm608, %v587
      %611 = vst.msk [vmem:[#allocation4 + $0x10] sm:$0xff] %vm608, %v589
      %612 = vst.msk [vmem:[#allocation4 + $0x18] sm:$0xff] %vm608, %v591
      %613 = vst.msk [vmem:[#allocation4 + $0x20] sm:$0xff] %vm608, %v593
      %614 = vst.msk [vmem:[#allocation4 + $0x28] sm:$0xff] %vm608, %v595
      %615 = vst.msk [vmem:[#allocation4 + $0x30] sm:$0xff] %vm608, %v597
      %616 = vst.msk [vmem:[#allocation4 + $0x38] sm:$0xff] %vm608, %v599
      %s617 = scalar_lea.vmem [#allocation2], 32
      %v618 = vld [vmem:[%s617] sm:$0xff]
      %v619 = vld [vmem:[%s617 + $0x10] sm:$0xff]
      %v620 = vld [vmem:[%s617 + $0x20] sm:$0xff]
      %v621 = vld [vmem:[%s617 + $0x30] sm:$0xff]
      %v622 = vld [vmem:[%s617 + $0x40] sm:$0xff]
      %v623 = vld [vmem:[%s617 + $0x50] sm:$0xff]
      %v624 = vld [vmem:[%s617 + $0x60] sm:$0xff]
      %v625 = vld [vmem:[%s617 + $0x70] sm:$0xff]
      %634 = vrot.lane.b32.xlu0 %v618, 48
      %v635 = vpop.permute.xlu0 %634
      %636 = vrot.lane.b32.xlu0 %v619, 48
      %v637 = vpop.permute.xlu0 %636
      %638 = vrot.lane.b32.xlu0 %v620, 48
      %v639 = vpop.permute.xlu0 %638
      %640 = vrot.lane.b32.xlu0 %v621, 48
      %v641 = vpop.permute.xlu0 %640
      %642 = vrot.lane.b32.xlu0 %v622, 48
      %v643 = vpop.permute.xlu0 %642
      %644 = vrot.lane.b32.xlu0 %v623, 48
      %v645 = vpop.permute.xlu0 %644
      %646 = vrot.lane.b32.xlu0 %v624, 48
      %v647 = vpop.permute.xlu0 %646
      %648 = vrot.lane.b32.xlu0 %v625, 48
      %v649 = vpop.permute.xlu0 %648
      %vm658 = vcmask 458112
      %659 = vst.msk [vmem:[#allocation4] sm:$0xff] %vm658, %v635
      %660 = vst.msk [vmem:[#allocation4 + $0x8] sm:$0xff] %vm658, %v637
      %661 = vst.msk [vmem:[#allocation4 + $0x10] sm:$0xff] %vm658, %v639
      %662 = vst.msk [vmem:[#allocation4 + $0x18] sm:$0xff] %vm658, %v641
      %663 = vst.msk [vmem:[#allocation4 + $0x20] sm:$0xff] %vm658, %v643
      %664 = vst.msk [vmem:[#allocation4 + $0x28] sm:$0xff] %vm658, %v645
      %665 = vst.msk [vmem:[#allocation4 + $0x30] sm:$0xff] %vm658, %v647
      %666 = vst.msk [vmem:[#allocation4 + $0x38] sm:$0xff] %vm658, %v649
      %v667 = vld [vmem:[%s617 + $0x1] sm:$0xff]
      %v668 = vld [vmem:[%s617 + $0x11] sm:$0xff]
      %v669 = vld [vmem:[%s617 + $0x21] sm:$0xff]
      %v670 = vld [vmem:[%s617 + $0x31] sm:$0xff]
      %v671 = vld [vmem:[%s617 + $0x41] sm:$0xff]
      %v672 = vld [vmem:[%s617 + $0x51] sm:$0xff]
      %v673 = vld [vmem:[%s617 + $0x61] sm:$0xff]
      %v674 = vld [vmem:[%s617 + $0x71] sm:$0xff]
      %683 = vrot.lane.b32.xlu0 %v667, 56
      %v684 = vpop.permute.xlu0 %683
      %685 = vrot.lane.b32.xlu0 %v668, 56
      %v686 = vpop.permute.xlu0 %685
      %687 = vrot.lane.b32.xlu0 %v669, 56
      %v688 = vpop.permute.xlu0 %687
      %689 = vrot.lane.b32.xlu0 %v670, 56
      %v690 = vpop.permute.xlu0 %689
      %691 = vrot.lane.b32.xlu0 %v671, 56
      %v692 = vpop.permute.xlu0 %691
      %693 = vrot.lane.b32.xlu0 %v672, 56
      %v694 = vpop.permute.xlu0 %693
      %695 = vrot.lane.b32.xlu0 %v673, 56
      %v696 = vpop.permute.xlu0 %695
      %697 = vrot.lane.b32.xlu0 %v674, 56
      %v698 = vpop.permute.xlu0 %697
      %vm707 = vcmask 523712
      %708 = vst.msk [vmem:[#allocation4] sm:$0xff] %vm707, %v684
      %709 = vst.msk [vmem:[#allocation4 + $0x8] sm:$0xff] %vm707, %v686
      %710 = vst.msk [vmem:[#allocation4 + $0x10] sm:$0xff] %vm707, %v688
      %711 = vst.msk [vmem:[#allocation4 + $0x18] sm:$0xff] %vm707, %v690
      %712 = vst.msk [vmem:[#allocation4 + $0x20] sm:$0xff] %vm707, %v692
      %713 = vst.msk [vmem:[#allocation4 + $0x28] sm:$0xff] %vm707, %v694
      %714 = vst.msk [vmem:[#allocation4 + $0x30] sm:$0xff] %vm707, %v696
      %715 = vst.msk [vmem:[#allocation4 + $0x38] sm:$0xff] %vm707, %v698
      %v716 = vld [vmem:[%s617 + $0x2] sm:$0xff]
      %v717 = vld [vmem:[%s617 + $0x12] sm:$0xff]
      %v718 = vld [vmem:[%s617 + $0x22] sm:$0xff]
      %v719 = vld [vmem:[%s617 + $0x32] sm:$0xff]
      %v720 = vld [vmem:[%s617 + $0x42] sm:$0xff]
      %v721 = vld [vmem:[%s617 + $0x52] sm:$0xff]
      %v722 = vld [vmem:[%s617 + $0x62] sm:$0xff]
      %v723 = vld [vmem:[%s617 + $0x72] sm:$0xff]
      %732 = vrot.lane.b32.xlu0 %v716, 64
      %v733 = vpop.permute.xlu0 %732
      %734 = vrot.lane.b32.xlu0 %v717, 64
      %v735 = vpop.permute.xlu0 %734
      %736 = vrot.lane.b32.xlu0 %v718, 64
      %v737 = vpop.permute.xlu0 %736
      %738 = vrot.lane.b32.xlu0 %v719, 64
      %v739 = vpop.permute.xlu0 %738
      %740 = vrot.lane.b32.xlu0 %v720, 64
      %v741 = vpop.permute.xlu0 %740
      %742 = vrot.lane.b32.xlu0 %v721, 64
      %v743 = vpop.permute.xlu0 %742
      %744 = vrot.lane.b32.xlu0 %v722, 64
      %v745 = vpop.permute.xlu0 %744
      %746 = vrot.lane.b32.xlu0 %v723, 64
      %v747 = vpop.permute.xlu0 %746
      %vm756 = vcmask 589312
      %757 = vst.msk [vmem:[#allocation4] sm:$0xff] %vm756, %v733
      %758 = vst.msk [vmem:[#allocation4 + $0x8] sm:$0xff] %vm756, %v735
      %759 = vst.msk [vmem:[#allocation4 + $0x10] sm:$0xff] %vm756, %v737
      %760 = vst.msk [vmem:[#allocation4 + $0x18] sm:$0xff] %vm756, %v739
      %761 = vst.msk [vmem:[#allocation4 + $0x20] sm:$0xff] %vm756, %v741
      %762 = vst.msk [vmem:[#allocation4 + $0x28] sm:$0xff] %vm756, %v743
      %763 = vst.msk [vmem:[#allocation4 + $0x30] sm:$0xff] %vm756, %v745
      %764 = vst.msk [vmem:[#allocation4 + $0x38] sm:$0xff] %vm756, %v747
      %v765 = vld [vmem:[#allocation4] sm:$0xff]
      %v766 = vld [vmem:[#allocation4 + $0x8] sm:$0xff]
      %v767 = vld [vmem:[#allocation4 + $0x10] sm:$0xff]
      %v768 = vld [vmem:[#allocation4 + $0x18] sm:$0xff]
      %v769 = vld [vmem:[#allocation4 + $0x20] sm:$0xff]
      %v770 = vld [vmem:[#allocation4 + $0x28] sm:$0xff]
      %v771 = vld [vmem:[#allocation4 + $0x30] sm:$0xff]
      %v772 = vld [vmem:[#allocation4 + $0x38] sm:$0xff]
      %v773 = vld [vmem:[%s3] sm:$0xff]
      %v774 = vld [vmem:[%s3 + $0x8] sm:$0xff]
      %v775 = vld [vmem:[%s3 + $0x10] sm:$0xff]
      %v776 = vld [vmem:[%s3 + $0x18] sm:$0xff]
      %v777 = vld [vmem:[%s3 + $0x20] sm:$0xff]
      %v778 = vld [vmem:[%s3 + $0x28] sm:$0xff]
      %v779 = vld [vmem:[%s3 + $0x30] sm:$0xff]
      %v780 = vld [vmem:[%s3 + $0x38] sm:$0xff]
      %v781 = vld [vmem:[%s3 + $0x40] sm:$0xff]
      %vm782 = vcmask 588800
      %v784 = vsel %vm782, %v765, 0
      %v787 = vsel %vm782, %v766, 0
      %v790 = vsel %vm782, %v767, 0
      %v793 = vsel %vm782, %v768, 0
      %v796 = vsel %vm782, %v769, 0
      %v799 = vsel %vm782, %v770, 0
      %v802 = vsel %vm782, %v771, 0
      %v805 = vsel %vm782, %v772, 0
      %807 = vmatpush.msra.mxu0 0.0
      %808 = vmatpush.msra.mxu0 0.0
      %809 = vmatpush.msra.mxu0 0.0
      %810 = vmatpush.msra.mxu0 0.0
      %811 = vmatpush.msra.mxu0 0.0
      %812 = vmatpush.msra.mxu0 0.0
      %813 = vmatpush.msra.mxu0 0.0
      %814 = vmatpush.msra.mxu0 %v781
      %815 = vmatpush.msra.mxu0 %v780
      %816 = vmatpush.msra.mxu0 %v779
      %817 = vmatpush.msra.mxu0 %v778
      %818 = vmatpush.msra.mxu0 %v777
      %819 = vmatpush.msra.mxu0 %v776
      %820 = vmatpush.msra.mxu0 %v775
      %821 = vmatpush.msra.mxu0 %v774
      %822 = vmatpush.msra.mxu0 %v773
      %823 = vmatmul.f32.gmra.mxu0 %v784
      %v824 = vpop.f32.mrf.mxu0
      %v825 = vadd.f32 0.0, %v824
      %826 = vmatmul.f32.gmra.mxu0 %v787
      %v827 = vpop.f32.mrf.mxu0
      %v828 = vadd.f32 0.0, %v827
      %829 = vmatmul.f32.gmra.mxu0 %v790
      %v830 = vpop.f32.mrf.mxu0
      %v831 = vadd.f32 0.0, %v830
      %832 = vmatmul.f32.gmra.mxu0 %v793
      %v833 = vpop.f32.mrf.mxu0
      %v834 = vadd.f32 0.0, %v833
      %835 = vmatmul.f32.gmra.mxu0 %v796
      %v836 = vpop.f32.mrf.mxu0
      %v837 = vadd.f32 0.0, %v836
      %838 = vmatmul.f32.gmra.mxu0 %v799
      %v839 = vpop.f32.mrf.mxu0
      %v840 = vadd.f32 0.0, %v839
      %841 = vmatmul.f32.gmra.mxu0 %v802
      %v842 = vpop.f32.mrf.mxu0
      %v843 = vadd.f32 0.0, %v842
      %844 = vmatmul.f32.gmra.mxu0 %v805
      %v845 = vpop.f32.mrf.mxu0
      %v846 = vadd.f32 0.0, %v845
      %847 = vdwg.mxu0
      %v848 = vld [vmem:[%s4] sm:$0x1]
      %v849 = vld [vmem:[%s5] sm:$0x1]
      %v851 = vperm.slane %v848, 0
      %v853 = vmul.f32 %v825, %v851
      %v854 = vmul.f32 %v828, %v851
      %v855 = vmul.f32 %v831, %v851
      %v856 = vmul.f32 %v834, %v851
      %v857 = vmul.f32 %v837, %v851
      %v858 = vmul.f32 %v840, %v851
      %v859 = vmul.f32 %v843, %v851
      %v860 = vmul.f32 %v846, %v851
      %v862 = vperm.slane %v849, 0
      %v864 = vadd.f32 %v853, %v862
      %v865 = vadd.f32 %v854, %v862
      %v866 = vadd.f32 %v855, %v862
      %v867 = vadd.f32 %v856, %v862
      %v868 = vadd.f32 %v857, %v862
      %v869 = vadd.f32 %v858, %v862
      %v870 = vadd.f32 %v859, %v862
      %v871 = vadd.f32 %v860, %v862
      %v872 = vmax.f32 %v864, 0.0
      %v873 = vmax.f32 %v865, 0.0
      %v874 = vmax.f32 %v866, 0.0
      %v875 = vmax.f32 %v867, 0.0
      %v876 = vmax.f32 %v868, 0.0
      %v877 = vmax.f32 %v869, 0.0
      %v878 = vmax.f32 %v870, 0.0
      %v879 = vmax.f32 %v871, 0.0
      %880 = vst.msk [vmem:[#allocation3] sm:$0xff] %vm319, 0.0
      %881 = vst.msk [vmem:[#allocation3 + $0x8] sm:$0x3] %vm321, 0.0
      %s882 = scalar_lea.vmem [#allocation3], 144
      %883 = vst.msk [vmem:[%s882] sm:$0xff] %vm319, 0.0
      %884 = vst.msk [vmem:[%s882 + $0x8] sm:$0x3] %vm321, 0.0
      %885 = vst.msk [vmem:[#allocation3] sm:$0x1] %vm326, 0.0
      %886 = vst.msk [vmem:[#allocation3 + $0x10] sm:$0x1] %vm326, 0.0
      %887 = vst.msk [vmem:[#allocation3 + $0x20] sm:$0x1] %vm326, 0.0
      %888 = vst.msk [vmem:[#allocation3 + $0x30] sm:$0x1] %vm326, 0.0
      %889 = vst.msk [vmem:[#allocation3 + $0x40] sm:$0x1] %vm326, 0.0
      %890 = vst.msk [vmem:[#allocation3 + $0x50] sm:$0x1] %vm326, 0.0
      %891 = vst.msk [vmem:[#allocation3 + $0x60] sm:$0x1] %vm326, 0.0
      %892 = vst.msk [vmem:[#allocation3 + $0x70] sm:$0x1] %vm326, 0.0
      %893 = vst.msk [vmem:[#allocation3 + $0x80] sm:$0x1] %vm326, 0.0
      %894 = vst.msk [vmem:[#allocation3 + $0x90] sm:$0x1] %vm326, 0.0
      %895 = vst.msk [vmem:[#allocation3 + $0x9] sm:$0x1] %vm326, 0.0
      %896 = vst.msk [vmem:[#allocation3 + $0x19] sm:$0x1] %vm326, 0.0
      %897 = vst.msk [vmem:[#allocation3 + $0x29] sm:$0x1] %vm326, 0.0
      %898 = vst.msk [vmem:[#allocation3 + $0x39] sm:$0x1] %vm326, 0.0
      %899 = vst.msk [vmem:[#allocation3 + $0x49] sm:$0x1] %vm326, 0.0
      %900 = vst.msk [vmem:[#allocation3 + $0x59] sm:$0x1] %vm326, 0.0
      %901 = vst.msk [vmem:[#allocation3 + $0x69] sm:$0x1] %vm326, 0.0
      %902 = vst.msk [vmem:[#allocation3 + $0x79] sm:$0x1] %vm326, 0.0
      %903 = vst.msk [vmem:[#allocation3 + $0x89] sm:$0x1] %vm326, 0.0
      %904 = vst.msk [vmem:[#allocation3 + $0x99] sm:$0x1] %vm326, 0.0
      %s905 = scalar_lea.vmem [#allocation3], 16
      %906 = vst.msk [vmem:[%s905 + $0x1] sm:$0xff] %vm319, %v872
      %907 = vst.msk [vmem:[%s905 + $0x11] sm:$0xff] %vm319, %v873
      %908 = vst.msk [vmem:[%s905 + $0x21] sm:$0xff] %vm319, %v874
      %909 = vst.msk [vmem:[%s905 + $0x31] sm:$0xff] %vm319, %v875
      %910 = vst.msk [vmem:[%s905 + $0x41] sm:$0xff] %vm319, %v876
      %911 = vst.msk [vmem:[%s905 + $0x51] sm:$0xff] %vm319, %v877
      %912 = vst.msk [vmem:[%s905 + $0x61] sm:$0xff] %vm319, %v878
      %913 = vst.msk [vmem:[%s905 + $0x71] sm:$0xff] %vm319, %v879
      %v914 = vld [vmem:[#allocation3] sm:$0xff]
      %v915 = vld [vmem:[#allocation3 + $0x10] sm:$0xff]
      %v916 = vld [vmem:[#allocation3 + $0x20] sm:$0xff]
      %v917 = vld [vmem:[#allocation3 + $0x30] sm:$0xff]
      %v918 = vld [vmem:[#allocation3 + $0x40] sm:$0xff]
      %v919 = vld [vmem:[#allocation3 + $0x50] sm:$0xff]
      %v920 = vld [vmem:[#allocation3 + $0x60] sm:$0xff]
      %v921 = vld [vmem:[#allocation3 + $0x70] sm:$0xff]
      %922 = vst.msk [vmem:[#allocation5] sm:$0xff] %vm319, %v914
      %923 = vst.msk [vmem:[#allocation5 + $0x8] sm:$0xff] %vm319, %v915
      %924 = vst.msk [vmem:[#allocation5 + $0x10] sm:$0xff] %vm319, %v916
      %925 = vst.msk [vmem:[#allocation5 + $0x18] sm:$0xff] %vm319, %v917
      %926 = vst.msk [vmem:[#allocation5 + $0x20] sm:$0xff] %vm319, %v918
      %927 = vst.msk [vmem:[#allocation5 + $0x28] sm:$0xff] %vm319, %v919
      %928 = vst.msk [vmem:[#allocation5 + $0x30] sm:$0xff] %vm319, %v920
      %929 = vst.msk [vmem:[#allocation5 + $0x38] sm:$0xff] %vm319, %v921
      %v930 = vld [vmem:[#allocation3 + $0x1] sm:$0xff]
      %v931 = vld [vmem:[#allocation3 + $0x11] sm:$0xff]
      %v932 = vld [vmem:[#allocation3 + $0x21] sm:$0xff]
      %v933 = vld [vmem:[#allocation3 + $0x31] sm:$0xff]
      %v934 = vld [vmem:[#allocation3 + $0x41] sm:$0xff]
      %v935 = vld [vmem:[#allocation3 + $0x51] sm:$0xff]
      %v936 = vld [vmem:[#allocation3 + $0x61] sm:$0xff]
      %v937 = vld [vmem:[#allocation3 + $0x71] sm:$0xff]
      %946 = vrot.lane.b32.xlu0 %v930, 8
      %v947 = vpop.permute.xlu0 %946
      %948 = vrot.lane.b32.xlu0 %v931, 8
      %v949 = vpop.permute.xlu0 %948
      %950 = vrot.lane.b32.xlu0 %v932, 8
      %v951 = vpop.permute.xlu0 %950
      %952 = vrot.lane.b32.xlu0 %v933, 8
      %v953 = vpop.permute.xlu0 %952
      %954 = vrot.lane.b32.xlu0 %v934, 8
      %v955 = vpop.permute.xlu0 %954
      %956 = vrot.lane.b32.xlu0 %v935, 8
      %v957 = vpop.permute.xlu0 %956
      %958 = vrot.lane.b32.xlu0 %v936, 8
      %v959 = vpop.permute.xlu0 %958
      %960 = vrot.lane.b32.xlu0 %v937, 8
      %v961 = vpop.permute.xlu0 %960
      %970 = vst.msk [vmem:[#allocation5] sm:$0xff] %vm412, %v947
      %971 = vst.msk [vmem:[#allocation5 + $0x8] sm:$0xff] %vm412, %v949
      %972 = vst.msk [vmem:[#allocation5 + $0x10] sm:$0xff] %vm412, %v951
      %973 = vst.msk [vmem:[#allocation5 + $0x18] sm:$0xff] %vm412, %v953
      %974 = vst.msk [vmem:[#allocation5 + $0x20] sm:$0xff] %vm412, %v955
      %975 = vst.msk [vmem:[#allocation5 + $0x28] sm:$0xff] %vm412, %v957
      %976 = vst.msk [vmem:[#allocation5 + $0x30] sm:$0xff] %vm412, %v959
      %977 = vst.msk [vmem:[#allocation5 + $0x38] sm:$0xff] %vm412, %v961
      %v978 = vld [vmem:[#allocation3 + $0x2] sm:$0xff]
      %v979 = vld [vmem:[#allocation3 + $0x12] sm:$0xff]
      %v980 = vld [vmem:[#allocation3 + $0x22] sm:$0xff]
      %v981 = vld [vmem:[#allocation3 + $0x32] sm:$0xff]
      %v982 = vld [vmem:[#allocation3 + $0x42] sm:$0xff]
      %v983 = vld [vmem:[#allocation3 + $0x52] sm:$0xff]
      %v984 = vld [vmem:[#allocation3 + $0x62] sm:$0xff]
      %v985 = vld [vmem:[#allocation3 + $0x72] sm:$0xff]
      %994 = vrot.lane.b32.xlu0 %v978, 16
      %v995 = vpop.permute.xlu0 %994
      %996 = vrot.lane.b32.xlu0 %v979, 16
      %v997 = vpop.permute.xlu0 %996
      %998 = vrot.lane.b32.xlu0 %v980, 16
      %v999 = vpop.permute.xlu0 %998
      %1000 = vrot.lane.b32.xlu0 %v981, 16
      %v1001 = vpop.permute.xlu0 %1000
      %1002 = vrot.lane.b32.xlu0 %v982, 16
      %v1003 = vpop.permute.xlu0 %1002
      %1004 = vrot.lane.b32.xlu0 %v983, 16
      %v1005 = vpop.permute.xlu0 %1004
      %1006 = vrot.lane.b32.xlu0 %v984, 16
      %v1007 = vpop.permute.xlu0 %1006
      %1008 = vrot.lane.b32.xlu0 %v985, 16
      %v1009 = vpop.permute.xlu0 %1008
      %1018 = vst.msk [vmem:[#allocation5] sm:$0xff] %vm461, %v995
      %1019 = vst.msk [vmem:[#allocation5 + $0x8] sm:$0xff] %vm461, %v997
      %1020 = vst.msk [vmem:[#allocation5 + $0x10] sm:$0xff] %vm461, %v999
      %1021 = vst.msk [vmem:[#allocation5 + $0x18] sm:$0xff] %vm461, %v1001
      %1022 = vst.msk [vmem:[#allocation5 + $0x20] sm:$0xff] %vm461, %v1003
      %1023 = vst.msk [vmem:[#allocation5 + $0x28] sm:$0xff] %vm461, %v1005
      %1024 = vst.msk [vmem:[#allocation5 + $0x30] sm:$0xff] %vm461, %v1007
      %1025 = vst.msk [vmem:[#allocation5 + $0x38] sm:$0xff] %vm461, %v1009
      %v1026 = vld [vmem:[%s905] sm:$0xff]
      %v1027 = vld [vmem:[%s905 + $0x10] sm:$0xff]
      %v1028 = vld [vmem:[%s905 + $0x20] sm:$0xff]
      %v1029 = vld [vmem:[%s905 + $0x30] sm:$0xff]
      %v1030 = vld [vmem:[%s905 + $0x40] sm:$0xff]
      %v1031 = vld [vmem:[%s905 + $0x50] sm:$0xff]
      %v1032 = vld [vmem:[%s905 + $0x60] sm:$0xff]
      %v1033 = vld [vmem:[%s905 + $0x70] sm:$0xff]
      %1042 = vrot.lane.b32.xlu0 %v1026, 24
      %v1043 = vpop.permute.xlu0 %1042
      %1044 = vrot.lane.b32.xlu0 %v1027, 24
      %v1045 = vpop.permute.xlu0 %1044
      %1046 = vrot.lane.b32.xlu0 %v1028, 24
      %v1047 = vpop.permute.xlu0 %1046
      %1048 = vrot.lane.b32.xlu0 %v1029, 24
      %v1049 = vpop.permute.xlu0 %1048
      %1050 = vrot.lane.b32.xlu0 %v1030, 24
      %v1051 = vpop.permute.xlu0 %1050
      %1052 = vrot.lane.b32.xlu0 %v1031, 24
      %v1053 = vpop.permute.xlu0 %1052
      %1054 = vrot.lane.b32.xlu0 %v1032, 24
      %v1055 = vpop.permute.xlu0 %1054
      %1056 = vrot.lane.b32.xlu0 %v1033, 24
      %v1057 = vpop.permute.xlu0 %1056
      %1066 = vst.msk [vmem:[#allocation5] sm:$0xff] %vm510, %v1043
      %1067 = vst.msk [vmem:[#allocation5 + $0x8] sm:$0xff] %vm510, %v1045
      %1068 = vst.msk [vmem:[#allocation5 + $0x10] sm:$0xff] %vm510, %v1047
      %1069 = vst.msk [vmem:[#allocation5 + $0x18] sm:$0xff] %vm510, %v1049
      %1070 = vst.msk [vmem:[#allocation5 + $0x20] sm:$0xff] %vm510, %v1051
      %1071 = vst.msk [vmem:[#allocation5 + $0x28] sm:$0xff] %vm510, %v1053
      %1072 = vst.msk [vmem:[#allocation5 + $0x30] sm:$0xff] %vm510, %v1055
      %1073 = vst.msk [vmem:[#allocation5 + $0x38] sm:$0xff] %vm510, %v1057
      %v1074 = vld [vmem:[%s905 + $0x1] sm:$0xff]
      %v1075 = vld [vmem:[%s905 + $0x11] sm:$0xff]
      %v1076 = vld [vmem:[%s905 + $0x21] sm:$0xff]
      %v1077 = vld [vmem:[%s905 + $0x31] sm:$0xff]
      %v1078 = vld [vmem:[%s905 + $0x41] sm:$0xff]
      %v1079 = vld [vmem:[%s905 + $0x51] sm:$0xff]
      %v1080 = vld [vmem:[%s905 + $0x61] sm:$0xff]
      %v1081 = vld [vmem:[%s905 + $0x71] sm:$0xff]
      %1090 = vrot.lane.b32.xlu0 %v1074, 32
      %v1091 = vpop.permute.xlu0 %1090
      %1092 = vrot.lane.b32.xlu0 %v1075, 32
      %v1093 = vpop.permute.xlu0 %1092
      %1094 = vrot.lane.b32.xlu0 %v1076, 32
      %v1095 = vpop.permute.xlu0 %1094
      %1096 = vrot.lane.b32.xlu0 %v1077, 32
      %v1097 = vpop.permute.xlu0 %1096
      %1098 = vrot.lane.b32.xlu0 %v1078, 32
      %v1099 = vpop.permute.xlu0 %1098
      %1100 = vrot.lane.b32.xlu0 %v1079, 32
      %v1101 = vpop.permute.xlu0 %1100
      %1102 = vrot.lane.b32.xlu0 %v1080, 32
      %v1103 = vpop.permute.xlu0 %1102
      %1104 = vrot.lane.b32.xlu0 %v1081, 32
      %v1105 = vpop.permute.xlu0 %1104
      %1114 = vst.msk [vmem:[#allocation5] sm:$0xff] %vm559, %v1091
      %1115 = vst.msk [vmem:[#allocation5 + $0x8] sm:$0xff] %vm559, %v1093
      %1116 = vst.msk [vmem:[#allocation5 + $0x10] sm:$0xff] %vm559, %v1095
      %1117 = vst.msk [vmem:[#allocation5 + $0x18] sm:$0xff] %vm559, %v1097
      %1118 = vst.msk [vmem:[#allocation5 + $0x20] sm:$0xff] %vm559, %v1099
      %1119 = vst.msk [vmem:[#allocation5 + $0x28] sm:$0xff] %vm559, %v1101
      %1120 = vst.msk [vmem:[#allocation5 + $0x30] sm:$0xff] %vm559, %v1103
      %1121 = vst.msk [vmem:[#allocation5 + $0x38] sm:$0xff] %vm559, %v1105
      %v1122 = vld [vmem:[%s905 + $0x2] sm:$0xff]
      %v1123 = vld [vmem:[%s905 + $0x12] sm:$0xff]
      %v1124 = vld [vmem:[%s905 + $0x22] sm:$0xff]
      %v1125 = vld [vmem:[%s905 + $0x32] sm:$0xff]
      %v1126 = vld [vmem:[%s905 + $0x42] sm:$0xff]
      %v1127 = vld [vmem:[%s905 + $0x52] sm:$0xff]
      %v1128 = vld [vmem:[%s905 + $0x62] sm:$0xff]
      %v1129 = vld [vmem:[%s905 + $0x72] sm:$0xff]
      %1138 = vrot.lane.b32.xlu0 %v1122, 40
      %v1139 = vpop.permute.xlu0 %1138
      %1140 = vrot.lane.b32.xlu0 %v1123, 40
      %v1141 = vpop.permute.xlu0 %1140
      %1142 = vrot.lane.b32.xlu0 %v1124, 40
      %v1143 = vpop.permute.xlu0 %1142
      %1144 = vrot.lane.b32.xlu0 %v1125, 40
      %v1145 = vpop.permute.xlu0 %1144
      %1146 = vrot.lane.b32.xlu0 %v1126, 40
      %v1147 = vpop.permute.xlu0 %1146
      %1148 = vrot.lane.b32.xlu0 %v1127, 40
      %v1149 = vpop.permute.xlu0 %1148
      %1150 = vrot.lane.b32.xlu0 %v1128, 40
      %v1151 = vpop.permute.xlu0 %1150
      %1152 = vrot.lane.b32.xlu0 %v1129, 40
      %v1153 = vpop.permute.xlu0 %1152
      %1162 = vst.msk [vmem:[#allocation5] sm:$0xff] %vm608, %v1139
      %1163 = vst.msk [vmem:[#allocation5 + $0x8] sm:$0xff] %vm608, %v1141
      %1164 = vst.msk [vmem:[#allocation5 + $0x10] sm:$0xff] %vm608, %v1143
      %1165 = vst.msk [vmem:[#allocation5 + $0x18] sm:$0xff] %vm608, %v1145
      %1166 = vst.msk [vmem:[#allocation5 + $0x20] sm:$0xff] %vm608, %v1147
      %1167 = vst.msk [vmem:[#allocation5 + $0x28] sm:$0xff] %vm608, %v1149
      %1168 = vst.msk [vmem:[#allocation5 + $0x30] sm:$0xff] %vm608, %v1151
      %1169 = vst.msk [vmem:[#allocation5 + $0x38] sm:$0xff] %vm608, %v1153
      %s1170 = scalar_lea.vmem [#allocation3], 32
      %v1171 = vld [vmem:[%s1170] sm:$0xff]
      %v1172 = vld [vmem:[%s1170 + $0x10] sm:$0xff]
      %v1173 = vld [vmem:[%s1170 + $0x20] sm:$0xff]
      %v1174 = vld [vmem:[%s1170 + $0x30] sm:$0xff]
      %v1175 = vld [vmem:[%s1170 + $0x40] sm:$0xff]
      %v1176 = vld [vmem:[%s1170 + $0x50] sm:$0xff]
      %v1177 = vld [vmem:[%s1170 + $0x60] sm:$0xff]
      %v1178 = vld [vmem:[%s1170 + $0x70] sm:$0xff]
      %1187 = vrot.lane.b32.xlu0 %v1171, 48
      %v1188 = vpop.permute.xlu0 %1187
      %1189 = vrot.lane.b32.xlu0 %v1172, 48
      %v1190 = vpop.permute.xlu0 %1189
      %1191 = vrot.lane.b32.xlu0 %v1173, 48
      %v1192 = vpop.permute.xlu0 %1191
      %1193 = vrot.lane.b32.xlu0 %v1174, 48
      %v1194 = vpop.permute.xlu0 %1193
      %1195 = vrot.lane.b32.xlu0 %v1175, 48
      %v1196 = vpop.permute.xlu0 %1195
      %1197 = vrot.lane.b32.xlu0 %v1176, 48
      %v1198 = vpop.permute.xlu0 %1197
      %1199 = vrot.lane.b32.xlu0 %v1177, 48
      %v1200 = vpop.permute.xlu0 %1199
      %1201 = vrot.lane.b32.xlu0 %v1178, 48
      %v1202 = vpop.permute.xlu0 %1201
      %1211 = vst.msk [vmem:[#allocation5] sm:$0xff] %vm658, %v1188
      %1212 = vst.msk [vmem:[#allocation5 + $0x8] sm:$0xff] %vm658, %v1190
      %1213 = vst.msk [vmem:[#allocation5 + $0x10] sm:$0xff] %vm658, %v1192
      %1214 = vst.msk [vmem:[#allocation5 + $0x18] sm:$0xff] %vm658, %v1194
      %1215 = vst.msk [vmem:[#allocation5 + $0x20] sm:$0xff] %vm658, %v1196
      %1216 = vst.msk [vmem:[#allocation5 + $0x28] sm:$0xff] %vm658, %v1198
      %1217 = vst.msk [vmem:[#allocation5 + $0x30] sm:$0xff] %vm658, %v1200
      %1218 = vst.msk [vmem:[#allocation5 + $0x38] sm:$0xff] %vm658, %v1202
      %v1219 = vld [vmem:[%s1170 + $0x1] sm:$0xff]
      %v1220 = vld [vmem:[%s1170 + $0x11] sm:$0xff]
      %v1221 = vld [vmem:[%s1170 + $0x21] sm:$0xff]
      %v1222 = vld [vmem:[%s1170 + $0x31] sm:$0xff]
      %v1223 = vld [vmem:[%s1170 + $0x41] sm:$0xff]
      %v1224 = vld [vmem:[%s1170 + $0x51] sm:$0xff]
      %v1225 = vld [vmem:[%s1170 + $0x61] sm:$0xff]
      %v1226 = vld [vmem:[%s1170 + $0x71] sm:$0xff]
      %1235 = vrot.lane.b32.xlu0 %v1219, 56
      %v1236 = vpop.permute.xlu0 %1235
      %1237 = vrot.lane.b32.xlu0 %v1220, 56
      %v1238 = vpop.permute.xlu0 %1237
      %1239 = vrot.lane.b32.xlu0 %v1221, 56
      %v1240 = vpop.permute.xlu0 %1239
      %1241 = vrot.lane.b32.xlu0 %v1222, 56
      %v1242 = vpop.permute.xlu0 %1241
      %1243 = vrot.lane.b32.xlu0 %v1223, 56
      %v1244 = vpop.permute.xlu0 %1243
      %1245 = vrot.lane.b32.xlu0 %v1224, 56
      %v1246 = vpop.permute.xlu0 %1245
      %1247 = vrot.lane.b32.xlu0 %v1225, 56
      %v1248 = vpop.permute.xlu0 %1247
      %1249 = vrot.lane.b32.xlu0 %v1226, 56
      %v1250 = vpop.permute.xlu0 %1249
      %1259 = vst.msk [vmem:[#allocation5] sm:$0xff] %vm707, %v1236
      %1260 = vst.msk [vmem:[#allocation5 + $0x8] sm:$0xff] %vm707, %v1238
      %1261 = vst.msk [vmem:[#allocation5 + $0x10] sm:$0xff] %vm707, %v1240
      %1262 = vst.msk [vmem:[#allocation5 + $0x18] sm:$0xff] %vm707, %v1242
      %1263 = vst.msk [vmem:[#allocation5 + $0x20] sm:$0xff] %vm707, %v1244
      %1264 = vst.msk [vmem:[#allocation5 + $0x28] sm:$0xff] %vm707, %v1246
      %1265 = vst.msk [vmem:[#allocation5 + $0x30] sm:$0xff] %vm707, %v1248
      %1266 = vst.msk [vmem:[#allocation5 + $0x38] sm:$0xff] %vm707, %v1250
      %v1267 = vld [vmem:[%s1170 + $0x2] sm:$0xff]
      %v1268 = vld [vmem:[%s1170 + $0x12] sm:$0xff]
      %v1269 = vld [vmem:[%s1170 + $0x22] sm:$0xff]
      %v1270 = vld [vmem:[%s1170 + $0x32] sm:$0xff]
      %v1271 = vld [vmem:[%s1170 + $0x42] sm:$0xff]
      %v1272 = vld [vmem:[%s1170 + $0x52] sm:$0xff]
      %v1273 = vld [vmem:[%s1170 + $0x62] sm:$0xff]
      %v1274 = vld [vmem:[%s1170 + $0x72] sm:$0xff]
      %1283 = vrot.lane.b32.xlu0 %v1267, 64
      %v1284 = vpop.permute.xlu0 %1283
      %1285 = vrot.lane.b32.xlu0 %v1268, 64
      %v1286 = vpop.permute.xlu0 %1285
      %1287 = vrot.lane.b32.xlu0 %v1269, 64
      %v1288 = vpop.permute.xlu0 %1287
      %1289 = vrot.lane.b32.xlu0 %v1270, 64
      %v1290 = vpop.permute.xlu0 %1289
      %1291 = vrot.lane.b32.xlu0 %v1271, 64
      %v1292 = vpop.permute.xlu0 %1291
      %1293 = vrot.lane.b32.xlu0 %v1272, 64
      %v1294 = vpop.permute.xlu0 %1293
      %1295 = vrot.lane.b32.xlu0 %v1273, 64
      %v1296 = vpop.permute.xlu0 %1295
      %1297 = vrot.lane.b32.xlu0 %v1274, 64
      %v1298 = vpop.permute.xlu0 %1297
      %1307 = vst.msk [vmem:[#allocation5] sm:$0xff] %vm756, %v1284
      %1308 = vst.msk [vmem:[#allocation5 + $0x8] sm:$0xff] %vm756, %v1286
      %1309 = vst.msk [vmem:[#allocation5 + $0x10] sm:$0xff] %vm756, %v1288
      %1310 = vst.msk [vmem:[#allocation5 + $0x18] sm:$0xff] %vm756, %v1290
      %1311 = vst.msk [vmem:[#allocation5 + $0x20] sm:$0xff] %vm756, %v1292
      %1312 = vst.msk [vmem:[#allocation5 + $0x28] sm:$0xff] %vm756, %v1294
      %1313 = vst.msk [vmem:[#allocation5 + $0x30] sm:$0xff] %vm756, %v1296
      %1314 = vst.msk [vmem:[#allocation5 + $0x38] sm:$0xff] %vm756, %v1298
      %v1315 = vld [vmem:[#allocation5] sm:$0xff]
      %v1316 = vld [vmem:[#allocation5 + $0x8] sm:$0xff]
      %v1317 = vld [vmem:[#allocation5 + $0x10] sm:$0xff]
      %v1318 = vld [vmem:[#allocation5 + $0x18] sm:$0xff]
      %v1319 = vld [vmem:[#allocation5 + $0x20] sm:$0xff]
      %v1320 = vld [vmem:[#allocation5 + $0x28] sm:$0xff]
      %v1321 = vld [vmem:[#allocation5 + $0x30] sm:$0xff]
      %v1322 = vld [vmem:[#allocation5 + $0x38] sm:$0xff]
      %v1323 = vld [vmem:[%s6] sm:$0xff]
      %v1324 = vld [vmem:[%s6 + $0x8] sm:$0xff]
      %v1325 = vld [vmem:[%s6 + $0x10] sm:$0xff]
      %v1326 = vld [vmem:[%s6 + $0x18] sm:$0xff]
      %v1327 = vld [vmem:[%s6 + $0x20] sm:$0xff]
      %v1328 = vld [vmem:[%s6 + $0x28] sm:$0xff]
      %v1329 = vld [vmem:[%s6 + $0x30] sm:$0xff]
      %v1330 = vld [vmem:[%s6 + $0x38] sm:$0xff]
      %v1331 = vld [vmem:[%s6 + $0x40] sm:$0xff]
      %v1333 = vsel %vm782, %v1315, 0
      %v1336 = vsel %vm782, %v1316, 0
      %v1339 = vsel %vm782, %v1317, 0
      %v1342 = vsel %vm782, %v1318, 0
      %v1345 = vsel %vm782, %v1319, 0
      %v1348 = vsel %vm782, %v1320, 0
      %v1351 = vsel %vm782, %v1321, 0
      %v1354 = vsel %vm782, %v1322, 0
      %1356 = vmatpush.msra.mxu0 0.0
      %1357 = vmatpush.msra.mxu0 0.0
      %1358 = vmatpush.msra.mxu0 0.0
      %1359 = vmatpush.msra.mxu0 0.0
      %1360 = vmatpush.msra.mxu0 0.0
      %1361 = vmatpush.msra.mxu0 0.0
      %1362 = vmatpush.msra.mxu0 0.0
      %1363 = vmatpush.msra.mxu0 %v1331
      %1364 = vmatpush.msra.mxu0 %v1330
      %1365 = vmatpush.msra.mxu0 %v1329
      %1366 = vmatpush.msra.mxu0 %v1328
      %1367 = vmatpush.msra.mxu0 %v1327
      %1368 = vmatpush.msra.mxu0 %v1326
      %1369 = vmatpush.msra.mxu0 %v1325
      %1370 = vmatpush.msra.mxu0 %v1324
      %1371 = vmatpush.msra.mxu0 %v1323
      %1372 = vmatmul.f32.gmra.mxu0 %v1333
      %v1373 = vpop.f32.mrf.mxu0
      %v1374 = vadd.f32 0.0, %v1373
      %1375 = vmatmul.f32.gmra.mxu0 %v1336
      %v1376 = vpop.f32.mrf.mxu0
      %v1377 = vadd.f32 0.0, %v1376
      %1378 = vmatmul.f32.gmra.mxu0 %v1339
      %v1379 = vpop.f32.mrf.mxu0
      %v1380 = vadd.f32 0.0, %v1379
      %1381 = vmatmul.f32.gmra.mxu0 %v1342
      %v1382 = vpop.f32.mrf.mxu0
      %v1383 = vadd.f32 0.0, %v1382
      %1384 = vmatmul.f32.gmra.mxu0 %v1345
      %v1385 = vpop.f32.mrf.mxu0
      %v1386 = vadd.f32 0.0, %v1385
      %1387 = vmatmul.f32.gmra.mxu0 %v1348
      %v1388 = vpop.f32.mrf.mxu0
      %v1389 = vadd.f32 0.0, %v1388
      %1390 = vmatmul.f32.gmra.mxu0 %v1351
      %v1391 = vpop.f32.mrf.mxu0
      %v1392 = vadd.f32 0.0, %v1391
      %1393 = vmatmul.f32.gmra.mxu0 %v1354
      %v1394 = vpop.f32.mrf.mxu0
      %v1395 = vadd.f32 0.0, %v1394
      %1396 = vdwg.mxu0
      %v1397 = vadd.f32 %v279, %v1374
      %v1398 = vadd.f32 %v280, %v1377
      %v1399 = vadd.f32 %v281, %v1380
      %v1400 = vadd.f32 %v282, %v1383
      %v1401 = vadd.f32 %v283, %v1386
      %v1402 = vadd.f32 %v284, %v1389
      %v1403 = vadd.f32 %v285, %v1392
      %v1404 = vadd.f32 %v286, %v1395
      %1405 = vst.msk [vmem:[%s278] sm:$0xff] %vm319, %v1397
      %1406 = vst.msk [vmem:[%s278 + $0x8] sm:$0xff] %vm319, %v1398
      %1407 = vst.msk [vmem:[%s278 + $0x10] sm:$0xff] %vm319, %v1399
      %1408 = vst.msk [vmem:[%s278 + $0x18] sm:$0xff] %vm319, %v1400
      %1409 = vst.msk [vmem:[%s278 + $0x20] sm:$0xff] %vm319, %v1401
      %1410 = vst.msk [vmem:[%s278 + $0x28] sm:$0xff] %vm319, %v1402
      %1411 = vst.msk [vmem:[%s278 + $0x30] sm:$0xff] %vm319, %v1403
      %1412 = vst.msk [vmem:[%s278 + $0x38] sm:$0xff] %vm319, %v1404
      %p1413 = scmp.lt.s32.totalorder %s18, 1
      %s1414 = scalar_select %p1413, %s18, 1
      %s1415 = smul.addr %s1414, 8
      %s1416 = smul.addr %s1415, 8
      %s1417 = scalar_lea.vmem %s7, %s1416
      // Predicated region
      $region49: #{network_block_forward.3} parent=47 // pred_check
        %p1418 = pneg %p188
      $region50: #{network_block_forward.3} parent=47 // pred_check_branch
        %1420 = sbr.rel (%p1418) target = $region52
      $region51: #{network_block_forward.3} parent=47 // pred_region
        _
      $region52: #{network_block_forward.3} parent=47 // pred_fallthru
        _
    $region48: #{network_block_forward.3} parent=5 // pred_fallthru
      _
    %p1421 = scmp.le.s32.totalorder 2, %s13
    // Predicated region
    $region53: #{network_block_forward.3} parent=5 // pred_check
      %p1422 = pneg %p1421
    $region54: #{network_block_forward.3} parent=5 // pred_check_branch
      %1424 = sbr.rel (%p1422) target = $region56
    $region55: #{network_block_forward.3} parent=5 // pred_region
      %s1425 = ssub.s32 %s13, 2
      // Predicated region
      $region57: #{network_block_forward.3} parent=55 // pred_check
        %p1426 = pneg %p194
      $region58: #{network_block_forward.3} parent=55 // pred_check_branch
        %1428 = sbr.rel (%p1426) target = $region60
      $region59: #{network_block_forward.3} parent=55 // pred_region
        %p1429 = scmp.lt.s32.totalorder %s19, 1
        %s1430 = scalar_select %p1429, %s19, 1
        %s1431 = smul.addr %s1430, 8
        %s1432 = smul.addr %s1431, 8
        %s1433 = scalar_lea.vmem %s7, %s1432
      $region60: #{network_block_forward.3} parent=55 // pred_fallthru
        _
    $region56: #{network_block_forward.3} parent=5 // pred_fallthru
      _
  $region6: #{network_block_forward.3} parent=0 // loop_footer
    %s17 = sadd.s32 1, %s13
  $region7: #{network_block_forward.3} parent=0 // loop_footer_branch
    %12 = sbr.rel target = $region3
  $region8: #{network_block_forward.3} parent=0 // loop_exit
    _

// kernel: network_block_forward.2
$region0: #{network_block_forward.2}
  #allocation0 [shape = 'u32[]', space=smem, size = 0x4, offset = 0x4, fixed_abs, tag = 'smem constant byte address 0x4 - core index']
  #allocation1 [shape = 'u32[72,128]{1,0:T(1,128)}', space=vmem, size = 0x9000, scoped, tag = 'internal scratch']
  #allocation2 [shape = 'f32[18,18,4]{2,1,0:T(8,128)}', space=vmem, size = 0x36000, scoped, tag = 'scratch operand']
  #allocation3 [shape = 'f32[10,10,8]{2,1,0:T(8,128)}', space=vmem, size = 0x14000, scoped, tag = 'scratch operand']
  #allocation4 [shape = 'f32[256,36]{1,0:T(8,128)}', space=vmem, size = 0x20000, scoped, tag = 'scratch operand']
  #allocation5 [shape = 'f32[64,72]{1,0:T(8,128)}', space=vmem, size = 0x8000, scoped, tag = 'scratch operand']
  %s0 = inlined_call_operand.vmem [shape: f32[2,16,16,4], index: 0, kind: input, shape index: {}]
  %s1 = inlined_call_operand.vmem [shape: f32[1,4], index: 1, kind: input, shape index: {}]
  %s2 = inlined_call_operand.vmem [shape: f32[1,4], index: 2, kind: input, shape index: {}]
  %s3 = inlined_call_operand.vmem [shape: f32[36,8], index: 3, kind: input, shape index: {}]
  %s4 = inlined_call_operand.vmem [shape: f32[4,8], index: 4, kind: input, shape index: {}]
  %s5 = inlined_call_operand.vmem [shape: f32[64,256], index: 5, kind: input, shape index: {}]
  %s6 = inlined_call_operand.vmem [shape: f32[1,8], index: 6, kind: input, shape index: {}]
  %s7 = inlined_call_operand.vmem [shape: f32[1,8], index: 7, kind: input, shape index: {}]
  %s8 = inlined_call_operand.vmem [shape: f32[72,8], index: 8, kind: input, shape index: {}]
  %s9 = inlined_call_operand.vmem [shape: f32[2,8,8,8], index: 9, kind: output, shape index: {}]
  %s10 = sld [smem:[#allocation0]]
  $region69: #{network_block_forward.2} parent=0
    _
  %s12 = ssub.s32 1, %s10
  %s13 = scalar_select 0, %s12, %s10
  loop: start=0, step=1, limit=4
  $region2: #{network_block_forward.2} parent=0 // loop_pre_header
    _
  $region3: #{network_block_forward.2} parent=0 // loop_header
    %s15 = sphi 0, %s19
    %p16 = scmp.ge.s32.totalorder %s15, 4
    %s25 = sphi 0, %s27
    %s28 = sphi 0, %s25
    %s29 = sphi 0, %s28
    %s45 = sphi 0, %s29
    %s49 = sphi 0, %s49
    %s51 = sphi 0, %s49
    %s52 = sphi 0, %s51
    %s66 = sphi 0, %s52
    %s70 = sphi 0, %s70
    %s72 = sphi 0, %s70
    %s73 = sphi 0, %s72
    %s87 = sphi 0, %s73
    %s91 = sphi 0, %s91
    %s93 = sphi 0, %s91
    %s94 = sphi 0, %s93
    %s108 = sphi 0, %s94
    %s112 = sphi 0, %s112
    %s114 = sphi 0, %s112
    %s115 = sphi 0, %s114
    %s129 = sphi 0, %s115
    %s133 = sphi 0, %s133
    %s135 = sphi 0, %s133
    %s136 = sphi 0, %s135
    %s150 = sphi 0, %s136
    %s154 = sphi 0, %s154
    %s156 = sphi 0, %s154
    %s157 = sphi 0, %s156
    %s171 = sphi 0, %s157
    %s175 = sphi 0, %s175
    %s177 = sphi 0, %s175
    %s178 = sphi 0, %s177
    %s192 = sphi 0, %s178
    %s196 = sphi 0, %s196
    %s198 = sphi 0, %s196
    %s199 = sphi 0, %s198
    %s213 = sphi 0, %s199
    %s219 = sphi 0, %s221
    %s222 = sphi 0, %s219
    %s223 = sphi 0, %s222
    %s239 = sphi 0, %s223
  $region4: #{network_block_forward.2} parent=0 // loop_header_branch
    %18 = sbr.rel (%p16) target = $region8
  $region5: #{network_block_forward.2} parent=0 // loop_body
    %s20 = ssub.s32 %s15, 1
    %s21 = ssub.s32 %s15, 2
    %s22 = sadd.s32 %s15, 1
    %s23 = ssub.s32 %s15, %s22
    %p24 = scmp.eq.s32.totalorder %s23, 0
    %s26 = sadd.s32 %s25, 1
    %s27 = scalar_select %p24, %s25, %s26
    %p30 = pneg %p24
    %p31 = scmp.eq.s32.totalorder %s15, 1
    %p32 = por %p30, %p31
    %p33 = scmp.ne.s32.totalorder %s25, %s28
    %p34 = scmp.eq.s32.totalorder %s15, 0
    %p35 = por %p33, %p34
    %p36 = scmp.ne.s32.totalorder %s25, %s28
    %p37 = scmp.eq.s32.totalorder %s20, 1
    %p38 = por %p36, %p37
    %p39 = scmp.ne.s32.totalorder %s28, %s29
    %p40 = scmp.eq.s32.totalorder %s20, 0
    %p41 = por %p39, %p40
    %p42 = scmp.ne.s32.totalorder %s28, %s29
    %p43 = scmp.eq.s32.totalorder %s21, 1
    %p44 = por %p42, %p43
    %p46 = scmp.ne.s32.totalorder %s29, %s45
    %p47 = scmp.eq.s32.totalorder %s21, 0
    %p48 = por %p46, %p47
    %s50 = sadd.s32 %s49, 1
    %p53 = scmp.eq.s32.totalorder %s15, 1
    %p54 = scmp.ne.s32.totalorder %s49, %s51
    %p55 = scmp.eq.s32.totalorder %s15, 0
    %p56 = por %p54, %p55
    %p57 = scmp.ne.s32.totalorder %s49, %s51
    %p58 = scmp.eq.s32.totalorder %s20, 1
    %p59 = por %p57, %p58
    %p60 = scmp.ne.s32.totalorder %s51, %s52
    %p61 = scmp.eq.s32.totalorder %s20, 0
    %p62 = por %p60, %p61
    %p63 = scmp.ne.s32.totalorder %s51, %s52
    %p64 = scmp.eq.s32.totalorder %s21, 1
    %p65 = por %p63, %p64
    %p67 = scmp.ne.s32.totalorder %s52, %s66
    %p68 = scmp.eq.s32.totalorder %s21, 0
    %p69 = por %p67, %p68
    %s71 = sadd.s32 %s70, 1
    %p74 = scmp.eq.s32.totalorder %s15, 1
    %p75 = scmp.ne.s32.totalorder %s70, %s72
    %p76 = scmp.eq.s32.totalorder %s15, 0
    %p77 = por %p75, %p76
    %p78 = scmp.ne.s32.totalorder %s70, %s72
    %p79 = scmp.eq.s32.totalorder %s20, 1
    %p80 = por %p78, %p79
    %p81 = scmp.ne.s32.totalorder %s72, %s73
    %p82 = scmp.eq.s32.totalorder %s20, 0
    %p83 = por %p81, %p82
    %p84 = scmp.ne.s32.totalorder %s72, %s73
    %p85 = scmp.eq.s32.totalorder %s21, 1
    %p86 = por %p84, %p85
    %p88 = scmp.ne.s32.totalorder %s73, %s87
    %p89 = scmp.eq.s32.totalorder %s21, 0
    %p90 = por %p88, %p89
    %s92 = sadd.s32 %s91, 1
    %p95 = scmp.eq.s32.totalorder %s15, 1
    %p96 = scmp.ne.s32.totalorder %s91, %s93
    %p97 = scmp.eq.s32.totalorder %s15, 0
    %p98 = por %p96, %p97
    %p99 = scmp.ne.s32.totalorder %s91, %s93
    %p100 = scmp.eq.s32.totalorder %s20, 1
    %p101 = por %p99, %p100
    %p102 = scmp.ne.s32.totalorder %s93, %s94
    %p103 = scmp.eq.s32.totalorder %s20, 0
    %p104 = por %p102, %p103
    %p105 = scmp.ne.s32.totalorder %s93, %s94
    %p106 = scmp.eq.s32.totalorder %s21, 1
    %p107 = por %p105, %p106
    %p109 = scmp.ne.s32.totalorder %s94, %s108
    %p110 = scmp.eq.s32.totalorder %s21, 0
    %p111 = por %p109, %p110
    %s113 = sadd.s32 %s112, 1
    %p116 = scmp.eq.s32.totalorder %s15, 1
    %p117 = scmp.ne.s32.totalorder %s112, %s114
    %p118 = scmp.eq.s32.totalorder %s15, 0
    %p119 = por %p117, %p118
    %p120 = scmp.ne.s32.totalorder %s112, %s114
    %p121 = scmp.eq.s32.totalorder %s20, 1
    %p122 = por %p120, %p121
    %p123 = scmp.ne.s32.totalorder %s114, %s115
    %p124 = scmp.eq.s32.totalorder %s20, 0
    %p125 = por %p123, %p124
    %p126 = scmp.ne.s32.totalorder %s114, %s115
    %p127 = scmp.eq.s32.totalorder %s21, 1
    %p128 = por %p126, %p127
    %p130 = scmp.ne.s32.totalorder %s115, %s129
    %p131 = scmp.eq.s32.totalorder %s21, 0
    %p132 = por %p130, %p131
    %s134 = sadd.s32 %s133, 1
    %p137 = scmp.eq.s32.totalorder %s15, 1
    %p138 = scmp.ne.s32.totalorder %s133, %s135
    %p139 = scmp.eq.s32.totalorder %s15, 0
    %p140 = por %p138, %p139
    %p141 = scmp.ne.s32.totalorder %s133, %s135
    %p142 = scmp.eq.s32.totalorder %s20, 1
    %p143 = por %p141, %p142
    %p144 = scmp.ne.s32.totalorder %s135, %s136
    %p145 = scmp.eq.s32.totalorder %s20, 0
    %p146 = por %p144, %p145
    %p147 = scmp.ne.s32.totalorder %s135, %s136
    %p148 = scmp.eq.s32.totalorder %s21, 1
    %p149 = por %p147, %p148
    %p151 = scmp.ne.s32.totalorder %s136, %s150
    %p152 = scmp.eq.s32.totalorder %s21, 0
    %p153 = por %p151, %p152
    %s155 = sadd.s32 %s154, 1
    %p158 = scmp.eq.s32.totalorder %s15, 1
    %p159 = scmp.ne.s32.totalorder %s154, %s156
    %p160 = scmp.eq.s32.totalorder %s15, 0
    %p161 = por %p159, %p160
    %p162 = scmp.ne.s32.totalorder %s154, %s156
    %p163 = scmp.eq.s32.totalorder %s20, 1
    %p164 = por %p162, %p163
    %p165 = scmp.ne.s32.totalorder %s156, %s157
    %p166 = scmp.eq.s32.totalorder %s20, 0
    %p167 = por %p165, %p166
    %p168 = scmp.ne.s32.totalorder %s156, %s157
    %p169 = scmp.eq.s32.totalorder %s21, 1
    %p170 = por %p168, %p169
    %p172 = scmp.ne.s32.totalorder %s157, %s171
    %p173 = scmp.eq.s32.totalorder %s21, 0
    %p174 = por %p172, %p173
    %s176 = sadd.s32 %s175, 1
    %p179 = scmp.eq.s32.totalorder %s15, 1
    %p180 = scmp.ne.s32.totalorder %s175, %s177
    %p181 = scmp.eq.s32.totalorder %s15, 0
    %p182 = por %p180, %p181
    %p183 = scmp.ne.s32.totalorder %s175, %s177
    %p184 = scmp.eq.s32.totalorder %s20, 1
    %p185 = por %p183, %p184
    %p186 = scmp.ne.s32.totalorder %s177, %s178
    %p187 = scmp.eq.s32.totalorder %s20, 0
    %p188 = por %p186, %p187
    %p189 = scmp.ne.s32.totalorder %s177, %s178
    %p190 = scmp.eq.s32.totalorder %s21, 1
    %p191 = por %p189, %p190
    %p193 = scmp.ne.s32.totalorder %s178, %s192
    %p194 = scmp.eq.s32.totalorder %s21, 0
    %p195 = por %p193, %p194
    %s197 = sadd.s32 %s196, 1
    %p200 = scmp.eq.s32.totalorder %s15, 1
    %p201 = scmp.ne.s32.totalorder %s196, %s198
    %p202 = scmp.eq.s32.totalorder %s15, 0
    %p203 = por %p201, %p202
    %p204 = scmp.ne.s32.totalorder %s196, %s198
    %p205 = scmp.eq.s32.totalorder %s20, 1
    %p206 = por %p204, %p205
    %p207 = scmp.ne.s32.totalorder %s198, %s199
    %p208 = scmp.eq.s32.totalorder %s20, 0
    %p209 = por %p207, %p208
    %p210 = scmp.ne.s32.totalorder %s198, %s199
    %p211 = scmp.eq.s32.totalorder %s21, 1
    %p212 = por %p210, %p211
    %p214 = scmp.ne.s32.totalorder %s199, %s213
    %p215 = scmp.eq.s32.totalorder %s21, 0
    %p216 = por %p214, %p215
    %s217 = ssub.s32 %s15, %s22
    %p218 = scmp.eq.s32.totalorder %s217, 0
    %s220 = sadd.s32 %s219, 1
    %s221 = scalar_select %p218, %s219, %s220
    %p224 = pneg %p218
    %p225 = scmp.eq.s32.totalorder %s15, 1
    %p226 = por %p224, %p225
    %p227 = scmp.ne.s32.totalorder %s219, %s222
    %p228 = scmp.eq.s32.totalorder %s15, 0
    %p229 = por %p227, %p228
    %p230 = scmp.ne.s32.totalorder %s219, %s222
    %p231 = scmp.eq.s32.totalorder %s20, 1
    %p232 = por %p230, %p231
    %p233 = scmp.ne.s32.totalorder %s222, %s223
    %p234 = scmp.eq.s32.totalorder %s20, 0
    %p235 = por %p233, %p234
    %p236 = scmp.ne.s32.totalorder %s222, %s223
    %p237 = scmp.eq.s32.totalorder %s21, 1
    %p238 = por %p236, %p237
    %p240 = scmp.ne.s32.totalorder %s223, %s239
    %p241 = scmp.eq.s32.totalorder %s21, 0
    %p242 = por %p240, %p241
    %p243 = scmp.le.s32.totalorder 1, %s15
    %p244 = scmp.lt.s32.totalorder %s15, 3
    %p245 = pnand %p243, %p244
    %p246 = pneg %p245
    // Predicated region
    $region9: #{network_block_forward.2} parent=5 // pred_check
      _
    $region10: #{network_block_forward.2} parent=5 // pred_check_branch
      %248 = sbr.rel (%p245) target = $region12
    $region11: #{network_block_forward.2} parent=5 // pred_region
      %s249 = ssub.s32 %s15, 1
      // Predicated region
      $region13: #{network_block_forward.2} parent=11 // pred_check
        %p250 = pneg %p62
      $region14: #{network_block_forward.2} parent=11 // pred_check_branch
        %252 = sbr.rel (%p250) target = $region16
      $region15: #{network_block_forward.2} parent=11 // pred_region
        _
      $region16: #{network_block_forward.2} parent=11 // pred_fallthru
        _
      // Predicated region
      $region17: #{network_block_forward.2} parent=11 // pred_check
        %p253 = pneg %p83
      $region18: #{network_block_forward.2} parent=11 // pred_check_branch
        %255 = sbr.rel (%p253) target = $region20
      $region19: #{network_block_forward.2} parent=11 // pred_region
        _
      $region20: #{network_block_forward.2} parent=11 // pred_fallthru
        _
      // Predicated region
      $region21: #{network_block_forward.2} parent=11 // pred_check
        %p256 = pneg %p104
      $region22: #{network_block_forward.2} parent=11 // pred_check_branch
        %258 = sbr.rel (%p256) target = $region24
      $region23: #{network_block_forward.2} parent=11 // pred_region
        _
      $region24: #{network_block_forward.2} parent=11 // pred_fallthru
        _
      // Predicated region
      $region25: #{network_block_forward.2} parent=11 // pred_check
        %p259 = pneg %p125
      $region26: #{network_block_forward.2} parent=11 // pred_check_branch
        %261 = sbr.rel (%p259) target = $region28
      $region27: #{network_block_forward.2} parent=11 // pred_region
        _
      $region28: #{network_block_forward.2} parent=11 // pred_fallthru
        _
      // Predicated region
      $region29: #{network_block_forward.2} parent=11 // pred_check
        %p262 = pneg %p146
      $region30: #{network_block_forward.2} parent=11 // pred_check_branch
        %264 = sbr.rel (%p262) target = $region32
      $region31: #{network_block_forward.2} parent=11 // pred_region
        _
      $region32: #{network_block_forward.2} parent=11 // pred_fallthru
        _
      // Predicated region
      $region33: #{network_block_forward.2} parent=11 // pred_check
        %p265 = pneg %p167
      $region34: #{network_block_forward.2} parent=11 // pred_check_branch
        %267 = sbr.rel (%p265) target = $region36
      $region35: #{network_block_forward.2} parent=11 // pred_region
        _
      $region36: #{network_block_forward.2} parent=11 // pred_fallthru
        _
      // Predicated region
      $region37: #{network_block_forward.2} parent=11 // pred_check
        %p268 = pneg %p188
      $region38: #{network_block_forward.2} parent=11 // pred_check_branch
        %270 = sbr.rel (%p268) target = $region40
      $region39: #{network_block_forward.2} parent=11 // pred_region
        _
      $region40: #{network_block_forward.2} parent=11 // pred_fallthru
        _
      // Predicated region
      $region41: #{network_block_forward.2} parent=11 // pred_check
        %p271 = pneg %p209
      $region42: #{network_block_forward.2} parent=11 // pred_check_branch
        %273 = sbr.rel (%p271) target = $region44
      $region43: #{network_block_forward.2} parent=11 // pred_region
        _
      $region44: #{network_block_forward.2} parent=11 // pred_fallthru
        _
    $region12: #{network_block_forward.2} parent=5 // pred_fallthru
      _
    %p274 = scmp.lt.s32.totalorder %s15, 2
    // Predicated region
    $region45: #{network_block_forward.2} parent=5 // pred_check
      %p275 = pneg %p274
    $region46: #{network_block_forward.2} parent=5 // pred_check_branch
      %277 = sbr.rel (%p275) target = $region48
    $region47: #{network_block_forward.2} parent=5 // pred_region
      // Predicated region
      $region49: #{network_block_forward.2} parent=47 // pred_check
        %p278 = pneg %p35
      $region50: #{network_block_forward.2} parent=47 // pred_check_branch
        %280 = sbr.rel (%p278) target = $region52
      $region51: #{network_block_forward.2} parent=47 // pred_region
        %p281 = scmp.lt.s32.totalorder %s15, 1
        %s282 = scalar_select %p281, %s15, 1
        %s283 = smul.addr %s282, 32
        %s284 = smul.addr %s283, 8
        %s285 = scalar_lea.vmem %s0, %s284
      $region52: #{network_block_forward.2} parent=47 // pred_fallthru
        _
    $region48: #{network_block_forward.2} parent=5 // pred_fallthru
      _
    %p286 = scmp.le.s32.totalorder 1, %s15
    %p287 = scmp.lt.s32.totalorder %s15, 3
    %p288 = pnand %p286, %p287
    %p289 = pneg %p288
    // Predicated region
    $region53: #{network_block_forward.2} parent=5 // pred_check
      _
    $region54: #{network_block_forward.2} parent=5 // pred_check_branch
      %291 = sbr.rel (%p288) target = $region56
    $region55: #{network_block_forward.2} parent=5 // pred_region
      %s292 = ssub.s32 %s15, 1
      %p293 = scmp.lt.s32.totalorder %s20, 1
      %s294 = scalar_select %p293, %s20, 1
      %s295 = smul.addr %s294, 32
      %s296 = smul.addr %s295, 8
      %s297 = scalar_lea.vmem %s0, %s296
      %p298 = pneg %p41
      %p299 = pneg %p38
      %p300 = pneg %p62
      %p301 = pneg %p59
      %p302 = pneg %p83
      %p303 = pneg %p80
      %p304 = pneg %p104
      %p305 = pneg %p101
      %p306 = pneg %p125
      %p307 = pneg %p122
      %p308 = pneg %p146
      %p309 = pneg %p143
      %p310 = pneg %p167
      %p311 = pneg %p164
      %p312 = pneg %p188
      %p313 = pneg %p185
      %p314 = pneg %p209
      %p315 = pneg %p206
      %p316 = pneg %p235
      %p317 = pneg %p232
      %p318 = scmp.lt.s32.totalorder %s20, 1
      %s319 = scalar_select %p318, %s20, 1
      %s320 = smul.addr %s319, 8
      %s321 = smul.addr %s320, 8
      %s322 = scalar_lea.vmem %s9, %s321
      %p323 = scmp.lt.s32.totalorder %s20, 1
      %s324 = scalar_select %p323, %s20, 1
      %s325 = smul.addr %s324, 32
      %s326 = smul.addr %s325, 8
      %s327 = scalar_lea.vmem %s0, %s326
      %p328 = scmp.lt.s32.totalorder %s20, 1
      %s329 = scalar_select %p328, %s20, 1
      %s330 = smul.addr %s329, 8
      %s331 = smul.addr %s330, 8
      %s332 = scalar_lea.vmem %s9, %s331
      %v333 = vld [vmem:[%s327] sm:$0xff]
      %v334 = vld [vmem:[%s327 + $0x8] sm:$0xff]
      %v335 = vld [vmem:[%s327 + $0x10] sm:$0xff]
      %v336 = vld [vmem:[%s327 + $0x18] sm:$0xff]
      %v337 = vld [vmem:[%s327 + $0x20] sm:$0xff]
      %v338 = vld [vmem:[%s327 + $0x28] sm:$0xff]
      %v339 = vld [vmem:[%s327 + $0x30] sm:$0xff]
      %v340 = vld [vmem:[%s327 + $0x38] sm:$0xff]
      %v341 = vld [vmem:[%s327 + $0x40] sm:$0xff]
      %v342 = vld [vmem:[%s327 + $0x48] sm:$0xff]
      %v343 = vld [vmem:[%s327 + $0x50] sm:$0xff]
      %v344 = vld [vmem:[%s327 + $0x58] sm:$0xff]
      %v345 = vld [vmem:[%s327 + $0x60] sm:$0xff]
      %v346 = vld [vmem:[%s327 + $0x68] sm:$0xff]
      %v347 = vld [vmem:[%s327 + $0x70] sm:$0xff]
      %v348 = vld [vmem:[%s327 + $0x78] sm:$0xff]
      %v349 = vld [vmem:[%s327 + $0x80] sm:$0xff]
      %v350 = vld [vmem:[%s327 + $0x88] sm:$0xff]
      %v351 = vld [vmem:[%s327 + $0x90] sm:$0xff]
      %v352 = vld [vmem:[%s327 + $0x98] sm:$0xff]
      %v353 = vld [vmem:[%s327 + $0xa0] sm:$0xff]
      %v354 = vld [vmem:[%s327 + $0xa8] sm:$0xff]
      %v355 = vld [vmem:[%s327 + $0xb0] sm:$0xff]
      %v356 = vld [vmem:[%s327 + $0xb8] sm:$0xff]
      %v357 = vld [vmem:[%s327 + $0xc0] sm:$0xff]
      %v358 = vld [vmem:[%s327 + $0xc8] sm:$0xff]
      %v359 = vld [vmem:[%s327 + $0xd0] sm:$0xff]
      %v360 = vld [vmem:[%s327 + $0xd8] sm:$0xff]
      %v361 = vld [vmem:[%s327 + $0xe0] sm:$0xff]
      %v362 = vld [vmem:[%s327 + $0xe8] sm:$0xff]
      %v363 = vld [vmem:[%s327 + $0xf0] sm:$0xff]
      %v364 = vld [vmem:[%s327 + $0xf8] sm:$0xff]
      %v365 = vld [vmem:[%s1] sm:$0x1]
      %v366 = vld [vmem:[%s2] sm:$0x1]
      %v368 = vperm.slane %v365, 0
      %v370 = vmul.f32 %v333, %v368
      %v371 = vmul.f32 %v334, %v368
      %v372 = vmul.f32 %v335, %v368
      %v373 = vmul.f32 %v336, %v368
      %v374 = vmul.f32 %v337, %v368
      %v375 = vmul.f32 %v338, %v368
      %v376 = vmul.f32 %v339, %v368
      %v377 = vmul.f32 %v340, %v368
      %v378 = vmul.f32 %v341, %v368
      %v379 = vmul.f32 %v342, %v368
      %v380 = vmul.f32 %v343, %v368
      %v381 = vmul.f32 %v344, %v368
      %v382 = vmul.f32 %v345, %v368
      %v383 = vmul.f32 %v346, %v368
      %v384 = vmul.f32 %v347, %v368
      %v385 = vmul.f32 %v348, %v368
      %v386 = vmul.f32 %v349, %v368
      %v387 = vmul.f32 %v350, %v368
      %v388 = vmul.f32 %v351, %v368
      %v389 = vmul.f32 %v352, %v368
      %v390 = vmul.f32 %v353, %v368
      %v391 = vmul.f32 %v354, %v368
      %v392 = vmul.f32 %v355, %v368
      %v393 = vmul.f32 %v356, %v368
      %v394 = vmul.f32 %v357, %v368
      %v395 = vmul.f32 %v358, %v368
      %v396 = vmul.f32 %v359, %v368
      %v397 = vmul.f32 %v360, %v368
      %v398 = vmul.f32 %v361, %v368
      %v399 = vmul.f32 %v362, %v368
      %v400 = vmul.f32 %v363, %v368
      %v401 = vmul.f32 %v364, %v368
      %v403 = vperm.slane %v366, 0
      %v405 = vadd.f32 %v370, %v403
      %v406 = vadd.f32 %v371, %v403
      %v407 = vadd.f32 %v372, %v403
      %v408 = vadd.f32 %v373, %v403
      %v409 = vadd.f32 %v374, %v403
      %v410 = vadd.f32 %v375, %v403
      %v411 = vadd.f32 %v376, %v403
      %v412 = vadd.f32 %v377, %v403
      %v413 = vadd.f32 %v378, %v403
      %v414 = vadd.f32 %v379, %v403
      %v415 = vadd.f32 %v380, %v403
      %v416 = vadd.f32 %v381, %v403
      %v417 = vadd.f32 %v382, %v403
      %v418 = vadd.f32 %v383, %v403
      %v419 = vadd.f32 %v384, %v403
      %v420 = vadd.f32 %v385, %v403
      %v421 = vadd.f32 %v386, %v403
      %v422 = vadd.f32 %v387, %v403
      %v423 = vadd.f32 %v388, %v403
      %v424 = vadd.f32 %v389, %v403
      %v425 = vadd.f32 %v390, %v403
      %v426 = vadd.f32 %v391, %v403
      %v427 = vadd.f32 %v392, %v403
      %v428 = vadd.f32 %v393, %v403
      %v429 = vadd.f32 %v394, %v403
      %v430 = vadd.f32 %v395, %v403
      %v431 = vadd.f32 %v396, %v403
      %v432 = vadd.f32 %v397, %v403
      %v433 = vadd.f32 %v398, %v403
      %v434 = vadd.f32 %v399, %v403
      %v435 = vadd.f32 %v400, %v403
      %v436 = vadd.f32 %v401, %v403
      %v437 = vmax.f32 %v405, 0.0
      %v438 = vmax.f32 %v406, 0.0
      %v439 = vmax.f32 %v407, 0.0
      %v440 = vmax.f32 %v408, 0.0
      %v441 = vmax.f32 %v409, 0.0
      %v442 = vmax.f32 %v410, 0.0
      %v443 = vmax.f32 %v411, 0.0
      %v444 = vmax.f32 %v412, 0.0
      %v445 = vmax.f32 %v413, 0.0
      %v446 = vmax.f32 %v414, 0.0
      %v447 = vmax.f32 %v415, 0.0
      %v448 = vmax.f32 %v416, 0.0
      %v449 = vmax.f32 %v417, 0.0
      %v450 = vmax.f32 %v418, 0.0
      %v451 = vmax.f32 %v419, 0.0
      %v452 = vmax.f32 %v420, 0.0
      %v453 = vmax.f32 %v421, 0.0
      %v454 = vmax.f32 %v422, 0.0
      %v455 = vmax.f32 %v423, 0.0
      %v456 = vmax.f32 %v424, 0.0
      %v457 = vmax.f32 %v425, 0.0
      %v458 = vmax.f32 %v426, 0.0
      %v459 = vmax.f32 %v427, 0.0
      %v460 = vmax.f32 %v428, 0.0
      %v461 = vmax.f32 %v429, 0.0
      %v462 = vmax.f32 %v430, 0.0
      %v463 = vmax.f32 %v431, 0.0
      %v464 = vmax.f32 %v432, 0.0
      %v465 = vmax.f32 %v433, 0.0
      %v466 = vmax.f32 %v434, 0.0
      %v467 = vmax.f32 %v435, 0.0
      %v468 = vmax.f32 %v436, 0.0
      %vm469 = vcmask 31744
      %470 = vst.msk [vmem:[#allocation2] sm:$0xff] %vm469, 0.0
      %471 = vst.msk [vmem:[#allocation2 + $0x8] sm:$0xff] %vm469, 0.0
      %vm472 = vcmask 25600
      %473 = vst.msk [vmem:[#allocation2 + $0x10] sm:$0x3] %vm472, 0.0
      %s474 = scalar_lea.vmem [#allocation2], 408
      %475 = vst.msk [vmem:[%s474] sm:$0xff] %vm469, 0.0
      %476 = vst.msk [vmem:[%s474 + $0x8] sm:$0xff] %vm469, 0.0
      %477 = vst.msk [vmem:[%s474 + $0x10] sm:$0x3] %vm472, 0.0
      %vm478 = vcmask 24576
      %479 = vst.msk [vmem:[#allocation2] sm:$0x1] %vm478, 0.0
      %480 = vst.msk [vmem:[#allocation2 + $0x18] sm:$0x1] %vm478, 0.0
      %481 = vst.msk [vmem:[#allocation2 + $0x30] sm:$0x1] %vm478, 0.0
      %482 = vst.msk [vmem:[#allocation2 + $0x48] sm:$0x1] %vm478, 0.0
      %483 = vst.msk [vmem:[#allocation2 + $0x60] sm:$0x1] %vm478, 0.0
      %484 = vst.msk [vmem:[#allocation2 + $0x78] sm:$0x1] %vm478, 0.0
      %485 = vst.msk [vmem:[#allocation2 + $0x90] sm:$0x1] %vm478, 0.0
      %486 = vst.msk [vmem:[#allocation2 + $0xa8] sm:$0x1] %vm478, 0.0
      %487 = vst.msk [vmem:[#allocation2 + $0xc0] sm:$0x1] %vm478, 0.0
      %488 = vst.msk [vmem:[#allocation2 + $0xd8] sm:$0x1] %vm478, 0.0
      %489 = vst.msk [vmem:[#allocation2 + $0xf0] sm:$0x1] %vm478, 0.0
      %490 = vst.msk [vmem:[#allocation2 + $0x108] sm:$0x1] %vm478, 0.0
      %491 = vst.msk [vmem:[#allocation2 + $0x120] sm:$0x1] %vm478, 0.0
      %492 = vst.msk [vmem:[#allocation2 + $0x138] sm:$0x1] %vm478, 0.0
      %493 = vst.msk [vmem:[#allocation2 + $0x150] sm:$0x1] %vm478, 0.0
      %494 = vst.msk [vmem:[#allocation2 + $0x168] sm:$0x1] %vm478, 0.0
      %495 = vst.msk [vmem:[#allocation2 + $0x180] sm:$0x1] %vm478, 0.0
      %496 = vst.msk [vmem:[#allocation2 + $0x198] sm:$0x1] %vm478, 0.0
      %497 = vst.msk [vmem:[#allocation2 + $0x11] sm:$0x1] %vm478, 0.0
      %498 = vst.msk [vmem:[#allocation2 + $0x29] sm:$0x1] %vm478, 0.0
      %499 = vst.msk [vmem:[#allocation2 + $0x41] sm:$0x1] %vm478, 0.0
      %500 = vst.msk [vmem:[#allocation2 + $0x59] sm:$0x1] %vm478, 0.0
      %501 = vst.msk [vmem:[#allocation2 + $0x71] sm:$0x1] %vm478, 0.0
      %502 = vst.msk [vmem:[#allocation2 + $0x89] sm:$0x1] %vm478, 0.0
      %503 = vst.msk [vmem:[#allocation2 + $0xa1] sm:$0x1] %vm478, 0.0
      %504 = vst.msk [vmem:[#allocation2 + $0xb9] sm:$0x1] %vm478, 0.0
      %505 = vst.msk [vmem:[#allocation2 + $0xd1] sm:$0x1] %vm478, 0.0
      %506 = vst.msk [vmem:[#allocation2 + $0xe9] sm:$0x1] %vm478, 0.0
      %507 = vst.msk [vmem:[#allocation2 + $0x101] sm:$0x1] %vm478, 0.0
      %508 = vst.msk [vmem:[#allocation2 + $0x119] sm:$0x1] %vm478, 0.0
      %509 = vst.msk [vmem:[#allocation2 + $0x131] sm:$0x1] %vm478, 0.0
      %510 = vst.msk [vmem:[#allocation2 + $0x149] sm:$0x1] %vm478, 0.0
      %511 = vst.msk [vmem:[#allocation2 + $0x161] sm:$0x1] %vm478, 0.0
      %512 = vst.msk [vmem:[#allocation2 + $0x179] sm:$0x1] %vm478, 0.0
      %513 = vst.msk [vmem:[#allocation2 + $0x191] sm:$0x1] %vm478, 0.0
      %514 = vst.msk [vmem:[#allocation2 + $0x1a9] sm:$0x1] %vm478, 0.0
      %s515 = scalar_lea.vmem [#allocation2], 24
      %516 = vst.msk [vmem:[%s515 + $0x1] sm:$0xff] %vm469, %v437
      %517 = vst.msk [vmem:[%s515 + $0x9] sm:$0xff] %vm469, %v438
      %518 = vst.msk [vmem:[%s515 + $0x19] sm:$0xff] %vm469, %v439
      %519 = vst.msk [vmem:[%s515 + $0x21] sm:$0xff] %vm469, %v440
      %520 = vst.msk [vmem:[%s515 + $0x31] sm:$0xff] %vm469, %v441
      %521 = vst.msk [vmem:[%s515 + $0x39] sm:$0xff] %vm469, %v442
      %522 = vst.msk [vmem:[%s515 + $0x49] sm:$0xff] %vm469, %v443
      %523 = vst.msk [vmem:[%s515 + $0x51] sm:$0xff] %vm469, %v444
      %524 = vst.msk [vmem:[%s515 + $0x61] sm:$0xff] %vm469, %v445
      %525 = vst.msk [vmem:[%s515 + $0x69] sm:$0xff] %vm469, %v446
      %526 = vst.msk [vmem:[%s515 + $0x79] sm:$0xff] %vm469, %v447
      %527 = vst.msk [vmem:[%s515 + $0x81] sm:$0xff] %vm469, %v448
      %528 = vst.msk [vmem:[%s515 + $0x91] sm:$0xff] %vm469, %v449
      %529 = vst.msk [vmem:[%s515 + $0x99] sm:$0xff] %vm469, %v450
      %530 = vst.msk [vmem:[%s515 + $0xa9] sm:$0xff] %vm469, %v451
      %531 = vst.msk [vmem:[%s515 + $0xb1] sm:$0xff] %vm469, %v452
      %532 = vst.msk [vmem:[%s515 + $0xc1] sm:$0xff] %vm469, %v453
      %533 = vst.msk [vmem:[%s515 + $0xc9] sm:$0xff] %vm469, %v454
      %534 = vst.msk [vmem:[%s515 + $0xd9] sm:$0xff] %vm469, %v455
      %535 = vst.msk [vmem:[%s515 + $0xe1] sm:$0xff] %vm469, %v456
      %536 = vst.msk [vmem:[%s515 + $0xf1] sm:$0xff] %vm469, %v457
      %537 = vst.msk [vmem:[%s515 + $0xf9] sm:$0xff] %vm469, %v458
      %538 = vst.msk [vmem:[%s515 + $0x109] sm:$0xff] %vm469, %v459
      %539 = vst.msk [vmem:[%s515 + $0x111] sm:$0xff] %vm469, %v460
      %540 = vst.msk [vmem:[%s515 + $0x121] sm:$0xff] %vm469, %v461
      %541 = vst.msk [vmem:[%s515 + $0x129] sm:$0xff] %vm469, %v462
      %542 = vst.msk [vmem:[%s515 + $0x139] sm:$0xff] %vm469, %v463
      %543 = vst.msk [vmem:[%s515 + $0x141] sm:$0xff] %vm469, %v464
      %544 = vst.msk [vmem:[%s515 + $0x151] sm:$0xff] %vm469, %v465
      %545 = vst.msk [vmem:[%s515 + $0x159] sm:$0xff] %vm469, %v466
      %546 = vst.msk [vmem:[%s515 + $0x169] sm:$0xff] %vm469, %v467
      %547 = vst.msk [vmem:[%s515 + $0x171] sm:$0xff] %vm469, %v468
      %v548 = vld [vmem:[#allocation2] sm:$0xff]
      %v549 = vld [vmem:[#allocation2 + $0x8] sm:$0xff]
      %v550 = vld [vmem:[#allocation2 + $0x18] sm:$0xff]
      %v551 = vld [vmem:[#allocation2 + $0x20] sm:$0xff]
      %v552 = vld [vmem:[#allocation2 + $0x30] sm:$0xff]
      %v553 = vld [vmem:[#allocation2 + $0x38] sm:$0xff]
      %v554 = vld [vmem:[#allocation2 + $0x48] sm:$0xff]
      %v555 = vld [vmem:[#allocation2 + $0x50] sm:$0xff]
      %v556 = vld [vmem:[#allocation2 + $0x60] sm:$0xff]
      %v557 = vld [vmem:[#allocation2 + $0x68] sm:$0xff]
      %v558 = vld [vmem:[#allocation2 + $0x78] sm:$0xff]
      %v559 = vld [vmem:[#allocation2 + $0x80] sm:$0xff]
      %v560 = vld [vmem:[#allocation2 + $0x90] sm:$0xff]
      %v561 = vld [vmem:[#allocation2 + $0x98] sm:$0xff]
      %v562 = vld [vmem:[#allocation2 + $0xa8] sm:$0xff]
      %v563 = vld [vmem:[#allocation2 + $0xb0] sm:$0xff]
      %v564 = vld [vmem:[#allocation2 + $0xc0] sm:$0xff]
      %v565 = vld [vmem:[#allocation2 + $0xc8] sm:$0xff]
      %v566 = vld [vmem:[#allocation2 + $0xd8] sm:$0xff]
      %v567 = vld [vmem:[#allocation2 + $0xe0] sm:$0xff]
      %v568 = vld [vmem:[#allocation2 + $0xf0] sm:$0xff]
      %v569 = vld [vmem:[#allocation2 + $0xf8] sm:$0xff]
      %v570 = vld [vmem:[#allocation2 + $0x108] sm:$0xff]
      %v571 = vld [vmem:[#allocation2 + $0x110] sm:$0xff]
      %v572 = vld [vmem:[#allocation2 + $0x120] sm:$0xff]
      %v573 = vld [vmem:[#allocation2 + $0x128] sm:$0xff]
      %v574 = vld [vmem:[#allocation2 + $0x138] sm:$0xff]
      %v575 = vld [vmem:[#allocation2 + $0x140] sm:$0xff]
      %v576 = vld [vmem:[#allocation2 + $0x150] sm:$0xff]
      %v577 = vld [vmem:[#allocation2 + $0x158] sm:$0xff]
      %v578 = vld [vmem:[#allocation2 + $0x168] sm:$0xff]
      %v579 = vld [vmem:[#allocation2 + $0x170] sm:$0xff]
      %580 = vst.msk [vmem:[#allocation4] sm:$0xff] %vm469, %v548
      %581 = vst.msk [vmem:[#allocation4 + $0x8] sm:$0xff] %vm469, %v549
      %582 = vst.msk [vmem:[#allocation4 + $0x10] sm:$0xff] %vm469, %v550
      %583 = vst.msk [vmem:[#allocation4 + $0x18] sm:$0xff] %vm469, %v551
      %584 = vst.msk [vmem:[#allocation4 + $0x20] sm:$0xff] %vm469, %v552
      %585 = vst.msk [vmem:[#allocation4 + $0x28] sm:$0xff] %vm469, %v553
      %586 = vst.msk [vmem:[#allocation4 + $0x30] sm:$0xff] %vm469, %v554
      %587 = vst.msk [vmem:[#allocation4 + $0x38] sm:$0xff] %vm469, %v555
      %588 = vst.msk [vmem:[#allocation4 + $0x40] sm:$0xff] %vm469, %v556
      %589 = vst.msk [vmem:[#allocation4 + $0x48] sm:$0xff] %vm469, %v557
      %590 = vst.msk [vmem:[#allocation4 + $0x50] sm:$0xff] %vm469, %v558
      %591 = vst.msk [vmem:[#allocation4 + $0x58] sm:$0xff] %vm469, %v559
      %592 = vst.msk [vmem:[#allocation4 + $0x60] sm:$0xff] %vm469, %v560
      %593 = vst.msk [vmem:[#allocation4 + $0x68] sm:$0xff] %vm469, %v561
      %594 = vst.msk [vmem:[#allocation4 + $0x70] sm:$0xff] %vm469, %v562
      %595 = vst.msk [vmem:[#allocation4 + $0x78] sm:$0xff] %vm469, %v563
      %596 = vst.msk [vmem:[#allocation4 + $0x80] sm:$0xff] %vm469, %v564
      %597 = vst.msk [vmem:[#allocation4 + $0x88] sm:$0xff] %vm469, %v565
      %598 = vst.msk [vmem:[#allocation4 + $0x90] sm:$0xff] %vm469, %v566
      %599 = vst.msk [vmem:[#allocation4 + $0x98] sm:$0xff] %vm469, %v567
      %600 = vst.msk [vmem:[#allocation4 + $0xa0] sm:$0xff] %vm469, %v568
      %601 = vst.msk [vmem:[#allocation4 + $0xa8] sm:$0xff] %vm469, %v569
      %602 = vst.msk [vmem:[#allocation4 + $0xb0] sm:$0xff] %vm469, %v570
      %603 = vst.msk [vmem:[#allocation4 + $0xb8] sm:$0xff] %vm469, %v571
      %604 = vst.msk [vmem:[#allocation4 + $0xc0] sm:$0xff] %vm469, %v572
      %605 = vst.msk [vmem:[#allocation4 + $0xc8] sm:$0xff] %vm469, %v573
      %606 = vst.msk [vmem:[#allocation4 + $0xd0] sm:$0xff] %vm469, %v574
      %607 = vst.msk [vmem:[#allocation4 + $0xd8] sm:$0xff] %vm469, %v575
      %608 = vst.msk [vmem:[#allocation4 + $0xe0] sm:$0xff] %vm469, %v576
      %609 = vst.msk [vmem:[#allocation4 + $0xe8] sm:$0xff] %vm469, %v577
      %610 = vst.msk [vmem:[#allocation4 + $0xf0] sm:$0xff] %vm469, %v578
      %611 = vst.msk [vmem:[#allocation4 + $0xf8] sm:$0xff] %vm469, %v579
      %v612 = vld [vmem:[#allocation2 + $0x1] sm:$0xff]
      %v613 = vld [vmem:[#allocation2 + $0x9] sm:$0xff]
      %v614 = vld [vmem:[#allocation2 + $0x19] sm:$0xff]
      %v615 = vld [vmem:[#allocation2 + $0x21] sm:$0xff]
      %v616 = vld [vmem:[#allocation2 + $0x31] sm:$0xff]
      %v617 = vld [vmem:[#allocation2 + $0x39] sm:$0xff]
      %v618 = vld [vmem:[#allocation2 + $0x49] sm:$0xff]
      %v619 = vld [vmem:[#allocation2 + $0x51] sm:$0xff]
      %v620 = vld [vmem:[#allocation2 + $0x61] sm:$0xff]
      %v621 = vld [vmem:[#allocation2 + $0x69] sm:$0xff]
      %v622 = vld [vmem:[#allocation2 + $0x79] sm:$0xff]
      %v623 = vld [vmem:[#allocation2 + $0x81] sm:$0xff]
      %v624 = vld [vmem:[#allocation2 + $0x91] sm:$0xff]
      %v625 = vld [vmem:[#allocation2 + $0x99] sm:$0xff]
      %v626 = vld [vmem:[#allocation2 + $0xa9] sm:$0xff]
      %v627 = vld [vmem:[#allocation2 + $0xb1] sm:$0xff]
      %v628 = vld [vmem:[#allocation2 + $0xc1] sm:$0xff]
      %v629 = vld [vmem:[#allocation2 + $0xc9] sm:$0xff]
      %v630 = vld [vmem:[#allocation2 + $0xd9] sm:$0xff]
      %v631 = vld [vmem:[#allocation2 + $0xe1] sm:$0xff]
      %v632 = vld [vmem:[#allocation2 + $0xf1] sm:$0xff]
      %v633 = vld [vmem:[#allocation2 + $0xf9] sm:$0xff]
      %v634 = vld [vmem:[#allocation2 + $0x109] sm:$0xff]
      %v635 = vld [vmem:[#allocation2 + $0x111] sm:$0xff]
      %v636 = vld [vmem:[#allocation2 + $0x121] sm:$0xff]
      %v637 = vld [vmem:[#allocation2 + $0x129] sm:$0xff]
      %v638 = vld [vmem:[#allocation2 + $0x139] sm:$0xff]
      %v639 = vld [vmem:[#allocation2 + $0x141] sm:$0xff]
      %v640 = vld [vmem:[#allocation2 + $0x151] sm:$0xff]
      %v641 = vld [vmem:[#allocation2 + $0x159] sm:$0xff]
      %v642 = vld [vmem:[#allocation2 + $0x169] sm:$0xff]
      %v643 = vld [vmem:[#allocation2 + $0x171] sm:$0xff]
      %676 = vrot.lane.b32.xlu0 %v612, 4
      %v677 = vpop.permute.xlu0 %676
      %678 = vrot.lane.b32.xlu0 %v613, 4
      %v679 = vpop.permute.xlu0 %678
      %680 = vrot.lane.b32.xlu0 %v614, 4
      %v681 = vpop.permute.xlu0 %680
      %682 = vrot.lane.b32.xlu0 %v615, 4
      %v683 = vpop.permute.xlu0 %682
      %684 = vrot.lane.b32.xlu0 %v616, 4
      %v685 = vpop.permute.xlu0 %684
      %686 = vrot.lane.b32.xlu0 %v617, 4
      %v687 = vpop.permute.xlu0 %686
      %688 = vrot.lane.b32.xlu0 %v618, 4
      %v689 = vpop.permute.xlu0 %688
      %690 = vrot.lane.b32.xlu0 %v619, 4
      %v691 = vpop.permute.xlu0 %690
      %692 = vrot.lane.b32.xlu0 %v620, 4
      %v693 = vpop.permute.xlu0 %692
      %694 = vrot.lane.b32.xlu0 %v621, 4
      %v695 = vpop.permute.xlu0 %694
      %696 = vrot.lane.b32.xlu0 %v622, 4
      %v697 = vpop.permute.xlu0 %696
      %698 = vrot.lane.b32.xlu0 %v623, 4
      %v699 = vpop.permute.xlu0 %698
      %700 = vrot.lane.b32.xlu0 %v624, 4
      %v701 = vpop.permute.xlu0 %700
      %702 = vrot.lane.b32.xlu0 %v625, 4
      %v703 = vpop.permute.xlu0 %702
      %704 = vrot.lane.b32.xlu0 %v626, 4
      %v705 = vpop.permute.xlu0 %704
      %706 = vrot.lane.b32.xlu0 %v627, 4
      %v707 = vpop.permute.xlu0 %706
      %708 = vrot.lane.b32.xlu0 %v628, 4
      %v709 = vpop.permute.xlu0 %708
      %710 = vrot.lane.b32.xlu0 %v629, 4
      %v711 = vpop.permute.xlu0 %710
      %712 = vrot.lane.b32.xlu0 %v630, 4
      %v713 = vpop.permute.xlu0 %712
      %714 = vrot.lane.b32.xlu0 %v631, 4
      %v715 = vpop.permute.xlu0 %714
      %716 = vrot.lane.b32.xlu0 %v632, 4
      %v717 = vpop.permute.xlu0 %716
      %718 = vrot.lane.b32.xlu0 %v633, 4
      %v719 = vpop.permute.xlu0 %718
      %720 = vrot.lane.b32.xlu0 %v634, 4
      %v721 = vpop.permute.xlu0 %720
      %722 = vrot.lane.b32.xlu0 %v635, 4
      %v723 = vpop.permute.xlu0 %722
      %724 = vrot.lane.b32.xlu0 %v636, 4
      %v725 = vpop.permute.xlu0 %724
      %726 = vrot.lane.b32.xlu0 %v637, 4
      %v727 = vpop.permute.xlu0 %726
      %728 = vrot.lane.b32.xlu0 %v638, 4
      %v729 = vpop.permute.xlu0 %728
      %730 = vrot.lane.b32.xlu0 %v639, 4
      %v731 = vpop.permute.xlu0 %730
      %732 = vrot.lane.b32.xlu0 %v640, 4
      %v733 = vpop.permute.xlu0 %732
      %734 = vrot.lane.b32.xlu0 %v641, 4
      %v735 = vpop.permute.xlu0 %734
      %736 = vrot.lane.b32.xlu0 %v642, 4
      %v737 = vpop.permute.xlu0 %736
      %738 = vrot.lane.b32.xlu0 %v643, 4
      %v739 = vpop.permute.xlu0 %738
      %vm772 = vcmask 64544
      %773 = vst.msk [vmem:[#allocation4] sm:$0xff] %vm772, %v677
      %774 = vst.msk [vmem:[#allocation4 + $0x8] sm:$0xff] %vm772, %v679
      %775 = vst.msk [vmem:[#allocation4 + $0x10] sm:$0xff] %vm772, %v681
      %776 = vst.msk [vmem:[#allocation4 + $0x18] sm:$0xff] %vm772, %v683
      %777 = vst.msk [vmem:[#allocation4 + $0x20] sm:$0xff] %vm772, %v685
      %778 = vst.msk [vmem:[#allocation4 + $0x28] sm:$0xff] %vm772, %v687
      %779 = vst.msk [vmem:[#allocation4 + $0x30] sm:$0xff] %vm772, %v689
      %780 = vst.msk [vmem:[#allocation4 + $0x38] sm:$0xff] %vm772, %v691
      %781 = vst.msk [vmem:[#allocation4 + $0x40] sm:$0xff] %vm772, %v693
      %782 = vst.msk [vmem:[#allocation4 + $0x48] sm:$0xff] %vm772, %v695
      %783 = vst.msk [vmem:[#allocation4 + $0x50] sm:$0xff] %vm772, %v697
      %784 = vst.msk [vmem:[#allocation4 + $0x58] sm:$0xff] %vm772, %v699
      %785 = vst.msk [vmem:[#allocation4 + $0x60] sm:$0xff] %vm772, %v701
      %786 = vst.msk [vmem:[#allocation4 + $0x68] sm:$0xff] %vm772, %v703
      %787 = vst.msk [vmem:[#allocation4 + $0x70] sm:$0xff] %vm772, %v705
      %788 = vst.msk [vmem:[#allocation4 + $0x78] sm:$0xff] %vm772, %v707
      %789 = vst.msk [vmem:[#allocation4 + $0x80] sm:$0xff] %vm772, %v709
      %790 = vst.msk [vmem:[#allocation4 + $0x88] sm:$0xff] %vm772, %v711
      %791 = vst.msk [vmem:[#allocation4 + $0x90] sm:$0xff] %vm772, %v713
      %792 = vst.msk [vmem:[#allocation4 + $0x98] sm:$0xff] %vm772, %v715
      %793 = vst.msk [vmem:[#allocation4 + $0xa0] sm:$0xff] %vm772, %v717
      %794 = vst.msk [vmem:[#allocation4 + $0xa8] sm:$0xff] %vm772, %v719
      %795 = vst.msk [vmem:[#allocation4 + $0xb0] sm:$0xff] %vm772, %v721
      %796 = vst.msk [vmem:[#allocation4 + $0xb8] sm:$0xff] %vm772, %v723
      %797 = vst.msk [vmem:[#allocation4 + $0xc0] sm:$0xff] %vm772, %v725
      %798 = vst.msk [vmem:[#allocation4 + $0xc8] sm:$0xff] %vm772, %v727
      %799 = vst.msk [vmem:[#allocation4 + $0xd0] sm:$0xff] %vm772, %v729
      %800 = vst.msk [vmem:[#allocation4 + $0xd8] sm:$0xff] %vm772, %v731
      %801 = vst.msk [vmem:[#allocation4 + $0xe0] sm:$0xff] %vm772, %v733
      %802 = vst.msk [vmem:[#allocation4 + $0xe8] sm:$0xff] %vm772, %v735
      %803 = vst.msk [vmem:[#allocation4 + $0xf0] sm:$0xff] %vm772, %v737
      %804 = vst.msk [vmem:[#allocation4 + $0xf8] sm:$0xff] %vm772, %v739
      %v805 = vld [vmem:[#allocation2 + $0x2] sm:$0xff]
      %v806 = vld [vmem:[#allocation2 + $0xa] sm:$0xff]
      %v807 = vld [vmem:[#allocation2 + $0x1a] sm:$0xff]
      %v808 = vld [vmem:[#allocation2 + $0x22] sm:$0xff]
      %v809 = vld [vmem:[#allocation2 + $0x32] sm:$0xff]
      %v810 = vld [vmem:[#allocation2 + $0x3a] sm:$0xff]
      %v811 = vld [vmem:[#allocation2 + $0x4a] sm:$0xff]
      %v812 = vld [vmem:[#allocation2 + $0x52] sm:$0xff]
      %v813 = vld [vmem:[#allocation2 + $0x62] sm:$0xff]
      %v814 = vld [vmem:[#allocation2 + $0x6a] sm:$0xff]
      %v815 = vld [vmem:[#allocation2 + $0x7a] sm:$0xff]
      %v816 = vld [vmem:[#allocation2 + $0x82] sm:$0xff]
      %v817 = vld [vmem:[#allocation2 + $0x92] sm:$0xff]
      %v818 = vld [vmem:[#allocation2 + $0x9a] sm:$0xff]
      %v819 = vld [vmem:[#allocation2 + $0xaa] sm:$0xff]
      %v820 = vld [vmem:[#allocation2 + $0xb2] sm:$0xff]
      %v821 = vld [vmem:[#allocation2 + $0xc2] sm:$0xff]
      %v822 = vld [vmem:[#allocation2 + $0xca] sm:$0xff]
      %v823 = vld [vmem:[#allocation2 + $0xda] sm:$0xff]
      %v824 = vld [vmem:[#allocation2 + $0xe2] sm:$0xff]
      %v825 = vld [vmem:[#allocation2 + $0xf2] sm:$0xff]
      %v826 = vld [vmem:[#allocation2 + $0xfa] sm:$0xff]
      %v827 = vld [vmem:[#allocation2 + $0x10a] sm:$0xff]
      %v828 = vld [vmem:[#allocation2 + $0x112] sm:$0xff]
      %v829 = vld [vmem:[#allocation2 + $0x122] sm:$0xff]
      %v830 = vld [vmem:[#allocation2 + $0x12a] sm:$0xff]
      %v831 = vld [vmem:[#allocation2 + $0x13a] sm:$0xff]
      %v832 = vld [vmem:[#allocation2 + $0x142] sm:$0xff]
      %v833 = vld [vmem:[#allocation2 + $0x152] sm:$0xff]
      %v834 = vld [vmem:[#allocation2 + $0x15a] sm:$0xff]
      %v835 = vld [vmem:[#allocation2 + $0x16a] sm:$0xff]
      %v836 = vld [vmem:[#allocation2 + $0x172] sm:$0xff]
      %869 = vrot.lane.b32.xlu0 %v805, 8
      %v870 = vpop.permute.xlu0 %869
      %871 = vrot.lane.b32.xlu0 %v806, 8
      %v872 = vpop.permute.xlu0 %871
      %873 = vrot.lane.b32.xlu0 %v807, 8
      %v874 = vpop.permute.xlu0 %873
      %875 = vrot.lane.b32.xlu0 %v808, 8
      %v876 = vpop.permute.xlu0 %875
      %877 = vrot.lane.b32.xlu0 %v809, 8
      %v878 = vpop.permute.xlu0 %877
      %879 = vrot.lane.b32.xlu0 %v810, 8
      %v880 = vpop.permute.xlu0 %879
      %881 = vrot.lane.b32.xlu0 %v811, 8
      %v882 = vpop.permute.xlu0 %881
      %883 = vrot.lane.b32.xlu0 %v812, 8
      %v884 = vpop.permute.xlu0 %883
      %885 = vrot.lane.b32.xlu0 %v813, 8
      %v886 = vpop.permute.xlu0 %885
      %887 = vrot.lane.b32.xlu0 %v814, 8
      %v888 = vpop.permute.xlu0 %887
      %889 = vrot.lane.b32.xlu0 %v815, 8
      %v890 = vpop.permute.xlu0 %889
      %891 = vrot.lane.b32.xlu0 %v816, 8
      %v892 = vpop.permute.xlu0 %891
      %893 = vrot.lane.b32.xlu0 %v817, 8
      %v894 = vpop.permute.xlu0 %893
      %895 = vrot.lane.b32.xlu0 %v818, 8
      %v896 = vpop.permute.xlu0 %895
      %897 = vrot.lane.b32.xlu0 %v819, 8
      %v898 = vpop.permute.xlu0 %897
      %899 = vrot.lane.b32.xlu0 %v820, 8
      %v900 = vpop.permute.xlu0 %899
      %901 = vrot.lane.b32.xlu0 %v821, 8
      %v902 = vpop.permute.xlu0 %901
      %903 = vrot.lane.b32.xlu0 %v822, 8
      %v904 = vpop.permute.xlu0 %903
      %905 = vrot.lane.b32.xlu0 %v823, 8
      %v906 = vpop.permute.xlu0 %905
      %907 = vrot.lane.b32.xlu0 %v824, 8
      %v908 = vpop.permute.xlu0 %907
      %909 = vrot.lane.b32.xlu0 %v825, 8
      %v910 = vpop.permute.xlu0 %909
      %911 = vrot.lane.b32.xlu0 %v826, 8
      %v912 = vpop.permute.xlu0 %911
      %913 = vrot.lane.b32.xlu0 %v827, 8
      %v914 = vpop.permute.xlu0 %913
      %915 = vrot.lane.b32.xlu0 %v828, 8
      %v916 = vpop.permute.xlu0 %915
      %917 = vrot.lane.b32.xlu0 %v829, 8
      %v918 = vpop.permute.xlu0 %917
      %919 = vrot.lane.b32.xlu0 %v830, 8
      %v920 = vpop.permute.xlu0 %919
      %921 = vrot.lane.b32.xlu0 %v831, 8
      %v922 = vpop.permute.xlu0 %921
      %923 = vrot.lane.b32.xlu0 %v832, 8
      %v924 = vpop.permute.xlu0 %923
      %925 = vrot.lane.b32.xlu0 %v833, 8
      %v926 = vpop.permute.xlu0 %925
      %927 = vrot.lane.b32.xlu0 %v834, 8
      %v928 = vpop.permute.xlu0 %927
      %929 = vrot.lane.b32.xlu0 %v835, 8
      %v930 = vpop.permute.xlu0 %929
      %931 = vrot.lane.b32.xlu0 %v836, 8
      %v932 = vpop.permute.xlu0 %931
      %vm965 = vcmask 97344
      %966 = vst.msk [vmem:[#allocation4] sm:$0xff] %vm965, %v870
      %967 = vst.msk [vmem:[#allocation4 + $0x8] sm:$0xff] %vm965, %v872
      %968 = vst.msk [vmem:[#allocation4 + $0x10] sm:$0xff] %vm965, %v874
      %969 = vst.msk [vmem:[#allocation4 + $0x18] sm:$0xff] %vm965, %v876
      %970 = vst.msk [vmem:[#allocation4 + $0x20] sm:$0xff] %vm965, %v878
      %971 = vst.msk [vmem:[#allocation4 + $0x28] sm:$0xff] %vm965, %v880
      %972 = vst.msk [vmem:[#allocation4 + $0x30] sm:$0xff] %vm965, %v882
      %973 = vst.msk [vmem:[#allocation4 + $0x38] sm:$0xff] %vm965, %v884
      %974 = vst.msk [vmem:[#allocation4 + $0x40] sm:$0xff] %vm965, %v886
      %975 = vst.msk [vmem:[#allocation4 + $0x48] sm:$0xff] %vm965, %v888
      %976 = vst.msk [vmem:[#allocation4 + $0x50] sm:$0xff] %vm965, %v890
      %977 = vst.msk [vmem:[#allocation4 + $0x58] sm:$0xff] %vm965, %v892
      %978 = vst.msk [vmem:[#allocation4 + $0x60] sm:$0xff] %vm965, %v894
      %979 = vst.msk [vmem:[#allocation4 + $0x68] sm:$0xff] %vm965, %v896
      %980 = vst.msk [vmem:[#allocation4 + $0x70] sm:$0xff] %vm965, %v898
      %981 = vst.msk [vmem:[#allocation4 + $0x78] sm:$0xff] %vm965, %v900
      %982 = vst.msk [vmem:[#allocation4 + $0x80] sm:$0xff] %vm965, %v902
      %983 = vst.msk [vmem:[#allocation4 + $0x88] sm:$0xff] %vm965, %v904
      %984 = vst.msk [vmem:[#allocation4 + $0x90] sm:$0xff] %vm965, %v906
      %985 = vst.msk [vmem:[#allocation4 + $0x98] sm:$0xff] %vm965, %v908
      %986 = vst.msk [vmem:[#allocation4 + $0xa0] sm:$0xff] %vm965, %v910
      %987 = vst.msk [vmem:[#allocation4 + $0xa8] sm:$0xff] %vm965, %v912
      %988 = vst.msk [vmem:[#allocation4 + $0xb0] sm:$0xff] %vm965, %v914
      %989 = vst.msk [vmem:[#allocation4 + $0xb8] sm:$0xff] %vm965, %v916
      %990 = vst.msk [vmem:[#allocation4 + $0xc0] sm:$0xff] %vm965, %v918
      %991 = vst.msk [vmem:[#allocation4 + $0xc8] sm:$0xff] %vm965, %v920
      %992 = vst.msk [vmem:[#allocation4 + $0xd0] sm:$0xff] %vm965, %v922
      %993 = vst.msk [vmem:[#allocation4 + $0xd8] sm:$0xff] %vm965, %v924
      %994 = vst.msk [vmem:[#allocation4 + $0xe0] sm:$0xff] %vm965, %v926
      %995 = vst.msk [vmem:[#allocation4 + $0xe8] sm:$0xff] %vm965, %v928
      %996 = vst.msk [vmem:[#allocation4 + $0xf0] sm:$0xff] %vm965, %v930
      %997 = vst.msk [vmem:[#allocation4 + $0xf8] sm:$0xff] %vm965, %v932
      %v998 = vld [vmem:[%s515] sm:$0xff]
      %v999 = vld [vmem:[%s515 + $0x8] sm:$0xff]
      %v1000 = vld [vmem:[%s515 + $0x18] sm:$0xff]
      %v1001 = vld [vmem:[%s515 + $0x20] sm:$0xff]
      %v1002 = vld [vmem:[%s515 + $0x30] sm:$0xff]
      %v1003 = vld [vmem:[%s515 + $0x38] sm:$0xff]
      %v1004 = vld [vmem:[%s515 + $0x48] sm:$0xff]
      %v1005 = vld [vmem:[%s515 + $0x50] sm:$0xff]
      %v1006 = vld [vmem:[%s515 + $0x60] sm:$0xff]
      %v1007 = vld [vmem:[%s515 + $0x68] sm:$0xff]
      %v1008 = vld [vmem:[%s515 + $0x78] sm:$0xff]
      %v1009 = vld [vmem:[%s515 + $0x80] sm:$0xff]
      %v1010 = vld [vmem:[%s515 + $0x90] sm:$0xff]
      %v1011 = vld [vmem:[%s515 + $0x98] sm:$0xff]
      %v1012 = vld [vmem:[%s515 + $0xa8] sm:$0xff]
      %v1013 = vld [vmem:[%s515 + $0xb0] sm:$0xff]
      %v1014 = vld [vmem:[%s515 + $0xc0] sm:$0xff]
      %v1015 = vld [vmem:[%s515 + $0xc8] sm:$0xff]
      %v1016 = vld [vmem:[%s515 + $0xd8] sm:$0xff]
      %v1017 = vld [vmem:[%s515 + $0xe0] sm:$0xff]
      %v1018 = vld [vmem:[%s515 + $0xf0] sm:$0xff]
      %v1019 = vld [vmem:[%s515 + $0xf8] sm:$0xff]
      %v1020 = vld [vmem:[%s515 + $0x108] sm:$0xff]
      %v1021 = vld [vmem:[%s515 + $0x110] sm:$0xff]
      %v1022 = vld [vmem:[%s515 + $0x120] sm:$0xff]
      %v1023 = vld [vmem:[%s515 + $0x128] sm:$0xff]
      %v1024 = vld [vmem:[%s515 + $0x138] sm:$0xff]
      %v1025 = vld [vmem:[%s515 + $0x140] sm:$0xff]
      %v1026 = vld [vmem:[%s515 + $0x150] sm:$0xff]
      %v1027 = vld [vmem:[%s515 + $0x158] sm:$0xff]
      %v1028 = vld [vmem:[%s515 + $0x168] sm:$0xff]
      %v1029 = vld [vmem:[%s515 + $0x170] sm:$0xff]
      %1062 = vrot.lane.b32.xlu0 %v998, 12
      %v1063 = vpop.permute.xlu0 %1062
      %1064 = vrot.lane.b32.xlu0 %v999, 12
      %v1065 = vpop.permute.xlu0 %1064
      %1066 = vrot.lane.b32.xlu0 %v1000, 12
      %v1067 = vpop.permute.xlu0 %1066
      %1068 = vrot.lane.b32.xlu0 %v1001, 12
      %v1069 = vpop.permute.xlu0 %1068
      %1070 = vrot.lane.b32.xlu0 %v1002, 12
      %v1071 = vpop.permute.xlu0 %1070
      %1072 = vrot.lane.b32.xlu0 %v1003, 12
      %v1073 = vpop.permute.xlu0 %1072
      %1074 = vrot.lane.b32.xlu0 %v1004, 12
      %v1075 = vpop.permute.xlu0 %1074
      %1076 = vrot.lane.b32.xlu0 %v1005, 12
      %v1077 = vpop.permute.xlu0 %1076
      %1078 = vrot.lane.b32.xlu0 %v1006, 12
      %v1079 = vpop.permute.xlu0 %1078
      %1080 = vrot.lane.b32.xlu0 %v1007, 12
      %v1081 = vpop.permute.xlu0 %1080
      %1082 = vrot.lane.b32.xlu0 %v1008, 12
      %v1083 = vpop.permute.xlu0 %1082
      %1084 = vrot.lane.b32.xlu0 %v1009, 12
      %v1085 = vpop.permute.xlu0 %1084
      %1086 = vrot.lane.b32.xlu0 %v1010, 12
      %v1087 = vpop.permute.xlu0 %1086
      %1088 = vrot.lane.b32.xlu0 %v1011, 12
      %v1089 = vpop.permute.xlu0 %1088
      %1090 = vrot.lane.b32.xlu0 %v1012, 12
      %v1091 = vpop.permute.xlu0 %1090
      %1092 = vrot.lane.b32.xlu0 %v1013, 12
      %v1093 = vpop.permute.xlu0 %1092
      %1094 = vrot.lane.b32.xlu0 %v1014, 12
      %v1095 = vpop.permute.xlu0 %1094
      %1096 = vrot.lane.b32.xlu0 %v1015, 12
      %v1097 = vpop.permute.xlu0 %1096
      %1098 = vrot.lane.b32.xlu0 %v1016, 12
      %v1099 = vpop.permute.xlu0 %1098
      %1100 = vrot.lane.b32.xlu0 %v1017, 12
      %v1101 = vpop.permute.xlu0 %1100
      %1102 = vrot.lane.b32.xlu0 %v1018, 12
      %v1103 = vpop.permute.xlu0 %1102
      %1104 = vrot.lane.b32.xlu0 %v1019, 12
      %v1105 = vpop.permute.xlu0 %1104
      %1106 = vrot.lane.b32.xlu0 %v1020, 12
      %v1107 = vpop.permute.xlu0 %1106
      %1108 = vrot.lane.b32.xlu0 %v1021, 12
      %v1109 = vpop.permute.xlu0 %1108
      %1110 = vrot.lane.b32.xlu0 %v1022, 12
      %v1111 = vpop.permute.xlu0 %1110
      %1112 = vrot.lane.b32.xlu0 %v1023, 12
      %v1113 = vpop.permute.xlu0 %1112
      %1114 = vrot.lane.b32.xlu0 %v1024, 12
      %v1115 = vpop.permute.xlu0 %1114
      %1116 = vrot.lane.b32.xlu0 %v1025, 12
      %v1117 = vpop.permute.xlu0 %1116
      %1118 = vrot.lane.b32.xlu0 %v1026, 12
      %v1119 = vpop.permute.xlu0 %1118
      %1120 = vrot.lane.b32.xlu0 %v1027, 12
      %v1121 = vpop.permute.xlu0 %1120
      %1122 = vrot.lane.b32.xlu0 %v1028, 12
      %v1123 = vpop.permute.xlu0 %1122
      %1124 = vrot.lane.b32.xlu0 %v1029, 12
      %v1125 = vpop.permute.xlu0 %1124
      %vm1158 = vcmask 130144
      %1159 = vst.msk [vmem:[#allocation4] sm:$0xff] %vm1158, %v1063
      %1160 = vst.msk [vmem:[#allocation4 + $0x8] sm:$0xff] %vm1158, %v1065
      %1161 = vst.msk [vmem:[#allocation4 + $0x10] sm:$0xff] %vm1158, %v1067
      %1162 = vst.msk [vmem:[#allocation4 + $0x18] sm:$0xff] %vm1158, %v1069
      %1163 = vst.msk [vmem:[#allocation4 + $0x20] sm:$0xff] %vm1158, %v1071
      %1164 = vst.msk [vmem:[#allocation4 + $0x28] sm:$0xff] %vm1158, %v1073
      %1165 = vst.msk [vmem:[#allocation4 + $0x30] sm:$0xff] %vm1158, %v1075
      %1166 = vst.msk [vmem:[#allocation4 + $0x38] sm:$0xff] %vm1158, %v1077
      %1167 = vst.msk [vmem:[#allocation4 + $0x40] sm:$0xff] %vm1158, %v1079
      %1168 = vst.msk [vmem:[#allocation4 + $0x48] sm:$0xff] %vm1158, %v1081
      %1169 = vst.msk [vmem:[#allocation4 + $0x50] sm:$0xff] %vm1158, %v1083
      %1170 = vst.msk [vmem:[#allocation4 + $0x58] sm:$0xff] %vm1158, %v1085
      %1171 = vst.msk [vmem:[#allocation4 + $0x60] sm:$0xff] %vm1158, %v1087
      %1172 = vst.msk [vmem:[#allocation4 + $0x68] sm:$0xff] %vm1158, %v1089
      %1173 = vst.msk [vmem:[#allocation4 + $0x70] sm:$0xff] %vm1158, %v1091
      %1174 = vst.msk [vmem:[#allocation4 + $0x78] sm:$0xff] %vm1158, %v1093
      %1175 = vst.msk [vmem:[#allocation4 + $0x80] sm:$0xff] %vm1158, %v1095
      %1176 = vst.msk [vmem:[#allocation4 + $0x88] sm:$0xff] %vm1158, %v1097
      %1177 = vst.msk [vmem:[#allocation4 + $0x90] sm:$0xff] %vm1158, %v1099
      %1178 = vst.msk [vmem:[#allocation4 + $0x98] sm:$0xff] %vm1158, %v1101
      %1179 = vst.msk [vmem:[#allocation4 + $0xa0] sm:$0xff] %vm1158, %v1103
      %1180 = vst.msk [vmem:[#allocation4 + $0xa8] sm:$0xff] %vm1158, %v1105
      %1181 = vst.msk [vmem:[#allocation4 + $0xb0] sm:$0xff] %vm1158, %v1107
      %1182 = vst.msk [vmem:[#allocation4 + $0xb8] sm:$0xff] %vm1158, %v1109
      %1183 = vst.msk [vmem:[#allocation4 + $0xc0] sm:$0xff] %vm1158, %v1111
      %1184 = vst.msk [vmem:[#allocation4 + $0xc8] sm:$0xff] %vm1158, %v1113
      %1185 = vst.msk [vmem:[#allocation4 + $0xd0] sm:$0xff] %vm1158, %v1115
      %1186 = vst.msk [vmem:[#allocation4 + $0xd8] sm:$0xff] %vm1158, %v1117
      %1187 = vst.msk [vmem:[#allocation4 + $0xe0] sm:$0xff] %vm1158, %v1119
      %1188 = vst.msk [vmem:[#allocation4 + $0xe8] sm:$0xff] %vm1158, %v1121
      %1189 = vst.msk [vmem:[#allocation4 + $0xf0] sm:$0xff] %vm1158, %v1123
      %1190 = vst.msk [vmem:[#allocation4 + $0xf8] sm:$0xff] %vm1158, %v1125
      %v1191 = vld [vmem:[%s515 + $0x1] sm:$0xff]
      %v1192 = vld [vmem:[%s515 + $0x9] sm:$0xff]
      %v1193 = vld [vmem:[%s515 + $0x19] sm:$0xff]
      %v1194 = vld [vmem:[%s515 + $0x21] sm:$0xff]
      %v1195 = vld [vmem:[%s515 + $0x31] sm:$0xff]
      %v1196 = vld [vmem:[%s515 + $0x39] sm:$0xff]
      %v1197 = vld [vmem:[%s515 + $0x49] sm:$0xff]
      %v1198 = vld [vmem:[%s515 + $0x51] sm:$0xff]
      %v1199 = vld [vmem:[%s515 + $0x61] sm:$0xff]
      %v1200 = vld [vmem:[%s515 + $0x69] sm:$0xff]
      %v1201 = vld [vmem:[%s515 + $0x79] sm:$0xff]
      %v1202 = vld [vmem:[%s515 + $0x81] sm:$0xff]
      %v1203 = vld [vmem:[%s515 + $0x91] sm:$0xff]
      %v1204 = vld [vmem:[%s515 + $0x99] sm:$0xff]
      %v1205 = vld [vmem:[%s515 + $0xa9] sm:$0xff]
      %v1206 = vld [vmem:[%s515 + $0xb1] sm:$0xff]
      %v1207 = vld [vmem:[%s515 + $0xc1] sm:$0xff]
      %v1208 = vld [vmem:[%s515 + $0xc9] sm:$0xff]
      %v1209 = vld [vmem:[%s515 + $0xd9] sm:$0xff]
      %v1210 = vld [vmem:[%s515 + $0xe1] sm:$0xff]
      %v1211 = vld [vmem:[%s515 + $0xf1] sm:$0xff]
      %v1212 = vld [vmem:[%s515 + $0xf9] sm:$0xff]
      %v1213 = vld [vmem:[%s515 + $0x109] sm:$0xff]
      %v1214 = vld [vmem:[%s515 + $0x111] sm:$0xff]
      %v1215 = vld [vmem:[%s515 + $0x121] sm:$0xff]
      %v1216 = vld [vmem:[%s515 + $0x129] sm:$0xff]
      %v1217 = vld [vmem:[%s515 + $0x139] sm:$0xff]
      %v1218 = vld [vmem:[%s515 + $0x141] sm:$0xff]
      %v1219 = vld [vmem:[%s515 + $0x151] sm:$0xff]
      %v1220 = vld [vmem:[%s515 + $0x159] sm:$0xff]
      %v1221 = vld [vmem:[%s515 + $0x169] sm:$0xff]
      %v1222 = vld [vmem:[%s515 + $0x171] sm:$0xff]
      %1255 = vrot.lane.b32.xlu0 %v1191, 16
      %v1256 = vpop.permute.xlu0 %1255
      %1257 = vrot.lane.b32.xlu0 %v1192, 16
      %v1258 = vpop.permute.xlu0 %1257
      %1259 = vrot.lane.b32.xlu0 %v1193, 16
      %v1260 = vpop.permute.xlu0 %1259
      %1261 = vrot.lane.b32.xlu0 %v1194, 16
      %v1262 = vpop.permute.xlu0 %1261
      %1263 = vrot.lane.b32.xlu0 %v1195, 16
      %v1264 = vpop.permute.xlu0 %1263
      %1265 = vrot.lane.b32.xlu0 %v1196, 16
      %v1266 = vpop.permute.xlu0 %1265
      %1267 = vrot.lane.b32.xlu0 %v1197, 16
      %v1268 = vpop.permute.xlu0 %1267
      %1269 = vrot.lane.b32.xlu0 %v1198, 16
      %v1270 = vpop.permute.xlu0 %1269
      %1271 = vrot.lane.b32.xlu0 %v1199, 16
      %v1272 = vpop.permute.xlu0 %1271
      %1273 = vrot.lane.b32.xlu0 %v1200, 16
      %v1274 = vpop.permute.xlu0 %1273
      %1275 = vrot.lane.b32.xlu0 %v1201, 16
      %v1276 = vpop.permute.xlu0 %1275
      %1277 = vrot.lane.b32.xlu0 %v1202, 16
      %v1278 = vpop.permute.xlu0 %1277
      %1279 = vrot.lane.b32.xlu0 %v1203, 16
      %v1280 = vpop.permute.xlu0 %1279
      %1281 = vrot.lane.b32.xlu0 %v1204, 16
      %v1282 = vpop.permute.xlu0 %1281
      %1283 = vrot.lane.b32.xlu0 %v1205, 16
      %v1284 = vpop.permute.xlu0 %1283
      %1285 = vrot.lane.b32.xlu0 %v1206, 16
      %v1286 = vpop.permute.xlu0 %1285
      %1287 = vrot.lane.b32.xlu0 %v1207, 16
      %v1288 = vpop.permute.xlu0 %1287
      %1289 = vrot.lane.b32.xlu0 %v1208, 16
      %v1290 = vpop.permute.xlu0 %1289
      %1291 = vrot.lane.b32.xlu0 %v1209, 16
      %v1292 = vpop.permute.xlu0 %1291
      %1293 = vrot.lane.b32.xlu0 %v1210, 16
      %v1294 = vpop.permute.xlu0 %1293
      %1295 = vrot.lane.b32.xlu0 %v1211, 16
      %v1296 = vpop.permute.xlu0 %1295
      %1297 = vrot.lane.b32.xlu0 %v1212, 16
      %v1298 = vpop.permute.xlu0 %1297
      %1299 = vrot.lane.b32.xlu0 %v1213, 16
      %v1300 = vpop.permute.xlu0 %1299
      %1301 = vrot.lane.b32.xlu0 %v1214, 16
      %v1302 = vpop.permute.xlu0 %1301
      %1303 = vrot.lane.b32.xlu0 %v1215, 16
      %v1304 = vpop.permute.xlu0 %1303
      %1305 = vrot.lane.b32.xlu0 %v1216, 16
      %v1306 = vpop.permute.xlu0 %1305
      %1307 = vrot.lane.b32.xlu0 %v1217, 16
      %v1308 = vpop.permute.xlu0 %1307
      %1309 = vrot.lane.b32.xlu0 %v1218, 16
      %v1310 = vpop.permute.xlu0 %1309
      %1311 = vrot.lane.b32.xlu0 %v1219, 16
      %v1312 = vpop.permute.xlu0 %1311
      %1313 = vrot.lane.b32.xlu0 %v1220, 16
      %v1314 = vpop.permute.xlu0 %1313
      %1315 = vrot.lane.b32.xlu0 %v1221, 16
      %v1316 = vpop.permute.xlu0 %1315
      %1317 = vrot.lane.b32.xlu0 %v1222, 16
      %v1318 = vpop.permute.xlu0 %1317
      %vm1351 = vcmask 162944
      %1352 = vst.msk [vmem:[#allocation4] sm:$0xff] %vm1351, %v1256
      %1353 = vst.msk [vmem:[#allocation4 + $0x8] sm:$0xff] %vm1351, %v1258
      %1354 = vst.msk [vmem:[#allocation4 + $0x10] sm:$0xff] %vm1351, %v1260
      %1355 = vst.msk [vmem:[#allocation4 + $0x18] sm:$0xff] %vm1351, %v1262
      %1356 = vst.msk [vmem:[#allocation4 + $0x20] sm:$0xff] %vm1351, %v1264
      %1357 = vst.msk [vmem:[#allocation4 + $0x28] sm:$0xff] %vm1351, %v1266
      %1358 = vst.msk [vmem:[#allocation4 + $0x30] sm:$0xff] %vm1351, %v1268
      %1359 = vst.msk [vmem:[#allocation4 + $0x38] sm:$0xff] %vm1351, %v1270
      %1360 = vst.msk [vmem:[#allocation4 + $0x40] sm:$0xff] %vm1351, %v1272
      %1361 = vst.msk [vmem:[#allocation4 + $0x48] sm:$0xff] %vm1351, %v1274
      %1362 = vst.msk [vmem:[#allocation4 + $0x50] sm:$0xff] %vm1351, %v1276
      %1363 = vst.msk [vmem:[#allocation4 + $0x58] sm:$0xff] %vm1351, %v1278
      %1364 = vst.msk [vmem:[#allocation4 + $0x60] sm:$0xff] %vm1351, %v1280
      %1365 = vst.msk [vmem:[#allocation4 + $0x68] sm:$0xff] %vm1351, %v1282
      %1366 = vst.msk [vmem:[#allocation4 + $0x70] sm:$0xff] %vm1351, %v1284
      %1367 = vst.msk [vmem:[#allocation4 + $0x78] sm:$0xff] %vm1351, %v1286
      %1368 = vst.msk [vmem:[#allocation4 + $0x80] sm:$0xff] %vm1351, %v1288
      %1369 = vst.msk [vmem:[#allocation4 + $0x88] sm:$0xff] %vm1351, %v1290
      %1370 = vst.msk [vmem:[#allocation4 + $0x90] sm:$0xff] %vm1351, %v1292
      %1371 = vst.msk [vmem:[#allocation4 + $0x98] sm:$0xff] %vm1351, %v1294
      %1372 = vst.msk [vmem:[#allocation4 + $0xa0] sm:$0xff] %vm1351, %v1296
      %1373 = vst.msk [vmem:[#allocation4 + $0xa8] sm:$0xff] %vm1351, %v1298
      %1374 = vst.msk [vmem:[#allocation4 + $0xb0] sm:$0xff] %vm1351, %v1300
      %1375 = vst.msk [vmem:[#allocation4 + $0xb8] sm:$0xff] %vm1351, %v1302
      %1376 = vst.msk [vmem:[#allocation4 + $0xc0] sm:$0xff] %vm1351, %v1304
      %1377 = vst.msk [vmem:[#allocation4 + $0xc8] sm:$0xff] %vm1351, %v1306
      %1378 = vst.msk [vmem:[#allocation4 + $0xd0] sm:$0xff] %vm1351, %v1308
      %1379 = vst.msk [vmem:[#allocation4 + $0xd8] sm:$0xff] %vm1351, %v1310
      %1380 = vst.msk [vmem:[#allocation4 + $0xe0] sm:$0xff] %vm1351, %v1312
      %1381 = vst.msk [vmem:[#allocation4 + $0xe8] sm:$0xff] %vm1351, %v1314
      %1382 = vst.msk [vmem:[#allocation4 + $0xf0] sm:$0xff] %vm1351, %v1316
      %1383 = vst.msk [vmem:[#allocation4 + $0xf8] sm:$0xff] %vm1351, %v1318
      %v1384 = vld [vmem:[%s515 + $0x2] sm:$0xff]
      %v1385 = vld [vmem:[%s515 + $0xa] sm:$0xff]
      %v1386 = vld [vmem:[%s515 + $0x1a] sm:$0xff]
      %v1387 = vld [vmem:[%s515 + $0x22] sm:$0xff]
      %v1388 = vld [vmem:[%s515 + $0x32] sm:$0xff]
      %v1389 = vld [vmem:[%s515 + $0x3a] sm:$0xff]
      %v1390 = vld [vmem:[%s515 + $0x4a] sm:$0xff]
      %v1391 = vld [vmem:[%s515 + $0x52] sm:$0xff]
      %v1392 = vld [vmem:[%s515 + $0x62] sm:$0xff]
      %v1393 = vld [vmem:[%s515 + $0x6a] sm:$0xff]
      %v1394 = vld [vmem:[%s515 + $0x7a] sm:$0xff]
      %v1395 = vld [vmem:[%s515 + $0x82] sm:$0xff]
      %v1396 = vld [vmem:[%s515 + $0x92] sm:$0xff]
      %v1397 = vld [vmem:[%s515 + $0x9a] sm:$0xff]
      %v1398 = vld [vmem:[%s515 + $0xaa] sm:$0xff]
      %v1399 = vld [vmem:[%s515 + $0xb2] sm:$0xff]
      %v1400 = vld [vmem:[%s515 + $0xc2] sm:$0xff]
      %v1401 = vld [vmem:[%s515 + $0xca] sm:$0xff]
      %v1402 = vld [vmem:[%s515 + $0xda] sm:$0xff]
      %v1403 = vld [vmem:[%s515 + $0xe2] sm:$0xff]
      %v1404 = vld [vmem:[%s515 + $0xf2] sm:$0xff]
      %v1405 = vld [vmem:[%s515 + $0xfa] sm:$0xff]
      %v1406 = vld [vmem:[%s515 + $0x10a] sm:$0xff]
      %v1407 = vld [vmem:[%s515 + $0x112] sm:$0xff]
      %v1408 = vld [vmem:[%s515 + $0x122] sm:$0xff]
      %v1409 = vld [vmem:[%s515 + $0x12a] sm:$0xff]
      %v1410 = vld [vmem:[%s515 + $0x13a] sm:$0xff]
      %v1411 = vld [vmem:[%s515 + $0x142] sm:$0xff]
      %v1412 = vld [vmem:[%s515 + $0x152] sm:$0xff]
      %v1413 = vld [vmem:[%s515 + $0x15a] sm:$0xff]
      %v1414 = vld [vmem:[%s515 + $0x16a] sm:$0xff]
      %v1415 = vld [vmem:[%s515 + $0x172] sm:$0xff]
      %1448 = vrot.lane.b32.xlu0 %v1384, 20
      %v1449 = vpop.permute.xlu0 %1448
      %1450 = vrot.lane.b32.xlu0 %v1385, 20
      %v1451 = vpop.permute.xlu0 %1450
      %1452 = vrot.lane.b32.xlu0 %v1386, 20
      %v1453 = vpop.permute.xlu0 %1452
      %1454 = vrot.lane.b32.xlu0 %v1387, 20
      %v1455 = vpop.permute.xlu0 %1454
      %1456 = vrot.lane.b32.xlu0 %v1388, 20
      %v1457 = vpop.permute.xlu0 %1456
      %1458 = vrot.lane.b32.xlu0 %v1389, 20
      %v1459 = vpop.permute.xlu0 %1458
      %1460 = vrot.lane.b32.xlu0 %v1390, 20
      %v1461 = vpop.permute.xlu0 %1460
      %1462 = vrot.lane.b32.xlu0 %v1391, 20
      %v1463 = vpop.permute.xlu0 %1462
      %1464 = vrot.lane.b32.xlu0 %v1392, 20
      %v1465 = vpop.permute.xlu0 %1464
      %1466 = vrot.lane.b32.xlu0 %v1393, 20
      %v1467 = vpop.permute.xlu0 %1466
      %1468 = vrot.lane.b32.xlu0 %v1394, 20
      %v1469 = vpop.permute.xlu0 %1468
      %1470 = vrot.lane.b32.xlu0 %v1395, 20
      %v1471 = vpop.permute.xlu0 %1470
      %1472 = vrot.lane.b32.xlu0 %v1396, 20
      %v1473 = vpop.permute.xlu0 %1472
      %1474 = vrot.lane.b32.xlu0 %v1397, 20
      %v1475 = vpop.permute.xlu0 %1474
      %1476 = vrot.lane.b32.xlu0 %v1398, 20
      %v1477 = vpop.permute.xlu0 %1476
      %1478 = vrot.lane.b32.xlu0 %v1399, 20
      %v1479 = vpop.permute.xlu0 %1478
      %1480 = vrot.lane.b32.xlu0 %v1400, 20
      %v1481 = vpop.permute.xlu0 %1480
      %1482 = vrot.lane.b32.xlu0 %v1401, 20
      %v1483 = vpop.permute.xlu0 %1482
      %1484 = vrot.lane.b32.xlu0 %v1402, 20
      %v1485 = vpop.permute.xlu0 %1484
      %1486 = vrot.lane.b32.xlu0 %v1403, 20
      %v1487 = vpop.permute.xlu0 %1486
      %1488 = vrot.lane.b32.xlu0 %v1404, 20
      %v1489 = vpop.permute.xlu0 %1488
      %1490 = vrot.lane.b32.xlu0 %v1405, 20
      %v1491 = vpop.permute.xlu0 %1490
      %1492 = vrot.lane.b32.xlu0 %v1406, 20
      %v1493 = vpop.permute.xlu0 %1492
      %1494 = vrot.lane.b32.xlu0 %v1407, 20
      %v1495 = vpop.permute.xlu0 %1494
      %1496 = vrot.lane.b32.xlu0 %v1408, 20
      %v1497 = vpop.permute.xlu0 %1496
      %1498 = vrot.lane.b32.xlu0 %v1409, 20
      %v1499 = vpop.permute.xlu0 %1498
      %1500 = vrot.lane.b32.xlu0 %v1410, 20
      %v1501 = vpop.permute.xlu0 %1500
      %1502 = vrot.lane.b32.xlu0 %v1411, 20
      %v1503 = vpop.permute.xlu0 %1502
      %1504 = vrot.lane.b32.xlu0 %v1412, 20
      %v1505 = vpop.permute.xlu0 %1504
      %1506 = vrot.lane.b32.xlu0 %v1413, 20
      %v1507 = vpop.permute.xlu0 %1506
      %1508 = vrot.lane.b32.xlu0 %v1414, 20
      %v1509 = vpop.permute.xlu0 %1508
      %1510 = vrot.lane.b32.xlu0 %v1415, 20
      %v1511 = vpop.permute.xlu0 %1510
      %vm1544 = vcmask 195744
      %1545 = vst.msk [vmem:[#allocation4] sm:$0xff] %vm1544, %v1449
      %1546 = vst.msk [vmem:[#allocation4 + $0x8] sm:$0xff] %vm1544, %v1451
      %1547 = vst.msk [vmem:[#allocation4 + $0x10] sm:$0xff] %vm1544, %v1453
      %1548 = vst.msk [vmem:[#allocation4 + $0x18] sm:$0xff] %vm1544, %v1455
      %1549 = vst.msk [vmem:[#allocation4 + $0x20] sm:$0xff] %vm1544, %v1457
      %1550 = vst.msk [vmem:[#allocation4 + $0x28] sm:$0xff] %vm1544, %v1459
      %1551 = vst.msk [vmem:[#allocation4 + $0x30] sm:$0xff] %vm1544, %v1461
      %1552 = vst.msk [vmem:[#allocation4 + $0x38] sm:$0xff] %vm1544, %v1463
      %1553 = vst.msk [vmem:[#allocation4 + $0x40] sm:$0xff] %vm1544, %v1465
      %1554 = vst.msk [vmem:[#allocation4 + $0x48] sm:$0xff] %vm1544, %v1467
      %1555 = vst.msk [vmem:[#allocation4 + $0x50] sm:$0xff] %vm1544, %v1469
      %1556 = vst.msk [vmem:[#allocation4 + $0x58] sm:$0xff] %vm1544, %v1471
      %1557 = vst.msk [vmem:[#allocation4 + $0x60] sm:$0xff] %vm1544, %v1473
      %1558 = vst.msk [vmem:[#allocation4 + $0x68] sm:$0xff] %vm1544, %v1475
      %1559 = vst.msk [vmem:[#allocation4 + $0x70] sm:$0xff] %vm1544, %v1477
      %1560 = vst.msk [vmem:[#allocation4 + $0x78] sm:$0xff] %vm1544, %v1479
      %1561 = vst.msk [vmem:[#allocation4 + $0x80] sm:$0xff] %vm1544, %v1481
      %1562 = vst.msk [vmem:[#allocation4 + $0x88] sm:$0xff] %vm1544, %v1483
      %1563 = vst.msk [vmem:[#allocation4 + $0x90] sm:$0xff] %vm1544, %v1485
      %1564 = vst.msk [vmem:[#allocation4 + $0x98] sm:$0xff] %vm1544, %v1487
      %1565 = vst.msk [vmem:[#allocation4 + $0xa0] sm:$0xff] %vm1544, %v1489
      %1566 = vst.msk [vmem:[#allocation4 + $0xa8] sm:$0xff] %vm1544, %v1491
      %1567 = vst.msk [vmem:[#allocation4 + $0xb0] sm:$0xff] %vm1544, %v1493
      %1568 = vst.msk [vmem:[#allocation4 + $0xb8] sm:$0xff] %vm1544, %v1495
      %1569 = vst.msk [vmem:[#allocation4 + $0xc0] sm:$0xff] %vm1544, %v1497
      %1570 = vst.msk [vmem:[#allocation4 + $0xc8] sm:$0xff] %vm1544, %v1499
      %1571 = vst.msk [vmem:[#allocation4 + $0xd0] sm:$0xff] %vm1544, %v1501
      %1572 = vst.msk [vmem:[#allocation4 + $0xd8] sm:$0xff] %vm1544, %v1503
      %1573 = vst.msk [vmem:[#allocation4 + $0xe0] sm:$0xff] %vm1544, %v1505
      %1574 = vst.msk [vmem:[#allocation4 + $0xe8] sm:$0xff] %vm1544, %v1507
      %1575 = vst.msk [vmem:[#allocation4 + $0xf0] sm:$0xff] %vm1544, %v1509
      %1576 = vst.msk [vmem:[#allocation4 + $0xf8] sm:$0xff] %vm1544, %v1511
      %s1577 = scalar_lea.vmem [#allocation2], 48
      %v1578 = vld [vmem:[%s1577] sm:$0xff]
      %v1579 = vld [vmem:[%s1577 + $0x8] sm:$0xff]
      %v1580 = vld [vmem:[%s1577 + $0x18] sm:$0xff]
      %v1581 = vld [vmem:[%s1577 + $0x20] sm:$0xff]
      %v1582 = vld [vmem:[%s1577 + $0x30] sm:$0xff]
      %v1583 = vld [vmem:[%s1577 + $0x38] sm:$0xff]
      %v1584 = vld [vmem:[%s1577 + $0x48] sm:$0xff]
      %v1585 = vld [vmem:[%s1577 + $0x50] sm:$0xff]
      %v1586 = vld [vmem:[%s1577 + $0x60] sm:$0xff]
      %v1587 = vld [vmem:[%s1577 + $0x68] sm:$0xff]
      %v1588 = vld [vmem:[%s1577 + $0x78] sm:$0xff]
      %v1589 = vld [vmem:[%s1577 + $0x80] sm:$0xff]
      %v1590 = vld [vmem:[%s1577 + $0x90] sm:$0xff]
      %v1591 = vld [vmem:[%s1577 + $0x98] sm:$0xff]
      %v1592 = vld [vmem:[%s1577 + $0xa8] sm:$0xff]
      %v1593 = vld [vmem:[%s1577 + $0xb0] sm:$0xff]
      %v1594 = vld [vmem:[%s1577 + $0xc0] sm:$0xff]
      %v1595 = vld [vmem:[%s1577 + $0xc8] sm:$0xff]
      %v1596 = vld [vmem:[%s1577 + $0xd8] sm:$0xff]
      %v1597 = vld [vmem:[%s1577 + $0xe0] sm:$0xff]
      %v1598 = vld [vmem:[%s1577 + $0xf0] sm:$0xff]
      %v1599 = vld [vmem:[%s1577 + $0xf8] sm:$0xff]
      %v1600 = vld [vmem:[%s1577 + $0x108] sm:$0xff]
      %v1601 = vld [vmem:[%s1577 + $0x110] sm:$0xff]
      %v1602 = vld [vmem:[%s1577 + $0x120] sm:$0xff]
      %v1603 = vld [vmem:[%s1577 + $0x128] sm:$0xff]
      %v1604 = vld [vmem:[%s1577 + $0x138] sm:$0xff]
      %v1605 = vld [vmem:[%s1577 + $0x140] sm:$0xff]
      %v1606 = vld [vmem:[%s1577 + $0x150] sm:$0xff]
      %v1607 = vld [vmem:[%s1577 + $0x158] sm:$0xff]
      %v1608 = vld [vmem:[%s1577 + $0x168] sm:$0xff]
      %v1609 = vld [vmem:[%s1577 + $0x170] sm:$0xff]
      %1642 = vrot.lane.b32.xlu0 %v1578, 24
      %v1643 = vpop.permute.xlu0 %1642
      %1644 = vrot.lane.b32.xlu0 %v1579, 24
      %v1645 = vpop.permute.xlu0 %1644
      %1646 = vrot.lane.b32.xlu0 %v1580, 24
      %v1647 = vpop.permute.xlu0 %1646
      %1648 = vrot.lane.b32.xlu0 %v1581, 24
      %v1649 = vpop.permute.xlu0 %1648
      %1650 = vrot.lane.b32.xlu0 %v1582, 24
      %v1651 = vpop.permute.xlu0 %1650
      %1652 = vrot.lane.b32.xlu0 %v1583, 24
      %v1653 = vpop.permute.xlu0 %1652
      %1654 = vrot.lane.b32.xlu0 %v1584, 24
      %v1655 = vpop.permute.xlu0 %1654
      %1656 = vrot.lane.b32.xlu0 %v1585, 24
      %v1657 = vpop.permute.xlu0 %1656
      %1658 = vrot.lane.b32.xlu0 %v1586, 24
      %v1659 = vpop.permute.xlu0 %1658
      %1660 = vrot.lane.b32.xlu0 %v1587, 24
      %v1661 = vpop.permute.xlu0 %1660
      %1662 = vrot.lane.b32.xlu0 %v1588, 24
      %v1663 = vpop.permute.xlu0 %1662
      %1664 = vrot.lane.b32.xlu0 %v1589, 24
      %v1665 = vpop.permute.xlu0 %1664
      %1666 = vrot.lane.b32.xlu0 %v1590, 24
      %v1667 = vpop.permute.xlu0 %1666
      %1668 = vrot.lane.b32.xlu0 %v1591, 24
      %v1669 = vpop.permute.xlu0 %1668
      %1670 = vrot.lane.b32.xlu0 %v1592, 24
      %v1671 = vpop.permute.xlu0 %1670
      %1672 = vrot.lane.b32.xlu0 %v1593, 24
      %v1673 = vpop.permute.xlu0 %1672
      %1674 = vrot.lane.b32.xlu0 %v1594, 24
      %v1675 = vpop.permute.xlu0 %1674
      %1676 = vrot.lane.b32.xlu0 %v1595, 24
      %v1677 = vpop.permute.xlu0 %1676
      %1678 = vrot.lane.b32.xlu0 %v1596, 24
      %v1679 = vpop.permute.xlu0 %1678
      %1680 = vrot.lane.b32.xlu0 %v1597, 24
      %v1681 = vpop.permute.xlu0 %1680
      %1682 = vrot.lane.b32.xlu0 %v1598, 24
      %v1683 = vpop.permute.xlu0 %1682
      %1684 = vrot.lane.b32.xlu0 %v1599, 24
      %v1685 = vpop.permute.xlu0 %1684
      %1686 = vrot.lane.b32.xlu0 %v1600, 24
      %v1687 = vpop.permute.xlu0 %1686
      %1688 = vrot.lane.b32.xlu0 %v1601, 24
      %v1689 = vpop.permute.xlu0 %1688
      %1690 = vrot.lane.b32.xlu0 %v1602, 24
      %v1691 = vpop.permute.xlu0 %1690
      %1692 = vrot.lane.b32.xlu0 %v1603, 24
      %v1693 = vpop.permute.xlu0 %1692
      %1694 = vrot.lane.b32.xlu0 %v1604, 24
      %v1695 = vpop.permute.xlu0 %1694
      %1696 = vrot.lane.b32.xlu0 %v1605, 24
      %v1697 = vpop.permute.xlu0 %1696
      %1698 = vrot.lane.b32.xlu0 %v1606, 24
      %v1699 = vpop.permute.xlu0 %1698
      %1700 = vrot.lane.b32.xlu0 %v1607, 24
      %v1701 = vpop.permute.xlu0 %1700
      %1702 = vrot.lane.b32.xlu0 %v1608, 24
      %v1703 = vpop.permute.xlu0 %1702
      %1704 = vrot.lane.b32.xlu0 %v1609, 24
      %v1705 = vpop.permute.xlu0 %1704
      %vm1738 = vcmask 228544
      %1739 = vst.msk [vmem:[#allocation4] sm:$0xff] %vm1738, %v1643
      %1740 = vst.msk [vmem:[#allocation4 + $0x8] sm:$0xff] %vm1738, %v1645
      %1741 = vst.msk [vmem:[#allocation4 + $0x10] sm:$0xff] %vm1738, %v1647
      %1742 = vst.msk [vmem:[#allocation4 + $0x18] sm:$0xff] %vm1738, %v1649
      %1743 = vst.msk [vmem:[#allocation4 + $0x20] sm:$0xff] %vm1738, %v1651
      %1744 = vst.msk [vmem:[#allocation4 + $0x28] sm:$0xff] %vm1738, %v1653
      %1745 = vst.msk [vmem:[#allocation4 + $0x30] sm:$0xff] %vm1738, %v1655
      %1746 = vst.msk [vmem:[#allocation4 + $0x38] sm:$0xff] %vm1738, %v1657
      %1747 = vst.msk [vmem:[#allocation4 + $0x40] sm:$0xff] %vm1738, %v1659
      %1748 = vst.msk [vmem:[#allocation4 + $0x48] sm:$0xff] %vm1738, %v1661
      %1749 = vst.msk [vmem:[#allocation4 + $0x50] sm:$0xff] %vm1738, %v1663
      %1750 = vst.msk [vmem:[#allocation4 + $0x58] sm:$0xff] %vm1738, %v1665
      %1751 = vst.msk [vmem:[#allocation4 + $0x60] sm:$0xff] %vm1738, %v1667
      %1752 = vst.msk [vmem:[#allocation4 + $0x68] sm:$0xff] %vm1738, %v1669
      %1753 = vst.msk [vmem:[#allocation4 + $0x70] sm:$0xff] %vm1738, %v1671
      %1754 = vst.msk [vmem:[#allocation4 + $0x78] sm:$0xff] %vm1738, %v1673
      %1755 = vst.msk [vmem:[#allocation4 + $0x80] sm:$0xff] %vm1738, %v1675
      %1756 = vst.msk [vmem:[#allocation4 + $0x88] sm:$0xff] %vm1738, %v1677
      %1757 = vst.msk [vmem:[#allocation4 + $0x90] sm:$0xff] %vm1738, %v1679
      %1758 = vst.msk [vmem:[#allocation4 + $0x98] sm:$0xff] %vm1738, %v1681
      %1759 = vst.msk [vmem:[#allocation4 + $0xa0] sm:$0xff] %vm1738, %v1683
      %1760 = vst.msk [vmem:[#allocation4 + $0xa8] sm:$0xff] %vm1738, %v1685
      %1761 = vst.msk [vmem:[#allocation4 + $0xb0] sm:$0xff] %vm1738, %v1687
      %1762 = vst.msk [vmem:[#allocation4 + $0xb8] sm:$0xff] %vm1738, %v1689
      %1763 = vst.msk [vmem:[#allocation4 + $0xc0] sm:$0xff] %vm1738, %v1691
      %1764 = vst.msk [vmem:[#allocation4 + $0xc8] sm:$0xff] %vm1738, %v1693
      %1765 = vst.msk [vmem:[#allocation4 + $0xd0] sm:$0xff] %vm1738, %v1695
      %1766 = vst.msk [vmem:[#allocation4 + $0xd8] sm:$0xff] %vm1738, %v1697
      %1767 = vst.msk [vmem:[#allocation4 + $0xe0] sm:$0xff] %vm1738, %v1699
      %1768 = vst.msk [vmem:[#allocation4 + $0xe8] sm:$0xff] %vm1738, %v1701
      %1769 = vst.msk [vmem:[#allocation4 + $0xf0] sm:$0xff] %vm1738, %v1703
      %1770 = vst.msk [vmem:[#allocation4 + $0xf8] sm:$0xff] %vm1738, %v1705
      %v1771 = vld [vmem:[%s1577 + $0x1] sm:$0xff]
      %v1772 = vld [vmem:[%s1577 + $0x9] sm:$0xff]
      %v1773 = vld [vmem:[%s1577 + $0x19] sm:$0xff]
      %v1774 = vld [vmem:[%s1577 + $0x21] sm:$0xff]
      %v1775 = vld [vmem:[%s1577 + $0x31] sm:$0xff]
      %v1776 = vld [vmem:[%s1577 + $0x39] sm:$0xff]
      %v1777 = vld [vmem:[%s1577 + $0x49] sm:$0xff]
      %v1778 = vld [vmem:[%s1577 + $0x51] sm:$0xff]
      %v1779 = vld [vmem:[%s1577 + $0x61] sm:$0xff]
      %v1780 = vld [vmem:[%s1577 + $0x69] sm:$0xff]
      %v1781 = vld [vmem:[%s1577 + $0x79] sm:$0xff]
      %v1782 = vld [vmem:[%s1577 + $0x81] sm:$0xff]
      %v1783 = vld [vmem:[%s1577 + $0x91] sm:$0xff]
      %v1784 = vld [vmem:[%s1577 + $0x99] sm:$0xff]
      %v1785 = vld [vmem:[%s1577 + $0xa9] sm:$0xff]
      %v1786 = vld [vmem:[%s1577 + $0xb1] sm:$0xff]
      %v1787 = vld [vmem:[%s1577 + $0xc1] sm:$0xff]
      %v1788 = vld [vmem:[%s1577 + $0xc9] sm:$0xff]
      %v1789 = vld [vmem:[%s1577 + $0xd9] sm:$0xff]
      %v1790 = vld [vmem:[%s1577 + $0xe1] sm:$0xff]
      %v1791 = vld [vmem:[%s1577 + $0xf1] sm:$0xff]
      %v1792 = vld [vmem:[%s1577 + $0xf9] sm:$0xff]
      %v1793 = vld [vmem:[%s1577 + $0x109] sm:$0xff]
      %v1794 = vld [vmem:[%s1577 + $0x111] sm:$0xff]
      %v1795 = vld [vmem:[%s1577 + $0x121] sm:$0xff]
      %v1796 = vld [vmem:[%s1577 + $0x129] sm:$0xff]
      %v1797 = vld [vmem:[%s1577 + $0x139] sm:$0xff]
      %v1798 = vld [vmem:[%s1577 + $0x141] sm:$0xff]
      %v1799 = vld [vmem:[%s1577 + $0x151] sm:$0xff]
      %v1800 = vld [vmem:[%s1577 + $0x159] sm:$0xff]
      %v1801 = vld [vmem:[%s1577 + $0x169] sm:$0xff]
      %v1802 = vld [vmem:[%s1577 + $0x171] sm:$0xff]
      %1835 = vrot.lane.b32.xlu0 %v1771, 28
      %v1836 = vpop.permute.xlu0 %1835
      %1837 = vrot.lane.b32.xlu0 %v1772, 28
      %v1838 = vpop.permute.xlu0 %1837
      %1839 = vrot.lane.b32.xlu0 %v1773, 28
      %v1840 = vpop.permute.xlu0 %1839
      %1841 = vrot.lane.b32.xlu0 %v1774, 28
      %v1842 = vpop.permute.xlu0 %1841
      %1843 = vrot.lane.b32.xlu0 %v1775, 28
      %v1844 = vpop.permute.xlu0 %1843
      %1845 = vrot.lane.b32.xlu0 %v1776, 28
      %v1846 = vpop.permute.xlu0 %1845
      %1847 = vrot.lane.b32.xlu0 %v1777, 28
      %v1848 = vpop.permute.xlu0 %1847
      %1849 = vrot.lane.b32.xlu0 %v1778, 28
      %v1850 = vpop.permute.xlu0 %1849
      %1851 = vrot.lane.b32.xlu0 %v1779, 28
      %v1852 = vpop.permute.xlu0 %1851
      %1853 = vrot.lane.b32.xlu0 %v1780, 28
      %v1854 = vpop.permute.xlu0 %1853
      %1855 = vrot.lane.b32.xlu0 %v1781, 28
      %v1856 = vpop.permute.xlu0 %1855
      %1857 = vrot.lane.b32.xlu0 %v1782, 28
      %v1858 = vpop.permute.xlu0 %1857
      %1859 = vrot.lane.b32.xlu0 %v1783, 28
      %v1860 = vpop.permute.xlu0 %1859
      %1861 = vrot.lane.b32.xlu0 %v1784, 28
      %v1862 = vpop.permute.xlu0 %1861
      %1863 = vrot.lane.b32.xlu0 %v1785, 28
      %v1864 = vpop.permute.xlu0 %1863
      %1865 = vrot.lane.b32.xlu0 %v1786, 28
      %v1866 = vpop.permute.xlu0 %1865
      %1867 = vrot.lane.b32.xlu0 %v1787, 28
      %v1868 = vpop.permute.xlu0 %1867
      %1869 = vrot.lane.b32.xlu0 %v1788, 28
      %v1870 = vpop.permute.xlu0 %1869
      %1871 = vrot.lane.b32.xlu0 %v1789, 28
      %v1872 = vpop.permute.xlu0 %1871
      %1873 = vrot.lane.b32.xlu0 %v1790, 28
      %v1874 = vpop.permute.xlu0 %1873
      %1875 = vrot.lane.b32.xlu0 %v1791, 28
      %v1876 = vpop.permute.xlu0 %1875
      %1877 = vrot.lane.b32.xlu0 %v1792, 28
      %v1878 = vpop.permute.xlu0 %1877
      %1879 = vrot.lane.b32.xlu0 %v1793, 28
      %v1880 = vpop.permute.xlu0 %1879
      %1881 = vrot.lane.b32.xlu0 %v1794, 28
      %v1882 = vpop.permute.xlu0 %1881
      %1883 = vrot.lane.b32.xlu0 %v1795, 28
      %v1884 = vpop.permute.xlu0 %1883
      %1885 = vrot.lane.b32.xlu0 %v1796, 28
      %v1886 = vpop.permute.xlu0 %1885
      %1887 = vrot.lane.b32.xlu0 %v1797, 28
      %v1888 = vpop.permute.xlu0 %1887
      %1889 = vrot.lane.b32.xlu0 %v1798, 28
      %v1890 = vpop.permute.xlu0 %1889
      %1891 = vrot.lane.b32.xlu0 %v1799, 28
      %v1892 = vpop.permute.xlu0 %1891
      %1893 = vrot.lane.b32.xlu0 %v1800, 28
      %v1894 = vpop.permute.xlu0 %1893
      %1895 = vrot.lane.b32.xlu0 %v1801, 28
      %v1896 = vpop.permute.xlu0 %1895
      %1897 = vrot.lane.b32.xlu0 %v1802, 28
      %v1898 = vpop.permute.xlu0 %1897
      %vm1931 = vcmask 261344
      %1932 = vst.msk [vmem:[#allocation4] sm:$0xff] %vm1931, %v1836
      %1933 = vst.msk [vmem:[#allocation4 + $0x8] sm:$0xff] %vm1931, %v1838
      %1934 = vst.msk [vmem:[#allocation4 + $0x10] sm:$0xff] %vm1931, %v1840
      %1935 = vst.msk [vmem:[#allocation4 + $0x18] sm:$0xff] %vm1931, %v1842
      %1936 = vst.msk [vmem:[#allocation4 + $0x20] sm:$0xff] %vm1931, %v1844
      %1937 = vst.msk [vmem:[#allocation4 + $0x28] sm:$0xff] %vm1931, %v1846
      %1938 = vst.msk [vmem:[#allocation4 + $0x30] sm:$0xff] %vm1931, %v1848
      %1939 = vst.msk [vmem:[#allocation4 + $0x38] sm:$0xff] %vm1931, %v1850
      %1940 = vst.msk [vmem:[#allocation4 + $0x40] sm:$0xff] %vm1931, %v1852
      %1941 = vst.msk [vmem:[#allocation4 + $0x48] sm:$0xff] %vm1931, %v1854
      %1942 = vst.msk [vmem:[#allocation4 + $0x50] sm:$0xff] %vm1931, %v1856
      %1943 = vst.msk [vmem:[#allocation4 + $0x58] sm:$0xff] %vm1931, %v1858
      %1944 = vst.msk [vmem:[#allocation4 + $0x60] sm:$0xff] %vm1931, %v1860
      %1945 = vst.msk [vmem:[#allocation4 + $0x68] sm:$0xff] %vm1931, %v1862
      %1946 = vst.msk [vmem:[#allocation4 + $0x70] sm:$0xff] %vm1931, %v1864
      %1947 = vst.msk [vmem:[#allocation4 + $0x78] sm:$0xff] %vm1931, %v1866
      %1948 = vst.msk [vmem:[#allocation4 + $0x80] sm:$0xff] %vm1931, %v1868
      %1949 = vst.msk [vmem:[#allocation4 + $0x88] sm:$0xff] %vm1931, %v1870
      %1950 = vst.msk [vmem:[#allocation4 + $0x90] sm:$0xff] %vm1931, %v1872
      %1951 = vst.msk [vmem:[#allocation4 + $0x98] sm:$0xff] %vm1931, %v1874
      %1952 = vst.msk [vmem:[#allocation4 + $0xa0] sm:$0xff] %vm1931, %v1876
      %1953 = vst.msk [vmem:[#allocation4 + $0xa8] sm:$0xff] %vm1931, %v1878
      %1954 = vst.msk [vmem:[#allocation4 + $0xb0] sm:$0xff] %vm1931, %v1880
      %1955 = vst.msk [vmem:[#allocation4 + $0xb8] sm:$0xff] %vm1931, %v1882
      %1956 = vst.msk [vmem:[#allocation4 + $0xc0] sm:$0xff] %vm1931, %v1884
      %1957 = vst.msk [vmem:[#allocation4 + $0xc8] sm:$0xff] %vm1931, %v1886
      %1958 = vst.msk [vmem:[#allocation4 + $0xd0] sm:$0xff] %vm1931, %v1888
      %1959 = vst.msk [vmem:[#allocation4 + $0xd8] sm:$0xff] %vm1931, %v1890
      %1960 = vst.msk [vmem:[#allocation4 + $0xe0] sm:$0xff] %vm1931, %v1892
      %1961 = vst.msk [vmem:[#allocation4 + $0xe8] sm:$0xff] %vm1931, %v1894
      %1962 = vst.msk [vmem:[#allocation4 + $0xf0] sm:$0xff] %vm1931, %v1896
      %1963 = vst.msk [vmem:[#allocation4 + $0xf8] sm:$0xff] %vm1931, %v1898
      %v1964 = vld [vmem:[%s1577 + $0x2] sm:$0xff]
      %v1965 = vld [vmem:[%s1577 + $0xa] sm:$0xff]
      %v1966 = vld [vmem:[%s1577 + $0x1a] sm:$0xff]
      %v1967 = vld [vmem:[%s1577 + $0x22] sm:$0xff]
      %v1968 = vld [vmem:[%s1577 + $0x32] sm:$0xff]
      %v1969 = vld [vmem:[%s1577 + $0x3a] sm:$0xff]
      %v1970 = vld [vmem:[%s1577 + $0x4a] sm:$0xff]
      %v1971 = vld [vmem:[%s1577 + $0x52] sm:$0xff]
      %v1972 = vld [vmem:[%s1577 + $0x62] sm:$0xff]
      %v1973 = vld [vmem:[%s1577 + $0x6a] sm:$0xff]
      %v1974 = vld [vmem:[%s1577 + $0x7a] sm:$0xff]
      %v1975 = vld [vmem:[%s1577 + $0x82] sm:$0xff]
      %v1976 = vld [vmem:[%s1577 + $0x92] sm:$0xff]
      %v1977 = vld [vmem:[%s1577 + $0x9a] sm:$0xff]
      %v1978 = vld [vmem:[%s1577 + $0xaa] sm:$0xff]
      %v1979 = vld [vmem:[%s1577 + $0xb2] sm:$0xff]
      %v1980 = vld [vmem:[%s1577 + $0xc2] sm:$0xff]
      %v1981 = vld [vmem:[%s1577 + $0xca] sm:$0xff]
      %v1982 = vld [vmem:[%s1577 + $0xda] sm:$0xff]
      %v1983 = vld [vmem:[%s1577 + $0xe2] sm:$0xff]
      %v1984 = vld [vmem:[%s1577 + $0xf2] sm:$0xff]
      %v1985 = vld [vmem:[%s1577 + $0xfa] sm:$0xff]
      %v1986 = vld [vmem:[%s1577 + $0x10a] sm:$0xff]
      %v1987 = vld [vmem:[%s1577 + $0x112] sm:$0xff]
      %v1988 = vld [vmem:[%s1577 + $0x122] sm:$0xff]
      %v1989 = vld [vmem:[%s1577 + $0x12a] sm:$0xff]
      %v1990 = vld [vmem:[%s1577 + $0x13a] sm:$0xff]
      %v1991 = vld [vmem:[%s1577 + $0x142] sm:$0xff]
      %v1992 = vld [vmem:[%s1577 + $0x152] sm:$0xff]
      %v1993 = vld [vmem:[%s1577 + $0x15a] sm:$0xff]
      %v1994 = vld [vmem:[%s1577 + $0x16a] sm:$0xff]
      %v1995 = vld [vmem:[%s1577 + $0x172] sm:$0xff]
      %2028 = vrot.lane.b32.xlu0 %v1964, 32
      %v2029 = vpop.permute.xlu0 %2028
      %2030 = vrot.lane.b32.xlu0 %v1965, 32
      %v2031 = vpop.permute.xlu0 %2030
      %2032 = vrot.lane.b32.xlu0 %v1966, 32
      %v2033 = vpop.permute.xlu0 %2032
      %2034 = vrot.lane.b32.xlu0 %v1967, 32
      %v2035 = vpop.permute.xlu0 %2034
      %2036 = vrot.lane.b32.xlu0 %v1968, 32
      %v2037 = vpop.permute.xlu0 %2036
      %2038 = vrot.lane.b32.xlu0 %v1969, 32
      %v2039 = vpop.permute.xlu0 %2038
      %2040 = vrot.lane.b32.xlu0 %v1970, 32
      %v2041 = vpop.permute.xlu0 %2040
      %2042 = vrot.lane.b32.xlu0 %v1971, 32
      %v2043 = vpop.permute.xlu0 %2042
      %2044 = vrot.lane.b32.xlu0 %v1972, 32
      %v2045 = vpop.permute.xlu0 %2044
      %2046 = vrot.lane.b32.xlu0 %v1973, 32
      %v2047 = vpop.permute.xlu0 %2046
      %2048 = vrot.lane.b32.xlu0 %v1974, 32
      %v2049 = vpop.permute.xlu0 %2048
      %2050 = vrot.lane.b32.xlu0 %v1975, 32
      %v2051 = vpop.permute.xlu0 %2050
      %2052 = vrot.lane.b32.xlu0 %v1976, 32
      %v2053 = vpop.permute.xlu0 %2052
      %2054 = vrot.lane.b32.xlu0 %v1977, 32
      %v2055 = vpop.permute.xlu0 %2054
      %2056 = vrot.lane.b32.xlu0 %v1978, 32
      %v2057 = vpop.permute.xlu0 %2056
      %2058 = vrot.lane.b32.xlu0 %v1979, 32
      %v2059 = vpop.permute.xlu0 %2058
      %2060 = vrot.lane.b32.xlu0 %v1980, 32
      %v2061 = vpop.permute.xlu0 %2060
      %2062 = vrot.lane.b32.xlu0 %v1981, 32
      %v2063 = vpop.permute.xlu0 %2062
      %2064 = vrot.lane.b32.xlu0 %v1982, 32
      %v2065 = vpop.permute.xlu0 %2064
      %2066 = vrot.lane.b32.xlu0 %v1983, 32
      %v2067 = vpop.permute.xlu0 %2066
      %2068 = vrot.lane.b32.xlu0 %v1984, 32
      %v2069 = vpop.permute.xlu0 %2068
      %2070 = vrot.lane.b32.xlu0 %v1985, 32
      %v2071 = vpop.permute.xlu0 %2070
      %2072 = vrot.lane.b32.xlu0 %v1986, 32
      %v2073 = vpop.permute.xlu0 %2072
      %2074 = vrot.lane.b32.xlu0 %v1987, 32
      %v2075 = vpop.permute.xlu0 %2074
      %2076 = vrot.lane.b32.xlu0 %v1988, 32
      %v2077 = vpop.permute.xlu0 %2076
      %2078 = vrot.lane.b32.xlu0 %v1989, 32
      %v2079 = vpop.permute.xlu0 %2078
      %2080 = vrot.lane.b32.xlu0 %v1990, 32
      %v2081 = vpop.permute.xlu0 %2080
      %2082 = vrot.lane.b32.xlu0 %v1991, 32
      %v2083 = vpop.permute.xlu0 %2082
      %2084 = vrot.lane.b32.xlu0 %v1992, 32
      %v2085 = vpop.permute.xlu0 %2084
      %2086 = vrot.lane.b32.xlu0 %v1993, 32
      %v2087 = vpop.permute.xlu0 %2086
      %2088 = vrot.lane.b32.xlu0 %v1994, 32
      %v2089 = vpop.permute.xlu0 %2088
      %2090 = vrot.lane.b32.xlu0 %v1995, 32
      %v2091 = vpop.permute.xlu0 %2090
      %vm2124 = vcmask 294144
      %2125 = vst.msk [vmem:[#allocation4] sm:$0xff] %vm2124, %v2029
      %2126 = vst.msk [vmem:[#allocation4 + $0x8] sm:$0xff] %vm2124, %v2031
      %2127 = vst.msk [vmem:[#allocation4 + $0x10] sm:$0xff] %vm2124, %v2033
      %2128 = vst.msk [vmem:[#allocation4 + $0x18] sm:$0xff] %vm2124, %v2035
      %2129 = vst.msk [vmem:[#allocation4 + $0x20] sm:$0xff] %vm2124, %v2037
      %2130 = vst.msk [vmem:[#allocation4 + $0x28] sm:$0xff] %vm2124, %v2039
      %2131 = vst.msk [vmem:[#allocation4 + $0x30] sm:$0xff] %vm2124, %v2041
      %2132 = vst.msk [vmem:[#allocation4 + $0x38] sm:$0xff] %vm2124, %v2043
      %2133 = vst.msk [vmem:[#allocation4 + $0x40] sm:$0xff] %vm2124, %v2045
      %2134 = vst.msk [vmem:[#allocation4 + $0x48] sm:$0xff] %vm2124, %v2047
      %2135 = vst.msk [vmem:[#allocation4 + $0x50] sm:$0xff] %vm2124, %v2049
      %2136 = vst.msk [vmem:[#allocation4 + $0x58] sm:$0xff] %vm2124, %v2051
      %2137 = vst.msk [vmem:[#allocation4 + $0x60] sm:$0xff] %vm2124, %v2053
      %2138 = vst.msk [vmem:[#allocation4 + $0x68] sm:$0xff] %vm2124, %v2055
      %2139 = vst.msk [vmem:[#allocation4 + $0x70] sm:$0xff] %vm2124, %v2057
      %2140 = vst.msk [vmem:[#allocation4 + $0x78] sm:$0xff] %vm2124, %v2059
      %2141 = vst.msk [vmem:[#allocation4 + $0x80] sm:$0xff] %vm2124, %v2061
      %2142 = vst.msk [vmem:[#allocation4 + $0x88] sm:$0xff] %vm2124, %v2063
      %2143 = vst.msk [vmem:[#allocation4 + $0x90] sm:$0xff] %vm2124, %v2065
      %2144 = vst.msk [vmem:[#allocation4 + $0x98] sm:$0xff] %vm2124, %v2067
      %2145 = vst.msk [vmem:[#allocation4 + $0xa0] sm:$0xff] %vm2124, %v2069
      %2146 = vst.msk [vmem:[#allocation4 + $0xa8] sm:$0xff] %vm2124, %v2071
      %2147 = vst.msk [vmem:[#allocation4 + $0xb0] sm:$0xff] %vm2124, %v2073
      %2148 = vst.msk [vmem:[#allocation4 + $0xb8] sm:$0xff] %vm2124, %v2075
      %2149 = vst.msk [vmem:[#allocation4 + $0xc0] sm:$0xff] %vm2124, %v2077
      %2150 = vst.msk [vmem:[#allocation4 + $0xc8] sm:$0xff] %vm2124, %v2079
      %2151 = vst.msk [vmem:[#allocation4 + $0xd0] sm:$0xff] %vm2124, %v2081
      %2152 = vst.msk [vmem:[#allocation4 + $0xd8] sm:$0xff] %vm2124, %v2083
      %2153 = vst.msk [vmem:[#allocation4 + $0xe0] sm:$0xff] %vm2124, %v2085
      %2154 = vst.msk [vmem:[#allocation4 + $0xe8] sm:$0xff] %vm2124, %v2087
      %2155 = vst.msk [vmem:[#allocation4 + $0xf0] sm:$0xff] %vm2124, %v2089
      %2156 = vst.msk [vmem:[#allocation4 + $0xf8] sm:$0xff] %vm2124, %v2091
      %v2157 = vld [vmem:[#allocation4] sm:$0xff]
      %v2158 = vld [vmem:[#allocation4 + $0x8] sm:$0xff]
      %v2159 = vld [vmem:[#allocation4 + $0x10] sm:$0xff]
      %v2160 = vld [vmem:[#allocation4 + $0x18] sm:$0xff]
      %v2161 = vld [vmem:[#allocation4 + $0x20] sm:$0xff]
      %v2162 = vld [vmem:[#allocation4 + $0x28] sm:$0xff]
      %v2163 = vld [vmem:[#allocation4 + $0x30] sm:$0xff]
      %v2164 = vld [vmem:[#allocation4 + $0x38] sm:$0xff]
      %v2165 = vld [vmem:[#allocation4 + $0x40] sm:$0xff]
      %v2166 = vld [vmem:[#allocation4 + $0x48] sm:$0xff]
      %v2167 = vld [vmem:[#allocation4 + $0x50] sm:$0xff]
      %v2168 = vld [vmem:[#allocation4 + $0x58] sm:$0xff]
      %v2169 = vld [vmem:[#allocation4 + $0x60] sm:$0xff]
      %v2170 = vld [vmem:[#allocation4 + $0x68] sm:$0xff]
      %v2171 = vld [vmem:[#allocation4 + $0x70] sm:$0xff]
      %v2172 = vld [vmem:[#allocation4 + $0x78] sm:$0xff]
      %v2173 = vld [vmem:[#allocation4 + $0x80] sm:$0xff]
      %v2174 = vld [vmem:[#allocation4 + $0x88] sm:$0xff]
      %v2175 = vld [vmem:[#allocation4 + $0x90] sm:$0xff]
      %v2176 = vld [vmem:[#allocation4 + $0x98] sm:$0xff]
      %v2177 = vld [vmem:[#allocation4 + $0xa0] sm:$0xff]
      %v2178 = vld [vmem:[#allocation4 + $0xa8] sm:$0xff]
      %v2179 = vld [vmem:[#allocation4 + $0xb0] sm:$0xff]
      %v2180 = vld [vmem:[#allocation4 + $0xb8] sm:$0xff]
      %v2181 = vld [vmem:[#allocation4 + $0xc0] sm:$0xff]
      %v2182 = vld [vmem:[#allocation4 + $0xc8] sm:$0xff]
      %v2183 = vld [vmem:[#allocation4 + $0xd0] sm:$0xff]
      %v2184 = vld [vmem:[#allocation4 + $0xd8] sm:$0xff]
      %v2185 = vld [vmem:[#allocation4 + $0xe0] sm:$0xff]
      %v2186 = vld [vmem:[#allocation4 + $0xe8] sm:$0xff]
      %v2187 = vld [vmem:[#allocation4 + $0xf0] sm:$0xff]
      %v2188 = vld [vmem:[#allocation4 + $0xf8] sm:$0xff]
      %v2189 = vld [vmem:[%s3] sm:$0xff]
      %v2190 = vld [vmem:[%s3 + $0x8] sm:$0xff]
      %v2191 = vld [vmem:[%s3 + $0x10] sm:$0xff]
      %v2192 = vld [vmem:[%s3 + $0x18] sm:$0xff]
      %v2193 = vld [vmem:[%s3 + $0x20] sm:$0xf]
      %vm2194 = vcmask 293888
      %v2196 = vsel %vm2194, %v2157, 0
      %v2199 = vsel %vm2194, %v2158, 0
      %v2202 = vsel %vm2194, %v2159, 0
      %v2205 = vsel %vm2194, %v2160, 0
      %v2208 = vsel %vm2194, %v2161, 0
      %v2211 = vsel %vm2194, %v2162, 0
      %v2214 = vsel %vm2194, %v2163, 0
      %v2217 = vsel %vm2194, %v2164, 0
      %v2220 = vsel %vm2194, %v2165, 0
      %v2223 = vsel %vm2194, %v2166, 0
      %v2226 = vsel %vm2194, %v2167, 0
      %v2229 = vsel %vm2194, %v2168, 0
      %v2232 = vsel %vm2194, %v2169, 0
      %v2235 = vsel %vm2194, %v2170, 0
      %v2238 = vsel %vm2194, %v2171, 0
      %v2241 = vsel %vm2194, %v2172, 0
      %v2244 = vsel %vm2194, %v2173, 0
      %v2247 = vsel %vm2194, %v2174, 0
      %v2250 = vsel %vm2194, %v2175, 0
      %v2253 = vsel %vm2194, %v2176, 0
      %v2256 = vsel %vm2194, %v2177, 0
      %v2259 = vsel %vm2194, %v2178, 0
      %v2262 = vsel %vm2194, %v2179, 0
      %v2265 = vsel %vm2194, %v2180, 0
      %v2268 = vsel %vm2194, %v2181, 0
      %v2271 = vsel %vm2194, %v2182, 0
      %v2274 = vsel %vm2194, %v2183, 0
      %v2277 = vsel %vm2194, %v2184, 0
      %v2280 = vsel %vm2194, %v2185, 0
      %v2283 = vsel %vm2194, %v2186, 0
      %v2286 = vsel %vm2194, %v2187, 0
      %v2289 = vsel %vm2194, %v2188, 0
      %vm2291 = vcmask 1043456
      %v2293 = vsel %vm2291, %v2193, 0
      %2295 = vmatpush.msra.mxu0 0.0
      %2296 = vmatpush.msra.mxu0 0.0
      %2297 = vmatpush.msra.mxu0 0.0
      %2298 = vmatpush.msra.mxu0 0.0
      %2299 = vmatpush.msra.mxu0 0.0
      %2300 = vmatpush.msra.mxu0 0.0
      %2301 = vmatpush.msra.mxu0 0.0
      %2302 = vmatpush.msra.mxu0 0.0
      %2303 = vmatpush.msra.mxu0 0.0
      %2304 = vmatpush.msra.mxu0 0.0
      %2305 = vmatpush.msra.mxu0 0.0
      %2306 = vmatpush.msra.mxu0 %v2293
      %2307 = vmatpush.msra.mxu0 %v2192
      %2308 = vmatpush.msra.mxu0 %v2191
      %2309 = vmatpush.msra.mxu0 %v2190
      %2310 = vmatpush.msra.mxu0 %v2189
      %2311 = vmatmul.f32.gmra.mxu0 %v2196
      %v2312 = vpop.f32.mrf.mxu0
      %v2313 = vadd.f32 0.0, %v2312
      %2314 = vmatmul.f32.gmra.mxu0 %v2199
      %v2315 = vpop.f32.mrf.mxu0
      %v2316 = vadd.f32 0.0, %v2315
      %2317 = vmatmul.f32.gmra.mxu0 %v2202
      %v2318 = vpop.f32.mrf.mxu0
      %v2319 = vadd.f32 0.0, %v2318
      %2320 = vmatmul.f32.gmra.mxu0 %v2205
      %v2321 = vpop.f32.mrf.mxu0
      %v2322 = vadd.f32 0.0, %v2321
      %2323 = vmatmul.f32.gmra.mxu0 %v2208
      %v2324 = vpop.f32.mrf.mxu0
      %v2325 = vadd.f32 0.0, %v2324
      %2326 = vmatmul.f32.gmra.mxu0 %v2211
      %v2327 = vpop.f32.mrf.mxu0
      %v2328 = vadd.f32 0.0, %v2327
      %2329 = vmatmul.f32.gmra.mxu0 %v2214
      %v2330 = vpop.f32.mrf.mxu0
      %v2331 = vadd.f32 0.0, %v2330
      %2332 = vmatmul.f32.gmra.mxu0 %v2217
      %v2333 = vpop.f32.mrf.mxu0
      %v2334 = vadd.f32 0.0, %v2333
      %2335 = vmatmul.f32.gmra.mxu0 %v2220
      %v2336 = vpop.f32.mrf.mxu0
      %v2337 = vadd.f32 0.0, %v2336
      %2338 = vmatmul.f32.gmra.mxu0 %v2223
      %v2339 = vpop.f32.mrf.mxu0
      %v2340 = vadd.f32 0.0, %v2339
      %2341 = vmatmul.f32.gmra.mxu0 %v2226
      %v2342 = vpop.f32.mrf.mxu0
      %v2343 = vadd.f32 0.0, %v2342
      %2344 = vmatmul.f32.gmra.mxu0 %v2229
      %v2345 = vpop.f32.mrf.mxu0
      %v2346 = vadd.f32 0.0, %v2345
      %2347 = vmatmul.f32.gmra.mxu0 %v2232
      %v2348 = vpop.f32.mrf.mxu0
      %v2349 = vadd.f32 0.0, %v2348
      %2350 = vmatmul.f32.gmra.mxu0 %v2235
      %v2351 = vpop.f32.mrf.mxu0
      %v2352 = vadd.f32 0.0, %v2351
      %2353 = vmatmul.f32.gmra.mxu0 %v2238
      %v2354 = vpop.f32.mrf.mxu0
      %v2355 = vadd.f32 0.0, %v2354
      %2356 = vmatmul.f32.gmra.mxu0 %v2241
      %v2357 = vpop.f32.mrf.mxu0
      %v2358 = vadd.f32 0.0, %v2357
      %2359 = vmatmul.f32.gmra.mxu0 %v2244
      %v2360 = vpop.f32.mrf.mxu0
      %v2361 = vadd.f32 0.0, %v2360
      %2362 = vmatmul.f32.gmra.mxu0 %v2247
      %v2363 = vpop.f32.mrf.mxu0
      %v2364 = vadd.f32 0.0, %v2363
      %2365 = vmatmul.f32.gmra.mxu0 %v2250
      %v2366 = vpop.f32.mrf.mxu0
      %v2367 = vadd.f32 0.0, %v2366
      %2368 = vmatmul.f32.gmra.mxu0 %v2253
      %v2369 = vpop.f32.mrf.mxu0
      %v2370 = vadd.f32 0.0, %v2369
      %2371 = vmatmul.f32.gmra.mxu0 %v2256
      %v2372 = vpop.f32.mrf.mxu0
      %v2373 = vadd.f32 0.0, %v2372
      %2374 = vmatmul.f32.gmra.mxu0 %v2259
      %v2375 = vpop.f32.mrf.mxu0
      %v2376 = vadd.f32 0.0, %v2375
      %2377 = vmatmul.f32.gmra.mxu0 %v2262
      %v2378 = vpop.f32.mrf.mxu0
      %v2379 = vadd.f32 0.0, %v2378
      %2380 = vmatmul.f32.gmra.mxu0 %v2265
      %v2381 = vpop.f32.mrf.mxu0
      %v2382 = vadd.f32 0.0, %v2381
      %2383 = vmatmul.f32.gmra.mxu0 %v2268
      %v2384 = vpop.f32.mrf.mxu0
      %v2385 = vadd.f32 0.0, %v2384
      %2386 = vmatmul.f32.gmra.mxu0 %v2271
      %v2387 = vpop.f32.mrf.mxu0
      %v2388 = vadd.f32 0.0, %v2387
      %2389 = vmatmul.f32.gmra.mxu0 %v2274
      %v2390 = vpop.f32.mrf.mxu0
      %v2391 = vadd.f32 0.0, %v2390
      %2392 = vmatmul.f32.gmra.mxu0 %v2277
      %v2393 = vpop.f32.mrf.mxu0
      %v2394 = vadd.f32 0.0, %v2393
      %2395 = vmatmul.f32.gmra.mxu0 %v2280
      %v2396 = vpop.f32.mrf.mxu0
      %v2397 = vadd.f32 0.0, %v2396
      %2398 = vmatmul.f32.gmra.mxu0 %v2283
      %v2399 = vpop.f32.mrf.mxu0
      %v2400 = vadd.f32 0.0, %v2399
      %2401 = vmatmul.f32.gmra.mxu0 %v2286
      %v2402 = vpop.f32.mrf.mxu0
      %v2403 = vadd.f32 0.0, %v2402
      %2404 = vmatmul.f32.gmra.mxu0 %v2289
      %v2405 = vpop.f32.mrf.mxu0
      %v2406 = vadd.f32 0.0, %v2405
      %2407 = vdwg.mxu0
      %v2408 = vld [vmem:[%s5] sm:$0xff]
      %v2409 = vld [vmem:[%s5 + $0x8] sm:$0xff]
      %v2410 = vld [vmem:[%s5 + $0x10] sm:$0xff]
      %v2411 = vld [vmem:[%s5 + $0x18] sm:$0xff]
      %v2412 = vld [vmem:[%s5 + $0x20] sm:$0xff]
      %v2413 = vld [vmem:[%s5 + $0x28] sm:$0xff]
      %v2414 = vld [vmem:[%s5 + $0x30] sm:$0xff]
      %v2415 = vld [vmem:[%s5 + $0x38] sm:$0xff]
      %v2416 = vld [vmem:[%s5 + $0x40] sm:$0xff]
      %v2417 = vld [vmem:[%s5 + $0x48] sm:$0xff]
      %v2418 = vld [vmem:[%s5 + $0x50] sm:$0xff]
      %v2419 = vld [vmem:[%s5 + $0x58] sm:$0xff]
      %v2420 = vld [vmem:[%s5 + $0x60] sm:$0xff]
      %v2421 = vld [vmem:[%s5 + $0x68] sm:$0xff]
      %v2422 = vld [vmem:[%s5 + $0x70] sm:$0xff]
      %v2423 = vld [vmem:[%s5 + $0x78] sm:$0xff]
      %2424 = vmatpush.msra.mxu0 %v2358
      %2425 = vmatpush.msra.mxu0 %v2355
      %2426 = vmatpush.msra.mxu0 %v2352
      %2427 = vmatpush.msra.mxu0 %v2349
      %2428 = vmatpush.msra.mxu0 %v2346
      %2429 = vmatpush.msra.mxu0 %v2343
      %2430 = vmatpush.msra.mxu0 %v2340
      %2431 = vmatpush.msra.mxu0 %v2337
      %2432 = vmatpush.msra.mxu0 %v2334
      %2433 = vmatpush.msra.mxu0 %v2331
      %2434 = vmatpush.msra.mxu0 %v2328
      %2435 = vmatpush.msra.mxu0 %v2325
      %2436 = vmatpush.msra.mxu0 %v2322
      %2437 = vmatpush.msra.mxu0 %v2319
      %2438 = vmatpush.msra.mxu0 %v2316
      %2439 = vmatpush.msra.mxu0 %v2313
      %2440 = vmatmul.f32.gmra.mxu0 %v2408
      %v2441 = vpop.f32.mrf.mxu0
      %v2442 = vadd.f32 0.0, %v2441
      %2443 = vmatmul.f32.gmra.mxu0 %v2410
      %v2444 = vpop.f32.mrf.mxu0
      %v2445 = vadd.f32 0.0, %v2444
      %2446 = vmatmul.f32.gmra.mxu0 %v2412
      %v2447 = vpop.f32.mrf.mxu0
      %v2448 = vadd.f32 0.0, %v2447
      %2449 = vmatmul.f32.gmra.mxu0 %v2414
      %v2450 = vpop.f32.mrf.mxu0
      %v2451 = vadd.f32 0.0, %v2450
      %2452 = vmatmul.f32.gmra.mxu0 %v2416
      %v2453 = vpop.f32.mrf.mxu0
      %v2454 = vadd.f32 0.0, %v2453
      %2455 = vmatmul.f32.gmra.mxu0 %v2418
      %v2456 = vpop.f32.mrf.mxu0
      %v2457 = vadd.f32 0.0, %v2456
      %2458 = vmatmul.f32.gmra.mxu0 %v2420
      %v2459 = vpop.f32.mrf.mxu0
      %v2460 = vadd.f32 0.0, %v2459
      %2461 = vmatmul.f32.gmra.mxu0 %v2422
      %v2462 = vpop.f32.mrf.mxu0
      %v2463 = vadd.f32 0.0, %v2462
      %2464 = vdwg.mxu0
      %2465 = vmatpush.msra.mxu0 %v2406
      %2466 = vmatpush.msra.mxu0 %v2403
      %2467 = vmatpush.msra.mxu0 %v2400
      %2468 = vmatpush.msra.mxu0 %v2397
      %2469 = vmatpush.msra.mxu0 %v2394
      %2470 = vmatpush.msra.mxu0 %v2391
      %2471 = vmatpush.msra.mxu0 %v2388
      %2472 = vmatpush.msra.mxu0 %v2385
      %2473 = vmatpush.msra.mxu0 %v2382
      %2474 = vmatpush.msra.mxu0 %v2379
      %2475 = vmatpush.msra.mxu0 %v2376
      %2476 = vmatpush.msra.mxu0 %v2373
      %2477 = vmatpush.msra.mxu0 %v2370
      %2478 = vmatpush.msra.mxu0 %v2367
      %2479 = vmatpush.msra.mxu0 %v2364
      %2480 = vmatpush.msra.mxu0 %v2361
      %2481 = vmatmul.f32.gmra.mxu0 %v2409
      %v2482 = vpop.f32.mrf.mxu0
      %v2483 = vadd.f32 %v2442, %v2482
      %2484 = vmatmul.f32.gmra.mxu0 %v2411
      %v2485 = vpop.f32.mrf.mxu0
      %v2486 = vadd.f32 %v2445, %v2485
      %2487 = vmatmul.f32.gmra.mxu0 %v2413
      %v2488 = vpop.f32.mrf.mxu0
      %v2489 = vadd.f32 %v2448, %v2488
      %2490 = vmatmul.f32.gmra.mxu0 %v2415
      %v2491 = vpop.f32.mrf.mxu0
      %v2492 = vadd.f32 %v2451, %v2491
      %2493 = vmatmul.f32.gmra.mxu0 %v2417
      %v2494 = vpop.f32.mrf.mxu0
      %v2495 = vadd.f32 %v2454, %v2494
      %2496 = vmatmul.f32.gmra.mxu0 %v2419
      %v2497 = vpop.f32.mrf.mxu0
      %v2498 = vadd.f32 %v2457, %v2497
      %2499 = vmatmul.f32.gmra.mxu0 %v2421
      %v2500 = vpop.f32.mrf.mxu0
      %v2501 = vadd.f32 %v2460, %v2500
      %2502 = vmatmul.f32.gmra.mxu0 %v2423
      %v2503 = vpop.f32.mrf.mxu0
      %v2504 = vadd.f32 %v2463, %v2503
      %2505 = vdwg.mxu0
      %2506 = vmatpush.msra.mxu0 %v452
      %2507 = vmatpush.msra.mxu0 %v451
      %2508 = vmatpush.msra.mxu0 %v450
      %2509 = vmatpush.msra.mxu0 %v449
      %2510 = vmatpush.msra.mxu0 %v448
      %2511 = vmatpush.msra.mxu0 %v447
      %2512 = vmatpush.msra.mxu0 %v446
      %2513 = vmatpush.msra.mxu0 %v445
      %2514 = vmatpush.msra.mxu0 %v444
      %2515 = vmatpush.msra.mxu0 %v443
      %2516 = vmatpush.msra.mxu0 %v442
      %2517 = vmatpush.msra.mxu0 %v441
      %2518 = vmatpush.msra.mxu0 %v440
      %2519 = vmatpush.msra.mxu0 %v439
      %2520 = vmatpush.msra.mxu0 %v438
      %2521 = vmatpush.msra.mxu0 %v437
      %2522 = vmatmul.f32.gmra.mxu0 %v2408
      %v2523 = vpop.f32.mrf.mxu0
      %v2524 = vadd.f32 0.0, %v2523
      %2525 = vmatmul.f32.gmra.mxu0 %v2410
      %v2526 = vpop.f32.mrf.mxu0
      %v2527 = vadd.f32 0.0, %v2526
      %2528 = vmatmul.f32.gmra.mxu0 %v2412
      %v2529 = vpop.f32.mrf.mxu0
      %v2530 = vadd.f32 0.0, %v2529
      %2531 = vmatmul.f32.gmra.mxu0 %v2414
      %v2532 = vpop.f32.mrf.mxu0
      %v2533 = vadd.f32 0.0, %v2532
      %2534 = vmatmul.f32.gmra.mxu0 %v2416
      %v2535 = vpop.f32.mrf.mxu0
      %v2536 = vadd.f32 0.0, %v2535
      %2537 = vmatmul.f32.gmra.mxu0 %v2418
      %v2538 = vpop.f32.mrf.mxu0
      %v2539 = vadd.f32 0.0, %v2538
      %2540 = vmatmul.f32.gmra.mxu0 %v2420
      %v2541 = vpop.f32.mrf.mxu0
      %v2542 = vadd.f32 0.0, %v2541
      %2543 = vmatmul.f32.gmra.mxu0 %v2422
      %v2544 = vpop.f32.mrf.mxu0
      %v2545 = vadd.f32 0.0, %v2544
      %2546 = vdwg.mxu0
      %2547 = vmatpush.msra.mxu0 %v468
      %2548 = vmatpush.msra.mxu0 %v467
      %2549 = vmatpush.msra.mxu0 %v466
      %2550 = vmatpush.msra.mxu0 %v465
      %2551 = vmatpush.msra.mxu0 %v464
      %2552 = vmatpush.msra.mxu0 %v463
      %2553 = vmatpush.msra.mxu0 %v462
      %2554 = vmatpush.msra.mxu0 %v461
      %2555 = vmatpush.msra.mxu0 %v460
      %2556 = vmatpush.msra.mxu0 %v459
      %2557 = vmatpush.msra.mxu0 %v458
      %2558 = vmatpush.msra.mxu0 %v457
      %2559 = vmatpush.msra.mxu0 %v456
      %2560 = vmatpush.msra.mxu0 %v455
      %2561 = vmatpush.msra.mxu0 %v454
      %2562 = vmatpush.msra.mxu0 %v453
      %2563 = vmatmul.f32.gmra.mxu0 %v2409
      %v2564 = vpop.f32.mrf.mxu0
      %v2565 = vadd.f32 %v2524, %v2564
      %2566 = vmatmul.f32.gmra.mxu0 %v2411
      %v2567 = vpop.f32.mrf.mxu0
      %v2568 = vadd.f32 %v2527, %v2567
      %2569 = vmatmul.f32.gmra.mxu0 %v2413
      %v2570 = vpop.f32.mrf.mxu0
      %v2571 = vadd.f32 %v2530, %v2570
      %2572 = vmatmul.f32.gmra.mxu0 %v2415
      %v2573 = vpop.f32.mrf.mxu0
      %v2574 = vadd.f32 %v2533, %v2573
      %2575 = vmatmul.f32.gmra.mxu0 %v2417
      %v2576 = vpop.f32.mrf.mxu0
      %v2577 = vadd.f32 %v2536, %v2576
      %2578 = vmatmul.f32.gmra.mxu0 %v2419
      %v2579 = vpop.f32.mrf.mxu0
      %v2580 = vadd.f32 %v2539, %v2579
      %2581 = vmatmul.f32.gmra.mxu0 %v2421
      %v2582 = vpop.f32.mrf.mxu0
      %v2583 = vadd.f32 %v2542, %v2582
      %2584 = vmatmul.f32.gmra.mxu0 %v2423
      %v2585 = vpop.f32.mrf.mxu0
      %v2586 = vadd.f32 %v2545, %v2585
      %2587 = vdwg.mxu0
      %v2588 = vld [vmem:[%s4] sm:$0xf]
      %v2589 = vld [vmem:[%s6] sm:$0x1]
      %v2590 = vld [vmem:[%s7] sm:$0x1]
      %v2592 = vperm.slane %v2589, 0
      %v2594 = vmul.f32 %v2483, %v2592
      %v2595 = vmul.f32 %v2486, %v2592
      %v2596 = vmul.f32 %v2489, %v2592
      %v2597 = vmul.f32 %v2492, %v2592
      %v2598 = vmul.f32 %v2495, %v2592
      %v2599 = vmul.f32 %v2498, %v2592
      %v2600 = vmul.f32 %v2501, %v2592
      %v2601 = vmul.f32 %v2504, %v2592
      %v2603 = vperm.slane %v2590, 0
      %v2605 = vadd.f32 %v2594, %v2603
      %v2606 = vadd.f32 %v2595, %v2603
      %v2607 = vadd.f32 %v2596, %v2603
      %v2608 = vadd.f32 %v2597, %v2603
      %v2609 = vadd.f32 %v2598, %v2603
      %v2610 = vadd.f32 %v2599, %v2603
      %v2611 = vadd.f32 %v2600, %v2603
      %v2612 = vadd.f32 %v2601, %v2603
      %v2613 = vmax.f32 %v2605, 0.0
      %v2614 = vmax.f32 %v2606, 0.0
      %v2615 = vmax.f32 %v2607, 0.0
      %v2616 = vmax.f32 %v2608, 0.0
      %v2617 = vmax.f32 %v2609, 0.0
      %v2618 = vmax.f32 %v2610, 0.0
      %v2619 = vmax.f32 %v2611, 0.0
      %v2620 = vmax.f32 %v2612, 0.0
      %vm2621 = vcmask 64512
      %2622 = vst.msk [vmem:[#allocation3] sm:$0xff] %vm2621, 0.0
      %vm2623 = vcmask 58368
      %2624 = vst.msk [vmem:[#allocation3 + $0x8] sm:$0x3] %vm2623, 0.0
      %s2625 = scalar_lea.vmem [#allocation3], 144
      %2626 = vst.msk [vmem:[%s2625] sm:$0xff] %vm2621, 0.0
      %2627 = vst.msk [vmem:[%s2625 + $0x8] sm:$0x3] %vm2623, 0.0
      %vm2628 = vcmask 57344
      %2629 = vst.msk [vmem:[#allocation3] sm:$0x1] %vm2628, 0.0
      %2630 = vst.msk [vmem:[#allocation3 + $0x10] sm:$0x1] %vm2628, 0.0
      %2631 = vst.msk [vmem:[#allocation3 + $0x20] sm:$0x1] %vm2628, 0.0
      %2632 = vst.msk [vmem:[#allocation3 + $0x30] sm:$0x1] %vm2628, 0.0
      %2633 = vst.msk [vmem:[#allocation3 + $0x40] sm:$0x1] %vm2628, 0.0
      %2634 = vst.msk [vmem:[#allocation3 + $0x50] sm:$0x1] %vm2628, 0.0
      %2635 = vst.msk [vmem:[#allocation3 + $0x60] sm:$0x1] %vm2628, 0.0
      %2636 = vst.msk [vmem:[#allocation3 + $0x70] sm:$0x1] %vm2628, 0.0
      %2637 = vst.msk [vmem:[#allocation3 + $0x80] sm:$0x1] %vm2628, 0.0
      %2638 = vst.msk [vmem:[#allocation3 + $0x90] sm:$0x1] %vm2628, 0.0
      %2639 = vst.msk [vmem:[#allocation3 + $0x9] sm:$0x1] %vm2628, 0.0
      %2640 = vst.msk [vmem:[#allocation3 + $0x19] sm:$0x1] %vm2628, 0.0
      %2641 = vst.msk [vmem:[#allocation3 + $0x29] sm:$0x1] %vm2628, 0.0
      %2642 = vst.msk [vmem:[#allocation3 + $0x39] sm:$0x1] %vm2628, 0.0
      %2643 = vst.msk [vmem:[#allocation3 + $0x49] sm:$0x1] %vm2628, 0.0
      %2644 = vst.msk [vmem:[#allocation3 + $0x59] sm:$0x1] %vm2628, 0.0
      %2645 = vst.msk [vmem:[#allocation3 + $0x69] sm:$0x1] %vm2628, 0.0
      %2646 = vst.msk [vmem:[#allocation3 + $0x79] sm:$0x1] %vm2628, 0.0
      %2647 = vst.msk [vmem:[#allocation3 + $0x89] sm:$0x1] %vm2628, 0.0
      %2648 = vst.msk [vmem:[#allocation3 + $0x99] sm:$0x1] %vm2628, 0.0
      %s2649 = scalar_lea.vmem [#allocation3], 16
      %2650 = vst.msk [vmem:[%s2649 + $0x1] sm:$0xff] %vm2621, %v2613
      %2651 = vst.msk [vmem:[%s2649 + $0x11] sm:$0xff] %vm2621, %v2614
      %2652 = vst.msk [vmem:[%s2649 + $0x21] sm:$0xff] %vm2621, %v2615
      %2653 = vst.msk [vmem:[%s2649 + $0x31] sm:$0xff] %vm2621, %v2616
      %2654 = vst.msk [vmem:[%s2649 + $0x41] sm:$0xff] %vm2621, %v2617
      %2655 = vst.msk [vmem:[%s2649 + $0x51] sm:$0xff] %vm2621, %v2618
      %2656 = vst.msk [vmem:[%s2649 + $0x61] sm:$0xff] %vm2621, %v2619
      %2657 = vst.msk [vmem:[%s2649 + $0x71] sm:$0xff] %vm2621, %v2620
      %v2658 = vld [vmem:[#allocation3] sm:$0xff]
      %v2659 = vld [vmem:[#allocation3 + $0x10] sm:$0xff]
      %v2660 = vld [vmem:[#allocation3 + $0x20] sm:$0xff]
      %v2661 = vld [vmem:[#allocation3 + $0x30] sm:$0xff]
      %v2662 = vld [vmem:[#allocation3 + $0x40] sm:$0xff]
      %v2663 = vld [vmem:[#allocation3 + $0x50] sm:$0xff]
      %v2664 = vld [vmem:[#allocation3 + $0x60] sm:$0xff]
      %v2665 = vld [vmem:[#allocation3 + $0x70] sm:$0xff]
      %2666 = vst.msk [vmem:[#allocation5] sm:$0xff] %vm2621, %v2658
      %2667 = vst.msk [vmem:[#allocation5 + $0x8] sm:$0xff] %vm2621, %v2659
      %2668 = vst.msk [vmem:[#allocation5 + $0x10] sm:$0xff] %vm2621, %v2660
      %2669 = vst.msk [vmem:[#allocation5 + $0x18] sm:$0xff] %vm2621, %v2661
      %2670 = vst.msk [vmem:[#allocation5 + $0x20] sm:$0xff] %vm2621, %v2662
      %2671 = vst.msk [vmem:[#allocation5 + $0x28] sm:$0xff] %vm2621, %v2663
      %2672 = vst.msk [vmem:[#allocation5 + $0x30] sm:$0xff] %vm2621, %v2664
      %2673 = vst.msk [vmem:[#allocation5 + $0x38] sm:$0xff] %vm2621, %v2665
      %v2674 = vld [vmem:[#allocation3 + $0x1] sm:$0xff]
      %v2675 = vld [vmem:[#allocation3 + $0x11] sm:$0xff]
      %v2676 = vld [vmem:[#allocation3 + $0x21] sm:$0xff]
      %v2677 = vld [vmem:[#allocation3 + $0x31] sm:$0xff]
      %v2678 = vld [vmem:[#allocation3 + $0x41] sm:$0xff]
      %v2679 = vld [vmem:[#allocation3 + $0x51] sm:$0xff]
      %v2680 = vld [vmem:[#allocation3 + $0x61] sm:$0xff]
      %v2681 = vld [vmem:[#allocation3 + $0x71] sm:$0xff]
      %2690 = vrot.lane.b32.xlu0 %v2674, 8
      %v2691 = vpop.permute.xlu0 %2690
      %2692 = vrot.lane.b32.xlu0 %v2675, 8
      %v2693 = vpop.permute.xlu0 %2692
      %2694 = vrot.lane.b32.xlu0 %v2676, 8
      %v2695 = vpop.permute.xlu0 %2694
      %2696 = vrot.lane.b32.xlu0 %v2677, 8
      %v2697 = vpop.permute.xlu0 %2696
      %2698 = vrot.lane.b32.xlu0 %v2678, 8
      %v2699 = vpop.permute.xlu0 %2698
      %2700 = vrot.lane.b32.xlu0 %v2679, 8
      %v2701 = vpop.permute.xlu0 %2700
      %2702 = vrot.lane.b32.xlu0 %v2680, 8
      %v2703 = vpop.permute.xlu0 %2702
      %2704 = vrot.lane.b32.xlu0 %v2681, 8
      %v2705 = vpop.permute.xlu0 %2704
      %vm2714 = vcmask 130112
      %2715 = vst.msk [vmem:[#allocation5] sm:$0xff] %vm2714, %v2691
      %2716 = vst.msk [vmem:[#allocation5 + $0x8] sm:$0xff] %vm2714, %v2693
      %2717 = vst.msk [vmem:[#allocation5 + $0x10] sm:$0xff] %vm2714, %v2695
      %2718 = vst.msk [vmem:[#allocation5 + $0x18] sm:$0xff] %vm2714, %v2697
      %2719 = vst.msk [vmem:[#allocation5 + $0x20] sm:$0xff] %vm2714, %v2699
      %2720 = vst.msk [vmem:[#allocation5 + $0x28] sm:$0xff] %vm2714, %v2701
      %2721 = vst.msk [vmem:[#allocation5 + $0x30] sm:$0xff] %vm2714, %v2703
      %2722 = vst.msk [vmem:[#allocation5 + $0x38] sm:$0xff] %vm2714, %v2705
      %v2723 = vld [vmem:[#allocation3 + $0x2] sm:$0xff]
      %v2724 = vld [vmem:[#allocation3 + $0x12] sm:$0xff]
      %v2725 = vld [vmem:[#allocation3 + $0x22] sm:$0xff]
      %v2726 = vld [vmem:[#allocation3 + $0x32] sm:$0xff]
      %v2727 = vld [vmem:[#allocation3 + $0x42] sm:$0xff]
      %v2728 = vld [vmem:[#allocation3 + $0x52] sm:$0xff]
      %v2729 = vld [vmem:[#allocation3 + $0x62] sm:$0xff]
      %v2730 = vld [vmem:[#allocation3 + $0x72] sm:$0xff]
      %2739 = vrot.lane.b32.xlu0 %v2723, 16
      %v2740 = vpop.permute.xlu0 %2739
      %2741 = vrot.lane.b32.xlu0 %v2724, 16
      %v2742 = vpop.permute.xlu0 %2741
      %2743 = vrot.lane.b32.xlu0 %v2725, 16
      %v2744 = vpop.permute.xlu0 %2743
      %2745 = vrot.lane.b32.xlu0 %v2726, 16
      %v2746 = vpop.permute.xlu0 %2745
      %2747 = vrot.lane.b32.xlu0 %v2727, 16
      %v2748 = vpop.permute.xlu0 %2747
      %2749 = vrot.lane.b32.xlu0 %v2728, 16
      %v2750 = vpop.permute.xlu0 %2749
      %2751 = vrot.lane.b32.xlu0 %v2729, 16
      %v2752 = vpop.permute.xlu0 %2751
      %2753 = vrot.lane.b32.xlu0 %v2730, 16
      %v2754 = vpop.permute.xlu0 %2753
      %vm2763 = vcmask 195712
      %2764 = vst.msk [vmem:[#allocation5] sm:$0xff] %vm2763, %v2740
      %2765 = vst.msk [vmem:[#allocation5 + $0x8] sm:$0xff] %vm2763, %v2742
      %2766 = vst.msk [vmem:[#allocation5 + $0x10] sm:$0xff] %vm2763, %v2744
      %2767 = vst.msk [vmem:[#allocation5 + $0x18] sm:$0xff] %vm2763, %v2746
      %2768 = vst.msk [vmem:[#allocation5 + $0x20] sm:$0xff] %vm2763, %v2748
      %2769 = vst.msk [vmem:[#allocation5 + $0x28] sm:$0xff] %vm2763, %v2750
      %2770 = vst.msk [vmem:[#allocation5 + $0x30] sm:$0xff] %vm2763, %v2752
      %2771 = vst.msk [vmem:[#allocation5 + $0x38] sm:$0xff] %vm2763, %v2754
      %v2772 = vld [vmem:[%s2649] sm:$0xff]
      %v2773 = vld [vmem:[%s2649 + $0x10] sm:$0xff]
      %v2774 = vld [vmem:[%s2649 + $0x20] sm:$0xff]
      %v2775 = vld [vmem:[%s2649 + $0x30] sm:$0xff]
      %v2776 = vld [vmem:[%s2649 + $0x40] sm:$0xff]
      %v2777 = vld [vmem:[%s2649 + $0x50] sm:$0xff]
      %v2778 = vld [vmem:[%s2649 + $0x60] sm:$0xff]
      %v2779 = vld [vmem:[%s2649 + $0x70] sm:$0xff]
      %2788 = vrot.lane.b32.xlu0 %v2772, 24
      %v2789 = vpop.permute.xlu0 %2788
      %2790 = vrot.lane.b32.xlu0 %v2773, 24
      %v2791 = vpop.permute.xlu0 %2790
      %2792 = vrot.lane.b32.xlu0 %v2774, 24
      %v2793 = vpop.permute.xlu0 %2792
      %2794 = vrot.lane.b32.xlu0 %v2775, 24
      %v2795 = vpop.permute.xlu0 %2794
      %2796 = vrot.lane.b32.xlu0 %v2776, 24
      %v2797 = vpop.permute.xlu0 %2796
      %2798 = vrot.lane.b32.xlu0 %v2777, 24
      %v2799 = vpop.permute.xlu0 %2798
      %2800 = vrot.lane.b32.xlu0 %v2778, 24
      %v2801 = vpop.permute.xlu0 %2800
      %2802 = vrot.lane.b32.xlu0 %v2779, 24
      %v2803 = vpop.permute.xlu0 %2802
      %vm2812 = vcmask 261312
      %2813 = vst.msk [vmem:[#allocation5] sm:$0xff] %vm2812, %v2789
      %2814 = vst.msk [vmem:[#allocation5 + $0x8] sm:$0xff] %vm2812, %v2791
      %2815 = vst.msk [vmem:[#allocation5 + $0x10] sm:$0xff] %vm2812, %v2793
      %2816 = vst.msk [vmem:[#allocation5 + $0x18] sm:$0xff] %vm2812, %v2795
      %2817 = vst.msk [vmem:[#allocation5 + $0x20] sm:$0xff] %vm2812, %v2797
      %2818 = vst.msk [vmem:[#allocation5 + $0x28] sm:$0xff] %vm2812, %v2799
      %2819 = vst.msk [vmem:[#allocation5 + $0x30] sm:$0xff] %vm2812, %v2801
      %2820 = vst.msk [vmem:[#allocation5 + $0x38] sm:$0xff] %vm2812, %v2803
      %v2821 = vld [vmem:[%s2649 + $0x1] sm:$0xff]
      %v2822 = vld [vmem:[%s2649 + $0x11] sm:$0xff]
      %v2823 = vld [vmem:[%s2649 + $0x21] sm:$0xff]
      %v2824 = vld [vmem:[%s2649 + $0x31] sm:$0xff]
      %v2825 = vld [vmem:[%s2649 + $0x41] sm:$0xff]
      %v2826 = vld [vmem:[%s2649 + $0x51] sm:$0xff]
      %v2827 = vld [vmem:[%s2649 + $0x61] sm:$0xff]
      %v2828 = vld [vmem:[%s2649 + $0x71] sm:$0xff]
      %2837 = vrot.lane.b32.xlu0 %v2821, 32
      %v2838 = vpop.permute.xlu0 %2837
      %2839 = vrot.lane.b32.xlu0 %v2822, 32
      %v2840 = vpop.permute.xlu0 %2839
      %2841 = vrot.lane.b32.xlu0 %v2823, 32
      %v2842 = vpop.permute.xlu0 %2841
      %2843 = vrot.lane.b32.xlu0 %v2824, 32
      %v2844 = vpop.permute.xlu0 %2843
      %2845 = vrot.lane.b32.xlu0 %v2825, 32
      %v2846 = vpop.permute.xlu0 %2845
      %2847 = vrot.lane.b32.xlu0 %v2826, 32
      %v2848 = vpop.permute.xlu0 %2847
      %2849 = vrot.lane.b32.xlu0 %v2827, 32
      %v2850 = vpop.permute.xlu0 %2849
      %2851 = vrot.lane.b32.xlu0 %v2828, 32
      %v2852 = vpop.permute.xlu0 %2851
      %vm2861 = vcmask 326912
      %2862 = vst.msk [vmem:[#allocation5] sm:$0xff] %vm2861, %v2838
      %2863 = vst.msk [vmem:[#allocation5 + $0x8] sm:$0xff] %vm2861, %v2840
      %2864 = vst.msk [vmem:[#allocation5 + $0x10] sm:$0xff] %vm2861, %v2842
      %2865 = vst.msk [vmem:[#allocation5 + $0x18] sm:$0xff] %vm2861, %v2844
      %2866 = vst.msk [vmem:[#allocation5 + $0x20] sm:$0xff] %vm2861, %v2846
      %2867 = vst.msk [vmem:[#allocation5 + $0x28] sm:$0xff] %vm2861, %v2848
      %2868 = vst.msk [vmem:[#allocation5 + $0x30] sm:$0xff] %vm2861, %v2850
      %2869 = vst.msk [vmem:[#allocation5 + $0x38] sm:$0xff] %vm2861, %v2852
      %v2870 = vld [vmem:[%s2649 + $0x2] sm:$0xff]
      %v2871 = vld [vmem:[%s2649 + $0x12] sm:$0xff]
      %v2872 = vld [vmem:[%s2649 + $0x22] sm:$0xff]
      %v2873 = vld [vmem:[%s2649 + $0x32] sm:$0xff]
      %v2874 = vld [vmem:[%s2649 + $0x42] sm:$0xff]
      %v2875 = vld [vmem:[%s2649 + $0x52] sm:$0xff]
      %v2876 = vld [vmem:[%s2649 + $0x62] sm:$0xff]
      %v2877 = vld [vmem:[%s2649 + $0x72] sm:$0xff]
      %2886 = vrot.lane.b32.xlu0 %v2870, 40
      %v2887 = vpop.permute.xlu0 %2886
      %2888 = vrot.lane.b32.xlu0 %v2871, 40
      %v2889 = vpop.permute.xlu0 %2888
      %2890 = vrot.lane.b32.xlu0 %v2872, 40
      %v2891 = vpop.permute.xlu0 %2890
      %2892 = vrot.lane.b32.xlu0 %v2873, 40
      %v2893 = vpop.permute.xlu0 %2892
      %2894 = vrot.lane.b32.xlu0 %v2874, 40
      %v2895 = vpop.permute.xlu0 %2894
      %2896 = vrot.lane.b32.xlu0 %v2875, 40
      %v2897 = vpop.permute.xlu0 %2896
      %2898 = vrot.lane.b32.xlu0 %v2876, 40
      %v2899 = vpop.permute.xlu0 %2898
      %2900 = vrot.lane.b32.xlu0 %v2877, 40
      %v2901 = vpop.permute.xlu0 %2900
      %vm2910 = vcmask 392512
      %2911 = vst.msk [vmem:[#allocation5] sm:$0xff] %vm2910, %v2887
      %2912 = vst.msk [vmem:[#allocation5 + $0x8] sm:$0xff] %vm2910, %v2889
      %2913 = vst.msk [vmem:[#allocation5 + $0x10] sm:$0xff] %vm2910, %v2891
      %2914 = vst.msk [vmem:[#allocation5 + $0x18] sm:$0xff] %vm2910, %v2893
      %2915 = vst.msk [vmem:[#allocation5 + $0x20] sm:$0xff] %vm2910, %v2895
      %2916 = vst.msk [vmem:[#allocation5 + $0x28] sm:$0xff] %vm2910, %v2897
      %2917 = vst.msk [vmem:[#allocation5 + $0x30] sm:$0xff] %vm2910, %v2899
      %2918 = vst.msk [vmem:[#allocation5 + $0x38] sm:$0xff] %vm2910, %v2901
      %s2919 = scalar_lea.vmem [#allocation3], 32
      %v2920 = vld [vmem:[%s2919] sm:$0xff]
      %v2921 = vld [vmem:[%s2919 + $0x10] sm:$0xff]
      %v2922 = vld [vmem:[%s2919 + $0x20] sm:$0xff]
      %v2923 = vld [vmem:[%s2919 + $0x30] sm:$0xff]
      %v2924 = vld [vmem:[%s2919 + $0x40] sm:$0xff]
      %v2925 = vld [vmem:[%s2919 + $0x50] sm:$0xff]
      %v2926 = vld [vmem:[%s2919 + $0x60] sm:$0xff]
      %v2927 = vld [vmem:[%s2919 + $0x70] sm:$0xff]
      %2936 = vrot.lane.b32.xlu0 %v2920, 48
      %v2937 = vpop.permute.xlu0 %2936
      %2938 = vrot.lane.b32.xlu0 %v2921, 48
      %v2939 = vpop.permute.xlu0 %2938
      %2940 = vrot.lane.b32.xlu0 %v2922, 48
      %v2941 = vpop.permute.xlu0 %2940
      %2942 = vrot.lane.b32.xlu0 %v2923, 48
      %v2943 = vpop.permute.xlu0 %2942
      %2944 = vrot.lane.b32.xlu0 %v2924, 48
      %v2945 = vpop.permute.xlu0 %2944
      %2946 = vrot.lane.b32.xlu0 %v2925, 48
      %v2947 = vpop.permute.xlu0 %2946
      %2948 = vrot.lane.b32.xlu0 %v2926, 48
      %v2949 = vpop.permute.xlu0 %2948
      %2950 = vrot.lane.b32.xlu0 %v2927, 48
      %v2951 = vpop.permute.xlu0 %2950
      %vm2960 = vcmask 458112
      %2961 = vst.msk [vmem:[#allocation5] sm:$0xff] %vm2960, %v2937
      %2962 = vst.msk [vmem:[#allocation5 + $0x8] sm:$0xff] %vm2960, %v2939
      %2963 = vst.msk [vmem:[#allocation5 + $0x10] sm:$0xff] %vm2960, %v2941
      %2964 = vst.msk [vmem:[#allocation5 + $0x18] sm:$0xff] %vm2960, %v2943
      %2965 = vst.msk [vmem:[#allocation5 + $0x20] sm:$0xff] %vm2960, %v2945
      %2966 = vst.msk [vmem:[#allocation5 + $0x28] sm:$0xff] %vm2960, %v2947
      %2967 = vst.msk [vmem:[#allocation5 + $0x30] sm:$0xff] %vm2960, %v2949
      %2968 = vst.msk [vmem:[#allocation5 + $0x38] sm:$0xff] %vm2960, %v2951
      %v2969 = vld [vmem:[%s2919 + $0x1] sm:$0xff]
      %v2970 = vld [vmem:[%s2919 + $0x11] sm:$0xff]
      %v2971 = vld [vmem:[%s2919 + $0x21] sm:$0xff]
      %v2972 = vld [vmem:[%s2919 + $0x31] sm:$0xff]
      %v2973 = vld [vmem:[%s2919 + $0x41] sm:$0xff]
      %v2974 = vld [vmem:[%s2919 + $0x51] sm:$0xff]
      %v2975 = vld [vmem:[%s2919 + $0x61] sm:$0xff]
      %v2976 = vld [vmem:[%s2919 + $0x71] sm:$0xff]
      %2985 = vrot.lane.b32.xlu0 %v2969, 56
      %v2986 = vpop.permute.xlu0 %2985
      %2987 = vrot.lane.b32.xlu0 %v2970, 56
      %v2988 = vpop.permute.xlu0 %2987
      %2989 = vrot.lane.b32.xlu0 %v2971, 56
      %v2990 = vpop.permute.xlu0 %2989
      %2991 = vrot.lane.b32.xlu0 %v2972, 56
      %v2992 = vpop.permute.xlu0 %2991
      %2993 = vrot.lane.b32.xlu0 %v2973, 56
      %v2994 = vpop.permute.xlu0 %2993
      %2995 = vrot.lane.b32.xlu0 %v2974, 56
      %v2996 = vpop.permute.xlu0 %2995
      %2997 = vrot.lane.b32.xlu0 %v2975, 56
      %v2998 = vpop.permute.xlu0 %2997
      %2999 = vrot.lane.b32.xlu0 %v2976, 56
      %v3000 = vpop.permute.xlu0 %2999
      %vm3009 = vcmask 523712
      %3010 = vst.msk [vmem:[#allocation5] sm:$0xff] %vm3009, %v2986
      %3011 = vst.msk [vmem:[#allocation5 + $0x8] sm:$0xff] %vm3009, %v2988
      %3012 = vst.msk [vmem:[#allocation5 + $0x10] sm:$0xff] %vm3009, %v2990
      %3013 = vst.msk [vmem:[#allocation5 + $0x18] sm:$0xff] %vm3009, %v2992
      %3014 = vst.msk [vmem:[#allocation5 + $0x20] sm:$0xff] %vm3009, %v2994
      %3015 = vst.msk [vmem:[#allocation5 + $0x28] sm:$0xff] %vm3009, %v2996
      %3016 = vst.msk [vmem:[#allocation5 + $0x30] sm:$0xff] %vm3009, %v2998
      %3017 = vst.msk [vmem:[#allocation5 + $0x38] sm:$0xff] %vm3009, %v3000
      %v3018 = vld [vmem:[%s2919 + $0x2] sm:$0xff]
      %v3019 = vld [vmem:[%s2919 + $0x12] sm:$0xff]
      %v3020 = vld [vmem:[%s2919 + $0x22] sm:$0xff]
      %v3021 = vld [vmem:[%s2919 + $0x32] sm:$0xff]
      %v3022 = vld [vmem:[%s2919 + $0x42] sm:$0xff]
      %v3023 = vld [vmem:[%s2919 + $0x52] sm:$0xff]
      %v3024 = vld [vmem:[%s2919 + $0x62] sm:$0xff]
      %v3025 = vld [vmem:[%s2919 + $0x72] sm:$0xff]
      %3034 = vrot.lane.b32.xlu0 %v3018, 64
      %v3035 = vpop.permute.xlu0 %3034
      %3036 = vrot.lane.b32.xlu0 %v3019, 64
      %v3037 = vpop.permute.xlu0 %3036
      %3038 = vrot.lane.b32.xlu0 %v3020, 64
      %v3039 = vpop.permute.xlu0 %3038
      %3040 = vrot.lane.b32.xlu0 %v3021, 64
      %v3041 = vpop.permute.xlu0 %3040
      %3042 = vrot.lane.b32.xlu0 %v3022, 64
      %v3043 = vpop.permute.xlu0 %3042
      %3044 = vrot.lane.b32.xlu0 %v3023, 64
      %v3045 = vpop.permute.xlu0 %3044
      %3046 = vrot.lane.b32.xlu0 %v3024, 64
      %v3047 = vpop.permute.xlu0 %3046
      %3048 = vrot.lane.b32.xlu0 %v3025, 64
      %v3049 = vpop.permute.xlu0 %3048
      %vm3058 = vcmask 589312
      %3059 = vst.msk [vmem:[#allocation5] sm:$0xff] %vm3058, %v3035
      %3060 = vst.msk [vmem:[#allocation5 + $0x8] sm:$0xff] %vm3058, %v3037
      %3061 = vst.msk [vmem:[#allocation5 + $0x10] sm:$0xff] %vm3058, %v3039
      %3062 = vst.msk [vmem:[#allocation5 + $0x18] sm:$0xff] %vm3058, %v3041
      %3063 = vst.msk [vmem:[#allocation5 + $0x20] sm:$0xff] %vm3058, %v3043
      %3064 = vst.msk [vmem:[#allocation5 + $0x28] sm:$0xff] %vm3058, %v3045
      %3065 = vst.msk [vmem:[#allocation5 + $0x30] sm:$0xff] %vm3058, %v3047
      %3066 = vst.msk [vmem:[#allocation5 + $0x38] sm:$0xff] %vm3058, %v3049
      %v3067 = vld [vmem:[#allocation5] sm:$0xff]
      %v3068 = vld [vmem:[#allocation5 + $0x8] sm:$0xff]
      %v3069 = vld [vmem:[#allocation5 + $0x10] sm:$0xff]
      %v3070 = vld [vmem:[#allocation5 + $0x18] sm:$0xff]
      %v3071 = vld [vmem:[#allocation5 + $0x20] sm:$0xff]
      %v3072 = vld [vmem:[#allocation5 + $0x28] sm:$0xff]
      %v3073 = vld [vmem:[#allocation5 + $0x30] sm:$0xff]
      %v3074 = vld [vmem:[#allocation5 + $0x38] sm:$0xff]
      %v3075 = vld [vmem:[%s8] sm:$0xff]
      %v3076 = vld [vmem:[%s8 + $0x8] sm:$0xff]
      %v3077 = vld [vmem:[%s8 + $0x10] sm:$0xff]
      %v3078 = vld [vmem:[%s8 + $0x18] sm:$0xff]
      %v3079 = vld [vmem:[%s8 + $0x20] sm:$0xff]
      %v3080 = vld [vmem:[%s8 + $0x28] sm:$0xff]
      %v3081 = vld [vmem:[%s8 + $0x30] sm:$0xff]
      %v3082 = vld [vmem:[%s8 + $0x38] sm:$0xff]
      %v3083 = vld [vmem:[%s8 + $0x40] sm:$0xff]
      %vm3084 = vcmask 588800
      %v3086 = vsel %vm3084, %v3067, 0
      %v3089 = vsel %vm3084, %v3068, 0
      %v3092 = vsel %vm3084, %v3069, 0
      %v3095 = vsel %vm3084, %v3070, 0
      %v3098 = vsel %vm3084, %v3071, 0
      %v3101 = vsel %vm3084, %v3072, 0
      %v3104 = vsel %vm3084, %v3073, 0
      %v3107 = vsel %vm3084, %v3074, 0
      %3109 = vmatpush.msra.mxu0 0.0
      %3110 = vmatpush.msra.mxu0 0.0
      %3111 = vmatpush.msra.mxu0 0.0
      %3112 = vmatpush.msra.mxu0 0.0
      %3113 = vmatpush.msra.mxu0 0.0
      %3114 = vmatpush.msra.mxu0 0.0
      %3115 = vmatpush.msra.mxu0 0.0
      %3116 = vmatpush.msra.mxu0 %v3083
      %3117 = vmatpush.msra.mxu0 %v3082
      %3118 = vmatpush.msra.mxu0 %v3081
      %3119 = vmatpush.msra.mxu0 %v3080
      %3120 = vmatpush.msra.mxu0 %v3079
      %3121 = vmatpush.msra.mxu0 %v3078
      %3122 = vmatpush.msra.mxu0 %v3077
      %3123 = vmatpush.msra.mxu0 %v3076
      %3124 = vmatpush.msra.mxu0 %v3075
      %3125 = vmatmul.f32.gmra.mxu0 %v3086
      %v3126 = vpop.f32.mrf.mxu0
      %v3127 = vadd.f32 0.0, %v3126
      %3128 = vmatmul.f32.gmra.mxu0 %v3089
      %v3129 = vpop.f32.mrf.mxu0
      %v3130 = vadd.f32 0.0, %v3129
      %3131 = vmatmul.f32.gmra.mxu0 %v3092
      %v3132 = vpop.f32.mrf.mxu0
      %v3133 = vadd.f32 0.0, %v3132
      %3134 = vmatmul.f32.gmra.mxu0 %v3095
      %v3135 = vpop.f32.mrf.mxu0
      %v3136 = vadd.f32 0.0, %v3135
      %3137 = vmatmul.f32.gmra.mxu0 %v3098
      %v3138 = vpop.f32.mrf.mxu0
      %v3139 = vadd.f32 0.0, %v3138
      %3140 = vmatmul.f32.gmra.mxu0 %v3101
      %v3141 = vpop.f32.mrf.mxu0
      %v3142 = vadd.f32 0.0, %v3141
      %3143 = vmatmul.f32.gmra.mxu0 %v3104
      %v3144 = vpop.f32.mrf.mxu0
      %v3145 = vadd.f32 0.0, %v3144
      %3146 = vmatmul.f32.gmra.mxu0 %v3107
      %v3147 = vpop.f32.mrf.mxu0
      %v3148 = vadd.f32 0.0, %v3147
      %3149 = vdwg.mxu0
      %v3151 = vsel %vm469, %v2565, 0
      %v3154 = vsel %vm469, %v2568, 0
      %v3157 = vsel %vm469, %v2571, 0
      %v3160 = vsel %vm469, %v2574, 0
      %v3163 = vsel %vm469, %v2577, 0
      %v3166 = vsel %vm469, %v2580, 0
      %v3169 = vsel %vm469, %v2583, 0
      %v3172 = vsel %vm469, %v2586, 0
      %v3175 = vsel %vm2291, %v2588, 0
      %3177 = vmatpush.msra.mxu0 0.0
      %3178 = vmatpush.msra.mxu0 0.0
      %3179 = vmatpush.msra.mxu0 0.0
      %3180 = vmatpush.msra.mxu0 0.0
      %3181 = vmatpush.msra.mxu0 0.0
      %3182 = vmatpush.msra.mxu0 0.0
      %3183 = vmatpush.msra.mxu0 0.0
      %3184 = vmatpush.msra.mxu0 0.0
      %3185 = vmatpush.msra.mxu0 0.0
      %3186 = vmatpush.msra.mxu0 0.0
      %3187 = vmatpush.msra.mxu0 0.0
      %3188 = vmatpush.msra.mxu0 0.0
      %3189 = vmatpush.msra.mxu0 0.0
      %3190 = vmatpush.msra.mxu0 0.0
      %3191 = vmatpush.msra.mxu0 0.0
      %3192 = vmatpush.msra.mxu0 %v3175
      %3193 = vmatmul.f32.gmra.mxu0 %v3151
      %v3194 = vpop.f32.mrf.mxu0
      %v3195 = vadd.f32 %v3127, %v3194
      %3196 = vmatmul.f32.gmra.mxu0 %v3154
      %v3197 = vpop.f32.mrf.mxu0
      %v3198 = vadd.f32 %v3130, %v3197
      %3199 = vmatmul.f32.gmra.mxu0 %v3157
      %v3200 = vpop.f32.mrf.mxu0
      %v3201 = vadd.f32 %v3133, %v3200
      %3202 = vmatmul.f32.gmra.mxu0 %v3160
      %v3203 = vpop.f32.mrf.mxu0
      %v3204 = vadd.f32 %v3136, %v3203
      %3205 = vmatmul.f32.gmra.mxu0 %v3163
      %v3206 = vpop.f32.mrf.mxu0
      %v3207 = vadd.f32 %v3139, %v3206
      %3208 = vmatmul.f32.gmra.mxu0 %v3166
      %v3209 = vpop.f32.mrf.mxu0
      %v3210 = vadd.f32 %v3142, %v3209
      %3211 = vmatmul.f32.gmra.mxu0 %v3169
      %v3212 = vpop.f32.mrf.mxu0
      %v3213 = vadd.f32 %v3145, %v3212
      %3214 = vmatmul.f32.gmra.mxu0 %v3172
      %v3215 = vpop.f32.mrf.mxu0
      %v3216 = vadd.f32 %v3148, %v3215
      %3217 = vdwg.mxu0
      %3218 = vst.msk [vmem:[%s332] sm:$0xff] %vm2621, %v3195
      %3219 = vst.msk [vmem:[%s332 + $0x8] sm:$0xff] %vm2621, %v3198
      %3220 = vst.msk [vmem:[%s332 + $0x10] sm:$0xff] %vm2621, %v3201
      %3221 = vst.msk [vmem:[%s332 + $0x18] sm:$0xff] %vm2621, %v3204
      %3222 = vst.msk [vmem:[%s332 + $0x20] sm:$0xff] %vm2621, %v3207
      %3223 = vst.msk [vmem:[%s332 + $0x28] sm:$0xff] %vm2621, %v3210
      %3224 = vst.msk [vmem:[%s332 + $0x30] sm:$0xff] %vm2621, %v3213
      %3225 = vst.msk [vmem:[%s332 + $0x38] sm:$0xff] %vm2621, %v3216
      %p3226 = scmp.lt.s32.totalorder %s20, 1
      %s3227 = scalar_select %p3226, %s20, 1
      %s3228 = smul.addr %s3227, 8
      %s3229 = smul.addr %s3228, 8
      %s3230 = scalar_lea.vmem %s9, %s3229
      // Predicated region
      $region57: #{network_block_forward.2} parent=55 // pred_check
        %p3231 = pneg %p232
      $region58: #{network_block_forward.2} parent=55 // pred_check_branch
        %3233 = sbr.rel (%p3231) target = $region60
      $region59: #{network_block_forward.2} parent=55 // pred_region
        _
      $region60: #{network_block_forward.2} parent=55 // pred_fallthru
        _
    $region56: #{network_block_forward.2} parent=5 // pred_fallthru
      _
    %p3234 = scmp.le.s32.totalorder 2, %s15
    // Predicated region
    $region61: #{network_block_forward.2} parent=5 // pred_check
      %p3235 = pneg %p3234
    $region62: #{network_block_forward.2} parent=5 // pred_check_branch
      %3237 = sbr.rel (%p3235) target = $region64
    $region63: #{network_block_forward.2} parent=5 // pred_region
      %s3238 = ssub.s32 %s15, 2
      // Predicated region
      $region65: #{network_block_forward.2} parent=63 // pred_check
        %p3239 = pneg %p238
      $region66: #{network_block_forward.2} parent=63 // pred_check_branch
        %3241 = sbr.rel (%p3239) target = $region68
      $region67: #{network_block_forward.2} parent=63 // pred_region
        %p3242 = scmp.lt.s32.totalorder %s21, 1
        %s3243 = scalar_select %p3242, %s21, 1
        %s3244 = smul.addr %s3243, 8
        %s3245 = smul.addr %s3244, 8
        %s3246 = scalar_lea.vmem %s9, %s3245
      $region68: #{network_block_forward.2} parent=63 // pred_fallthru
        _
    $region64: #{network_block_forward.2} parent=5 // pred_fallthru
      _
  $region6: #{network_block_forward.2} parent=0 // loop_footer
    %s19 = sadd.s32 1, %s15
  $region7: #{network_block_forward.2} parent=0 // loop_footer_branch
    %14 = sbr.rel target = $region3
  $region8: #{network_block_forward.2} parent=0 // loop_exit
    _

</llo_original>
